<compile_context>
chip_gen: v6e
topology: v6e:2x2x1
jax: 0.10.0
libtpu: 0.0.40
codegen_flags: <defaults>
</compile_context>

<pallas_src>
import functools
import math

import jax
import jax.numpy as jnp
from jax.experimental import pallas as pl
from jax.experimental.pallas import tpu as pltpu


# ----------------------------- Pallas kernel --------------------------------

def _silu(x):
    # x * sigmoid(x); exp and approx reciprocal both live on the EUP slot.
    return x * pl.reciprocal(1.0 + jnp.exp(-x), approx=True)


def diffnet_fwd_kernel(
    dyn_ref,      # (TM, 2G+2) bf16  [node_feat | noise | sqrt_ac[t] | sqrt_1m_ac[t]]
    static_ref,   # (TM, Sp)   bf16  [type_emb | coord | temb | 0-pad]
    w1f_ref,      # (G,  Hp)   bf16  layer-1 block acting on the diffused features
    w1s_ref,      # (Sp, Hp)   bf16  layer-1 block acting on the static features
    w2_ref,       # (Hp, Hp)   bf16
    w3_ref,       # (Hp, G)    bf16
    bias_ref,     # (3,  Hp)   f32   rows: b1, b2, b3 (zeros in padded lanes)
    partial_ref,  # (8, 128)   f32   per-core-split per-lane partial SSE
    *, tm, n_gauss, n_valid, tiles_per_core, num_core_splits,
):
    if num_core_splits == 1:
        tile_i = pl.program_id(0)               # node tiles ("arbitrary" reduction)
        global_tile = tile_i
    else:
        c = pl.program_id(0)                    # megacore split ("parallel")
        tile_i = pl.program_id(1)               # tiles owned by this split
        global_tile = c * tiles_per_core + tile_i

    @pl.when(tile_i == 0)
    def _init():
        partial_ref[...] = jnp.zeros_like(partial_ref)

    # Upcast the packed per-node stream once, then slice (all-f32 slices).
    dyn = dyn_ref[...].astype(jnp.float32)
    node_feat = dyn[:, 0:n_gauss]
    noise = dyn[:, n_gauss:2 * n_gauss]
    c_a = dyn[:, 2 * n_gauss:2 * n_gauss + 1]
    c_b = dyn[:, 2 * n_gauss + 1:2 * n_gauss + 2]

    # q-sample (ddpm branch), f32:
    #   diffused = sqrt_alpha_cumprod[t] * x0 + sqrt_one_minus_alpha_cumprod[t] * eps
    diffused = c_a * node_feat + c_b * noise

    b1 = bias_ref[0:1, :]
    b2 = bias_ref[1:2, :]
    b3 = bias_ref[2:3, 0:n_gauss]

    # Encoder layer 1 == concat([diffused, type_emb, coord, temb]) @ W1 + b1,
    # as two bf16 MXU matmuls with f32 accumulation.
    h1 = _silu(
        jnp.dot(diffused.astype(jnp.bfloat16), w1f_ref[...],
                preferred_element_type=jnp.float32)
        + jnp.dot(static_ref[...], w1s_ref[...],
                  preferred_element_type=jnp.float32)
        + b1)
    h2 = _silu(
        jnp.dot(h1.astype(jnp.bfloat16), w2_ref[...],
                preferred_element_type=jnp.float32) + b2)
    score = jnp.dot(h2.astype(jnp.bfloat16), w3_ref[...],
                    preferred_element_type=jnp.float32) + b3

    # F.mse_loss numerator (f32).  Feature axis is exactly n_gauss wide (no
    # padded lanes); padded node rows are masked out here.
    diff = score - noise
    rows = global_tile * tm + jax.lax.broadcasted_iota(jnp.int32, (tm, 1), 0)
    diff = jnp.where(rows < n_valid, diff, 0.0)

    # Per-lane partial sums only (sublane reduce); cross-lane reduce + mean
    # normalization happen in the wrapper.  Accumulation over tile_i is only
    # valid because that grid axis is "arbitrary" (sequential).
    partial_ref[0:1, 0:n_gauss] += jnp.sum(diff * diff, axis=0, keepdims=True)


# ------------------------------ JAX wrapper ----------------------------------

def diffnet_forward(dyn_p, static_p, params, *, n_valid, n_gauss, tm,
                    num_core_splits, tiles_per_core):
    w1f, w1s, w2, w3, bias = params
    n_pad, dyn_w = dyn_p.shape
    s_pad = static_p.shape[1]
    h_pad = w1f.shape[1]
    assert dyn_w == 2 * n_gauss + 2
    assert n_pad == tm * tiles_per_core * num_core_splits

    kernel = functools.partial(
        diffnet_fwd_kernel, tm=tm, n_gauss=n_gauss, n_valid=n_valid,
        tiles_per_core=tiles_per_core, num_core_splits=num_core_splits)

    if num_core_splits == 1:
        grid = (tiles_per_core,)
        node_map = lambda i: (i, 0)
        const_map = lambda i: (0, 0)
        out_map = lambda i: (0, 0)
        semantics = ("arbitrary",)
    else:
        grid = (num_core_splits, tiles_per_core)
        node_map = lambda c, i: (c * tiles_per_core + i, 0)
        const_map = lambda c, i: (0, 0)
        out_map = lambda c, i: (c, 0)
        semantics = ("parallel", "arbitrary")

    out_rows = 8 * num_core_splits
    flops = 2 * n_pad * h_pad * (n_gauss + s_pad + h_pad + n_gauss)
    transcendentals = 2 * n_pad * h_pad
    bytes_accessed = (int(dyn_p.nbytes) + int(static_p.nbytes)
                      + sum(int(x.nbytes) for x in (w1f, w1s, w2, w3, bias))
                      + out_rows * 128 * 4)

    partials = pl.pallas_call(
        kernel,
        out_shape=jax.ShapeDtypeStruct((out_rows, 128), jnp.float32),
        grid=grid,
        in_specs=[
            pl.BlockSpec((tm, dyn_w), node_map),      # packed per-node stream
            pl.BlockSpec((tm, s_pad), node_map),      # packed static features
            pl.BlockSpec(w1f.shape, const_map),       # w1f (resident)
            pl.BlockSpec(w1s.shape, const_map),       # w1s (resident)
            pl.BlockSpec(w2.shape, const_map),        # w2  (resident)
            pl.BlockSpec(w3.shape, const_map),        # w3  (resident)
            pl.BlockSpec(bias.shape, const_map),      # stacked biases (resident)
        ],
        out_specs=pl.BlockSpec((8, 128), out_map),
        compiler_params=pltpu.CompilerParams(dimension_semantics=semantics),
        cost_estimate=pl.CostEstimate(
            flops=flops, transcendentals=transcendentals,
            bytes_accessed=bytes_accessed),
    )(dyn_p, static_p, w1f, w1s, w2, w3, bias)

    # Every lane/row of `partials` that was not accumulated into is an exact
    # zero, so a plain sum gives the SSE.
    sse = jnp.sum(partials)
    return sse / float(n_valid * n_gauss)


# ------------------------- deterministic setup / glue ------------------------

def sinusoidal_time_embedding(t, dim):
    half = dim // 2
    freqs = jnp.exp(-math.log(10000.0) * jnp.arange(half, dtype=jnp.float32) / half)
    args = t.astype(jnp.float32)[:, None] * freqs[None, :]
    return jnp.concatenate([jnp.sin(args), jnp.cos(args)], axis=-1)


def make_params(key, n_gauss, type_emb_dim, time_embed, hidden):
    def linear_init(k, fan_in, shape):
        return jax.random.normal(k, shape, jnp.float32) / jnp.sqrt(float(fan_in))
    ks = jax.random.split(key, 9)
    w1f = linear_init(ks[0], n_gauss, (n_gauss, hidden))
    w1t = linear_init(ks[1], type_emb_dim, (type_emb_dim, hidden))
    w1c = linear_init(ks[2], 3, (3, hidden))
    w1e = linear_init(ks[3], time_embed, (time_embed, hidden))
    b1 = 0.1 * jax.random.normal(ks[4], (hidden,), jnp.float32)
    w2 = linear_init(ks[5], hidden, (hidden, hidden))
    b2 = 0.1 * jax.random.normal(ks[6], (hidden,), jnp.float32)
    w3 = linear_init(ks[7], hidden, (hidden, n_gauss))
    b3 = 0.1 * jax.random.normal(ks[8], (n_gauss,), jnp.float32)
    return (w1f, w1t, w1c, w1e, b1, w2, b2, w3, b3)


def pad_to(x, rows, cols, dtype=None):
    out = jnp.zeros((rows, cols), x.dtype if dtype is None else dtype)
    return out.at[:x.shape[0], :x.shape[1]].set(x.astype(out.dtype))


if __name__ == "__main__":
    # ---- small shapes consistent with the forward pass ----
    N = 500           # number of nodes (batch.size(0)) — exercises row masking
    N_GAUSS = 32      # encoder.n_gauss -> node_feat width
    N_TYPES = 5       # number of atom types
    TYPE_EMB = 16     # synthetic atom-type embedding dim
    TIME_EMBED = 32   # time_embed_size
    HIDDEN = 64       # encoder hidden width
    BETA_STEP = 100   # beta_schedule.beta_step

    H_PAD = 128       # lane-padded hidden (zero-padded lanes stay exactly 0)
    S_PAD = 64        # padded static width (16 + 3 + 32 = 51 -> 64)

    # Megacore split only where there are 2 TensorCores per chip (v7x).
    try:
        _kind = jax.devices()[0].device_kind.lower()
    except Exception:
        _kind = ""
    NUM_CORE_SPLITS = 2 if "v7" in _kind else 1

    # Largest node tile that covers this problem in one step per core (cap at
    # 1024 rows; even that is ~0.14 MiB/tile here — trivial vs any VMEM limit).
    rows_per_core = -(-N // NUM_CORE_SPLITS)
    TM = min(1024, ((rows_per_core + 127) // 128) * 128)
    TILES_PER_CORE = -(-rows_per_core // TM)
    N_PAD = TM * TILES_PER_CORE * NUM_CORE_SPLITS

    key = jax.random.PRNGKey(0)
    k_feat, k_noise, k_t, k_type, k_coord, k_emb, k_params = jax.random.split(key, 7)

    # ---- diffusion schedule (linear beta schedule; get_beta is external) ----
    betas = jnp.linspace(1e-4, 0.02, BETA_STEP, dtype=jnp.float32)
    alphas = 1.0 - betas
    alpha_cumprod = jnp.cumprod(alphas)
    sqrt_alpha_cumprod = jnp.sqrt(alpha_cumprod)
    sqrt_one_minus_alpha_cumprod = jnp.sqrt(1.0 - alpha_cumprod)

    # ---- inputs (torch.randn / torch.randint equivalents, deterministic) ----
    node_feat = jax.random.normal(k_feat, (N, N_GAUSS), jnp.float32)
    noise = jax.random.normal(k_noise, (N, N_GAUSS), jnp.float32)
    t = jax.random.randint(k_t, (N,), 0, BETA_STEP)
    atom_types = jax.random.randint(k_type, (N,), 0, N_TYPES)
    atom_coord = jax.random.normal(k_coord, (N, 3), jnp.float32)

    # per-node gathered schedule coefficients
    coefs = jnp.stack([sqrt_alpha_cumprod[t],
                       sqrt_one_minus_alpha_cumprod[t]], axis=-1)      # (N, 2)

    # encoder auxiliary inputs computed in glue (cheap gathers / trig)
    type_table = jax.random.normal(k_emb, (N_TYPES, TYPE_EMB), jnp.float32)
    type_emb = type_table[atom_types]
    temb = sinusoidal_time_embedding(t, TIME_EMBED)
    static = jnp.concatenate([type_emb, atom_coord, temb], axis=1)     # (N, 51)

    # One packed bf16 per-node stream: [node_feat | noise | coef_a | coef_b].
    dyn = jnp.concatenate([node_feat, noise, coefs], axis=1)           # (N, 66)
    dyn_p = pad_to(dyn, N_PAD, 2 * N_GAUSS + 2, jnp.bfloat16)
    static_p = pad_to(static, N_PAD, S_PAD, jnp.bfloat16)

    # deterministic synthetic encoder parameters, bf16 for the MXU
    (w1f, w1t, w1c, w1e, b1, w2, b2, w3, b3) = make_params(
        k_params, N_GAUSS, TYPE_EMB, TIME_EMBED, HIDDEN)
    w1s_raw = jnp.concatenate([w1t, w1c, w1e], axis=0)                 # (51, H)
    w1f_p = pad_to(w1f, N_GAUSS, H_PAD, jnp.bfloat16)                  # (32, 128)
    w1s_p = pad_to(w1s_raw, S_PAD, H_PAD, jnp.bfloat16)                # (64, 128)
    w2_p = pad_to(w2, H_PAD, H_PAD, jnp.bfloat16)                      # (128, 128)
    w3_p = pad_to(w3, H_PAD, N_GAUSS, jnp.bfloat16)                    # (128, 32)
    # Padded bias lanes must stay exactly zero (silu(0)=0 keeps padded hidden
    # lanes zero, so score is unaffected by the hidden padding).
    bias_p = jnp.zeros((3, H_PAD), jnp.float32)
    bias_p = bias_p.at[0, :HIDDEN].set(b1)
    bias_p = bias_p.at[1, :HIDDEN].set(b2)
    bias_p = bias_p.at[2, :N_GAUSS].set(b3)
    params = (w1f_p, w1s_p, w2_p, w3_p, bias_p)

    loss = diffnet_forward(dyn_p, static_p, params,
                           n_valid=N, n_gauss=N_GAUSS, tm=TM,
                           num_core_splits=NUM_CORE_SPLITS,
                           tiles_per_core=TILES_PER_CORE)
    loss = jax.block_until_ready(loss)
    assert jnp.isfinite(loss)

    # pure-JAX f32 reference (un-padded, un-tiled) for a loose sanity check
    diffused_ref = coefs[:, 0:1] * node_feat + coefs[:, 1:2] * noise
    h1_ref = jax.nn.silu(diffused_ref @ w1f + type_emb @ w1t
                         + atom_coord @ w1c + temb @ w1e + b1)
    h2_ref = jax.nn.silu(h1_ref @ w2 + b2)
    score_ref = h2_ref @ w3 + b3
    loss_ref = jnp.mean((score_ref - noise) ** 2)
    assert jnp.allclose(loss, loss_ref, rtol=5e-2, atol=1e-3), (loss, loss_ref)

    print("KERNEL_OK")
</pallas_src>

<mosaic_0001>
module attributes {stable_mosaic.version = 11 : i64} {
  func.func @diffnet_fwd_kernel(%arg0: i32, %arg1: memref<512x66xbf16, #tpu.memory_space<vmem>>, %arg2: memref<512x64xbf16, #tpu.memory_space<vmem>>, %arg3: memref<32x128xbf16, #tpu.memory_space<vmem>>, %arg4: memref<64x128xbf16, #tpu.memory_space<vmem>>, %arg5: memref<128x128xbf16, #tpu.memory_space<vmem>>, %arg6: memref<128x32xbf16, #tpu.memory_space<vmem>>, %arg7: memref<3x128xf32, #tpu.memory_space<vmem>>, %arg8: memref<8x128xf32, #tpu.memory_space<vmem>>) attributes {dimension_semantics = [#tpu.dimension_semantics<arbitrary>], iteration_bounds = array<i64: 1>, scalar_prefetch = 0 : i64, scratch_operands = 0 : i64, tpu.core_type = #tpu.core_type<tc>, window_params = [{transform_indices = @transform_0, window_bounds = array<i64: 512, 66>}, {transform_indices = @transform_1, window_bounds = array<i64: 512, 64>}, {pipeline_mode = #tpu.pipeline_mode<synchronous>, transform_indices = @transform_2, window_bounds = array<i64: 32, 128>}, {pipeline_mode = #tpu.pipeline_mode<synchronous>, transform_indices = @transform_3, window_bounds = array<i64: 64, 128>}, {pipeline_mode = #tpu.pipeline_mode<synchronous>, transform_indices = @transform_4, window_bounds = array<i64: 128, 128>}, {pipeline_mode = #tpu.pipeline_mode<synchronous>, transform_indices = @transform_5, window_bounds = array<i64: 128, 32>}, {pipeline_mode = #tpu.pipeline_mode<synchronous>, transform_indices = @transform_6, window_bounds = array<i64: 3, 128>}, {pipeline_mode = #tpu.pipeline_mode<synchronous>, transform_indices = @transform_7, window_bounds = array<i64: 8, 128>}]} {
    %c0_i32 = arith.constant 0 : i32
    %0 = arith.cmpi eq, %arg0, %c0_i32 : i32
    %1 = arith.extui %0 : i1 to i32
    %c0_i32_0 = arith.constant 0 : i32
    %2 = arith.cmpi ne, %1, %c0_i32_0 : i32
    scf.if %2 {
      %cst_29 = arith.constant 0.000000e+00 : f32
      %67 = vector.broadcast %cst_29 : f32 to vector<8x128xf32>
      %c0_30 = arith.constant 0 : index
      %c0_31 = arith.constant 0 : index
      %68 = vector.load %arg8[%c0_30, %c0_31] : memref<8x128xf32, #tpu.memory_space<vmem>>, vector<8x128xf32>
      tpu.vector_store %arg8[%c0_30, %c0_31], %67 {strides = array<i32>} : memref<8x128xf32, #tpu.memory_space<vmem>>, vector<8x128xf32>,
    } else {
    }
    %c0 = arith.constant 0 : index
    %c0_1 = arith.constant 0 : index
    %3 = vector.load %arg1[%c0, %c0_1] : memref<512x66xbf16, #tpu.memory_space<vmem>>, vector<512x66xbf16>
    %4 = arith.extf %3 : vector<512x66xbf16> to vector<512x66xf32>
    %5 = vector.extract_strided_slice %4 {offsets = [0, 0], sizes = [512, 32], strides = [1, 1]} : vector<512x66xf32> to vector<512x32xf32>
    %6 = vector.extract_strided_slice %4 {offsets = [0, 32], sizes = [512, 32], strides = [1, 1]} : vector<512x66xf32> to vector<512x32xf32>
    %7 = vector.extract_strided_slice %4 {offsets = [0, 64], sizes = [512, 1], strides = [1, 1]} : vector<512x66xf32> to vector<512x1xf32>
    %8 = vector.extract_strided_slice %4 {offsets = [0, 65], sizes = [512, 1], strides = [1, 1]} : vector<512x66xf32> to vector<512x1xf32>
    %9 = vector.broadcast %7 : vector<512x1xf32> to vector<512x32xf32>
    %10 = arith.mulf %9, %5 : vector<512x32xf32>
    %11 = vector.broadcast %8 : vector<512x1xf32> to vector<512x32xf32>
    %12 = arith.mulf %11, %6 : vector<512x32xf32>
    %13 = arith.addf %10, %12 : vector<512x32xf32>
    %c0_2 = arith.constant 0 : index
    %c0_3 = arith.constant 0 : index
    %14 = vector.load %arg7[%c0_2, %c0_3] : memref<3x128xf32, #tpu.memory_space<vmem>>, vector<1x128xf32>
    %c1 = arith.constant 1 : index
    %c0_4 = arith.constant 0 : index
    %15 = vector.load %arg7[%c1, %c0_4] : memref<3x128xf32, #tpu.memory_space<vmem>>, vector<1x128xf32>
    %c2 = arith.constant 2 : index
    %c0_5 = arith.constant 0 : index
    %16 = vector.load %arg7[%c2, %c0_5] : memref<3x128xf32, #tpu.memory_space<vmem>>, vector<1x32xf32>
    %17 = arith.truncf %13 : vector<512x32xf32> to vector<512x32xbf16>
    %c0_6 = arith.constant 0 : index
    %c0_7 = arith.constant 0 : index
    %18 = vector.load %arg3[%c0_6, %c0_7] : memref<32x128xbf16, #tpu.memory_space<vmem>>, vector<32x128xbf16>
    %cst = arith.constant dense<0.000000e+00> : vector<512x128xf32>
    %19 = tpu.matmul %17, %18, %cst {dimension_numbers = #tpu.dot_dimension_numbers<[1], [0], [0], [1], [0, 0, 1, 1], [], []>} : vector<512x32xbf16>, vector<32x128xbf16>, vector<512x128xf32> -> vector<512x128xf32>
    %c0_8 = arith.constant 0 : index
    %c0_9 = arith.constant 0 : index
    %20 = vector.load %arg2[%c0_8, %c0_9] : memref<512x64xbf16, #tpu.memory_space<vmem>>, vector<512x64xbf16>
    %c0_10 = arith.constant 0 : index
    %c0_11 = arith.constant 0 : index
    %21 = vector.load %arg4[%c0_10, %c0_11] : memref<64x128xbf16, #tpu.memory_space<vmem>>, vector<64x128xbf16>
    %cst_12 = arith.constant dense<0.000000e+00> : vector<512x128xf32>
    %22 = tpu.matmul %20, %21, %cst_12 {dimension_numbers = #tpu.dot_dimension_numbers<[1], [0], [0], [1], [0, 0, 1, 1], [], []>} : vector<512x64xbf16>, vector<64x128xbf16>, vector<512x128xf32> -> vector<512x128xf32>
    %23 = arith.addf %19, %22 : vector<512x128xf32>
    %24 = vector.broadcast %14 : vector<1x128xf32> to vector<512x128xf32>
    %25 = arith.addf %23, %24 : vector<512x128xf32>
    %cst_13 = arith.constant 0.000000e+00 : f32
    %26 = vector.broadcast %cst_13 : f32 to vector<512x128xf32>
    %27 = arith.subf %26, %25 : vector<512x128xf32>
    %28 = math.exp %27 : vector<512x128xf32>
    %cst_14 = arith.constant 1.000000e+00 : f32
    %29 = vector.broadcast %cst_14 : f32 to vector<512x128xf32>
    %30 = arith.addf %29, %28 : vector<512x128xf32>
    %31 = tpu.reciprocal %30 {approx = true} : vector<512x128xf32> -> vector<512x128xf32>
    %32 = arith.mulf %25, %31 : vector<512x128xf32>
    %33 = arith.truncf %32 : vector<512x128xf32> to vector<512x128xbf16>
    %c0_15 = arith.constant 0 : index
    %c0_16 = arith.constant 0 : index
    %34 = vector.load %arg5[%c0_15, %c0_16] : memref<128x128xbf16, #tpu.memory_space<vmem>>, vector<128x128xbf16>
    %cst_17 = arith.constant dense<0.000000e+00> : vector<512x128xf32>
    %35 = tpu.matmul %33, %34, %cst_17 {dimension_numbers = #tpu.dot_dimension_numbers<[1], [0], [0], [1], [0, 0, 1, 1], [], []>} : vector<512x128xbf16>, vector<128x128xbf16>, vector<512x128xf32> -> vector<512x128xf32>
    %36 = vector.broadcast %15 : vector<1x128xf32> to vector<512x128xf32>
    %37 = arith.addf %35, %36 : vector<512x128xf32>
    %cst_18 = arith.constant 0.000000e+00 : f32
    %38 = vector.broadcast %cst_18 : f32 to vector<512x128xf32>
    %39 = arith.subf %38, %37 : vector<512x128xf32>
    %40 = math.exp %39 : vector<512x128xf32>
    %cst_19 = arith.constant 1.000000e+00 : f32
    %41 = vector.broadcast %cst_19 : f32 to vector<512x128xf32>
    %42 = arith.addf %41, %40 : vector<512x128xf32>
    %43 = tpu.reciprocal %42 {approx = true} : vector<512x128xf32> -> vector<512x128xf32>
    %44 = arith.mulf %37, %43 : vector<512x128xf32>
    %45 = arith.truncf %44 : vector<512x128xf32> to vector<512x128xbf16>
    %c0_20 = arith.constant 0 : index
    %c0_21 = arith.constant 0 : index
    %46 = vector.load %arg6[%c0_20, %c0_21] : memref<128x32xbf16, #tpu.memory_space<vmem>>, vector<128x32xbf16>
    %cst_22 = arith.constant dense<0.000000e+00> : vector<512x32xf32>
    %47 = tpu.matmul %45, %46, %cst_22 {dimension_numbers = #tpu.dot_dimension_numbers<[1], [0], [0], [1], [0, 0, 1, 1], [], []>} : vector<512x128xbf16>, vector<128x32xbf16>, vector<512x32xf32> -> vector<512x32xf32>
    %48 = vector.broadcast %16 : vector<1x32xf32> to vector<512x32xf32>
    %49 = arith.addf %47, %48 : vector<512x32xf32>
    %50 = arith.subf %49, %6 : vector<512x32xf32>
    %c512_i32 = arith.constant 512 : i32
    %51 = arith.muli %arg0, %c512_i32 : i32
    %52 = tpu.iota {dimensions = array<i32: 0>} : vector<512x1xi32>
    %53 = vector.broadcast %51 : i32 to vector<512x1xi32>
    %54 = arith.addi %53, %52 : vector<512x1xi32>
    %c500_i32 = arith.constant 500 : i32
    %55 = vector.broadcast %c500_i32 : i32 to vector<512x1xi32>
    %56 = arith.cmpi slt, %54, %55 : vector<512x1xi32>
    %cst_23 = arith.constant 0.000000e+00 : f32
    %57 = vector.shape_cast %56 : vector<512x1xi1> to vector<512x1xi1>
    %58 = vector.broadcast %57 : vector<512x1xi1> to vector<512x32xi1>
    %59 = vector.broadcast %cst_23 : f32 to vector<512x32xf32>
    %60 = arith.select %58, %50, %59 : vector<512x32xi1>, vector<512x32xf32>
    %c0_24 = arith.constant 0 : index
    %c0_25 = arith.constant 0 : index
    %61 = vector.load %arg8[%c0_24, %c0_25] : memref<8x128xf32, #tpu.memory_space<vmem>>, vector<1x32xf32>
    %62 = arith.mulf %60, %60 : vector<512x32xf32>
    %cst_26 = arith.constant dense<0.000000e+00> : vector<32xf32>
    %63 = vector.multi_reduction <add>, %62, %cst_26 [0] : vector<512x32xf32> to vector<32xf32>
    %64 = vector.shape_cast %63 : vector<32xf32> to vector<1x32xf32>
    %65 = arith.addf %61, %64 : vector<1x32xf32>
    %c0_27 = arith.constant 0 : index
    %c0_28 = arith.constant 0 : index
    %66 = vector.load %arg8[%c0_27, %c0_28] : memref<8x128xf32, #tpu.memory_space<vmem>>, vector<1x32xf32>
    tpu.vector_store %arg8[%c0_27, %c0_28], %65 {strides = array<i32>} : memref<8x128xf32, #tpu.memory_space<vmem>>, vector<1x32xf32>,
    return
  }
  func.func @transform_0(%arg0: i32) -> (i32, i32) {
    %c0_i32 = arith.constant 0 : i32
    %c0_i32_0 = arith.constant 0 : i32
    return %arg0, %c0_i32 : i32, i32
  }
  func.func @transform_1(%arg0: i32) -> (i32, i32) {
    %c0_i32 = arith.constant 0 : i32
    %c0_i32_0 = arith.constant 0 : i32
    return %arg0, %c0_i32 : i32, i32
  }
  func.func @transform_2(%arg0: i32) -> (i32, i32) {
    %c0_i32 = arith.constant 0 : i32
    %c0_i32_0 = arith.constant 0 : i32
    %c0_i32_1 = arith.constant 0 : i32
    return %c0_i32, %c0_i32_0 : i32, i32
  }
  func.func @transform_3(%arg0: i32) -> (i32, i32) {
    %c0_i32 = arith.constant 0 : i32
    %c0_i32_0 = arith.constant 0 : i32
    %c0_i32_1 = arith.constant 0 : i32
    return %c0_i32, %c0_i32_0 : i32, i32
  }
  func.func @transform_4(%arg0: i32) -> (i32, i32) {
    %c0_i32 = arith.constant 0 : i32
    %c0_i32_0 = arith.constant 0 : i32
    %c0_i32_1 = arith.constant 0 : i32
    return %c0_i32, %c0_i32_0 : i32, i32
  }
  func.func @transform_5(%arg0: i32) -> (i32, i32) {
    %c0_i32 = arith.constant 0 : i32
    %c0_i32_0 = arith.constant 0 : i32
    %c0_i32_1 = arith.constant 0 : i32
    return %c0_i32, %c0_i32_0 : i32, i32
  }
  func.func @transform_6(%arg0: i32) -> (i32, i32) {
    %c0_i32 = arith.constant 0 : i32
    %c0_i32_0 = arith.constant 0 : i32
    %c0_i32_1 = arith.constant 0 : i32
    return %c0_i32, %c0_i32_0 : i32, i32
  }
  func.func @transform_7(%arg0: i32) -> (i32, i32) {
    %c0_i32 = arith.constant 0 : i32
    %c0_i32_0 = arith.constant 0 : i32
    %c0_i32_1 = arith.constant 0 : i32
    return %c0_i32, %c0_i32_0 : i32, i32
  }
}

</mosaic_0001>

<llo_original>
// kernel: tpu_custom_call.1
$region0: #{tpu_custom_call.1}
  #allocation0 [shape = 'u32[]', space=smem, size = 0x4, offset = 0x4, fixed_abs, tag = 'smem constant byte address 0x4 - core index']
  #allocation1 [shape = 'u32[144,128]{1,0:T(1,128)}', space=vmem, size = 0x12000, scoped, tag = 'internal scratch']
  %s0 = inlined_call_operand.vmem [shape: bf16[512,66], index: 0, kind: input, shape index: {}]
  %s1 = inlined_call_operand.vmem [shape: bf16[512,64], index: 1, kind: input, shape index: {}]
  %s2 = inlined_call_operand.vmem [shape: bf16[32,128], index: 2, kind: input, shape index: {}]
  %s3 = inlined_call_operand.vmem [shape: bf16[64,128], index: 3, kind: input, shape index: {}]
  %s4 = inlined_call_operand.vmem [shape: bf16[128,128], index: 4, kind: input, shape index: {}]
  %s5 = inlined_call_operand.vmem [shape: bf16[128,32], index: 5, kind: input, shape index: {}]
  %s6 = inlined_call_operand.vmem [shape: f32[3,128], index: 6, kind: input, shape index: {}]
  %s7 = inlined_call_operand.hbm [shape: f32[8,128], index: 7, kind: output, shape index: {}]
  %s8 = sld [smem:[#allocation0]]
  $region42: #{tpu_custom_call.1} parent=0
    _
  %s10 = ssub.s32 1, %s8
  %s11 = scalar_select 0, %s10, %s8
  $region1: #{tpu_custom_call.1} parent=0
    #allocation2 [shape = 'u8[4096]{0}', space=vmem, size = 0x1000, scoped, tag = 'output window, operand 0, single buffered']
    #allocation3 [shape = 's32[1]{0}', space=sflag, size = 0x4, scoped, tag = 'scoped memory for tpu_custom_call.1']
    %12 = vsyncpa [#allocation3], 0
    // Predicated region
    $region2: #{tpu_custom_call.1} parent=1 // pred_check
      _
    $region3: #{tpu_custom_call.1} parent=1 // pred_check_branch
      %14 = sbr.rel (0) target = $region5
    $region4: #{tpu_custom_call.1} parent=1 // pred_region
      _
    $region5: #{tpu_custom_call.1} parent=1 // pred_fallthru
      _
    // Predicated region
    $region6: #{tpu_custom_call.1} parent=1 // pred_check
      _
    $region7: #{tpu_custom_call.1} parent=1 // pred_check_branch
      %16 = sbr.rel (0) target = $region9
    $region8: #{tpu_custom_call.1} parent=1 // pred_region
      _
    $region9: #{tpu_custom_call.1} parent=1 // pred_fallthru
      _
    // Predicated region
    $region10: #{tpu_custom_call.1} parent=1 // pred_check
      _
    $region11: #{tpu_custom_call.1} parent=1 // pred_check_branch
      %18 = sbr.rel (0) target = $region13
    $region12: #{tpu_custom_call.1} parent=1 // pred_region
      _
    $region13: #{tpu_custom_call.1} parent=1 // pred_fallthru
      _
    // Predicated region
    $region14: #{tpu_custom_call.1} parent=1 // pred_check
      _
    $region15: #{tpu_custom_call.1} parent=1 // pred_check_branch
      %20 = sbr.rel (0) target = $region17
    $region16: #{tpu_custom_call.1} parent=1 // pred_region
      _
    $region17: #{tpu_custom_call.1} parent=1 // pred_fallthru
      _
    // Predicated region
    $region18: #{tpu_custom_call.1} parent=1 // pred_check
      _
    $region19: #{tpu_custom_call.1} parent=1 // pred_check_branch
      %22 = sbr.rel (0) target = $region21
    $region20: #{tpu_custom_call.1} parent=1 // pred_region
      _
    $region21: #{tpu_custom_call.1} parent=1 // pred_fallthru
      _
    // Predicated region
    $region22: #{tpu_custom_call.1} parent=1 // pred_check
      _
    $region23: #{tpu_custom_call.1} parent=1 // pred_check_branch
      %24 = sbr.rel (0) target = $region25
    $region24: #{tpu_custom_call.1} parent=1 // pred_region
      _
    $region25: #{tpu_custom_call.1} parent=1 // pred_fallthru
      _
    // Predicated region
    $region26: #{tpu_custom_call.1} parent=1 // pred_check
      _
    $region27: #{tpu_custom_call.1} parent=1 // pred_check_branch
      %26 = sbr.rel (0) target = $region29
    $region28: #{tpu_custom_call.1} parent=1 // pred_region
      _
    $region29: #{tpu_custom_call.1} parent=1 // pred_fallthru
      _
    %p28 = scmp.eq.s32.totalorder 0, 0
    // Predicated region
    $region30: #{tpu_custom_call.1} parent=1 // pred_check
      %p29 = pneg %p28
    $region31: #{tpu_custom_call.1} parent=1 // pred_check_branch
      %31 = sbr.rel (%p29) target = $region33
    $region32: #{tpu_custom_call.1} parent=1 // pred_region
      %32 = vst [vmem:[#allocation2] sm:$0xff] 0.0
    $region33: #{tpu_custom_call.1} parent=1 // pred_fallthru
      _
    %v33 = vld [vmem:[%s0] sm:$0xf]
    %v34 = vld [vmem:[%s0 + $0x4] sm:$0xf]
    %v35 = vld [vmem:[%s0 + $0x8] sm:$0xf]
    %v36 = vld [vmem:[%s0 + $0xc] sm:$0xf]
    %v37 = vld [vmem:[%s0 + $0x10] sm:$0xf]
    %v38 = vld [vmem:[%s0 + $0x14] sm:$0xf]
    %v39 = vld [vmem:[%s0 + $0x18] sm:$0xf]
    %v40 = vld [vmem:[%s0 + $0x1c] sm:$0xf]
    %v41 = vld [vmem:[%s0 + $0x20] sm:$0xf]
    %v42 = vld [vmem:[%s0 + $0x24] sm:$0xf]
    %v43 = vld [vmem:[%s0 + $0x28] sm:$0xf]
    %v44 = vld [vmem:[%s0 + $0x2c] sm:$0xf]
    %v45 = vld [vmem:[%s0 + $0x30] sm:$0xf]
    %v46 = vld [vmem:[%s0 + $0x34] sm:$0xf]
    %v47 = vld [vmem:[%s0 + $0x38] sm:$0xf]
    %v48 = vld [vmem:[%s0 + $0x3c] sm:$0xf]
    %v49 = vld [vmem:[%s0 + $0x40] sm:$0xf]
    %v50 = vld [vmem:[%s0 + $0x44] sm:$0xf]
    %v51 = vld [vmem:[%s0 + $0x48] sm:$0xf]
    %v52 = vld [vmem:[%s0 + $0x4c] sm:$0xf]
    %v53 = vld [vmem:[%s0 + $0x50] sm:$0xf]
    %v54 = vld [vmem:[%s0 + $0x54] sm:$0xf]
    %v55 = vld [vmem:[%s0 + $0x58] sm:$0xf]
    %v56 = vld [vmem:[%s0 + $0x5c] sm:$0xf]
    %v57 = vld [vmem:[%s0 + $0x60] sm:$0xf]
    %v58 = vld [vmem:[%s0 + $0x64] sm:$0xf]
    %v59 = vld [vmem:[%s0 + $0x68] sm:$0xf]
    %v60 = vld [vmem:[%s0 + $0x6c] sm:$0xf]
    %v61 = vld [vmem:[%s0 + $0x70] sm:$0xf]
    %v62 = vld [vmem:[%s0 + $0x74] sm:$0xf]
    %v63 = vld [vmem:[%s0 + $0x78] sm:$0xf]
    %v64 = vld [vmem:[%s0 + $0x7c] sm:$0xf]
    %v65 = vld [vmem:[%s0 + $0x80] sm:$0xf]
    %v66 = vld [vmem:[%s0 + $0x84] sm:$0xf]
    %v67 = vld [vmem:[%s0 + $0x88] sm:$0xf]
    %v68 = vld [vmem:[%s0 + $0x8c] sm:$0xf]
    %v69 = vld [vmem:[%s0 + $0x90] sm:$0xf]
    %v70 = vld [vmem:[%s0 + $0x94] sm:$0xf]
    %v71 = vld [vmem:[%s0 + $0x98] sm:$0xf]
    %v72 = vld [vmem:[%s0 + $0x9c] sm:$0xf]
    %v73 = vld [vmem:[%s0 + $0xa0] sm:$0xf]
    %v74 = vld [vmem:[%s0 + $0xa4] sm:$0xf]
    %v75 = vld [vmem:[%s0 + $0xa8] sm:$0xf]
    %v76 = vld [vmem:[%s0 + $0xac] sm:$0xf]
    %v77 = vld [vmem:[%s0 + $0xb0] sm:$0xf]
    %v78 = vld [vmem:[%s0 + $0xb4] sm:$0xf]
    %v79 = vld [vmem:[%s0 + $0xb8] sm:$0xf]
    %v80 = vld [vmem:[%s0 + $0xbc] sm:$0xf]
    %v81 = vld [vmem:[%s0 + $0xc0] sm:$0xf]
    %v82 = vld [vmem:[%s0 + $0xc4] sm:$0xf]
    %v83 = vld [vmem:[%s0 + $0xc8] sm:$0xf]
    %v84 = vld [vmem:[%s0 + $0xcc] sm:$0xf]
    %v85 = vld [vmem:[%s0 + $0xd0] sm:$0xf]
    %v86 = vld [vmem:[%s0 + $0xd4] sm:$0xf]
    %v87 = vld [vmem:[%s0 + $0xd8] sm:$0xf]
    %v88 = vld [vmem:[%s0 + $0xdc] sm:$0xf]
    %v89 = vld [vmem:[%s0 + $0xe0] sm:$0xf]
    %v90 = vld [vmem:[%s0 + $0xe4] sm:$0xf]
    %v91 = vld [vmem:[%s0 + $0xe8] sm:$0xf]
    %v92 = vld [vmem:[%s0 + $0xec] sm:$0xf]
    %v93 = vld [vmem:[%s0 + $0xf0] sm:$0xf]
    %v94 = vld [vmem:[%s0 + $0xf4] sm:$0xf]
    %v95 = vld [vmem:[%s0 + $0xf8] sm:$0xf]
    %v96 = vld [vmem:[%s0 + $0xfc] sm:$0xf]
    %v97 = vunpack.c.l.bf16 %v33
    %v98 = vunpack.c.l.bf16 %v34
    %v99 = vunpack.c.l.bf16 %v35
    %v100 = vunpack.c.l.bf16 %v36
    %v101 = vunpack.c.l.bf16 %v37
    %v102 = vunpack.c.l.bf16 %v38
    %v103 = vunpack.c.l.bf16 %v39
    %v104 = vunpack.c.l.bf16 %v40
    %v105 = vunpack.c.l.bf16 %v41
    %v106 = vunpack.c.l.bf16 %v42
    %v107 = vunpack.c.l.bf16 %v43
    %v108 = vunpack.c.l.bf16 %v44
    %v109 = vunpack.c.l.bf16 %v45
    %v110 = vunpack.c.l.bf16 %v46
    %v111 = vunpack.c.l.bf16 %v47
    %v112 = vunpack.c.l.bf16 %v48
    %v113 = vunpack.c.l.bf16 %v49
    %v114 = vunpack.c.l.bf16 %v50
    %v115 = vunpack.c.l.bf16 %v51
    %v116 = vunpack.c.l.bf16 %v52
    %v117 = vunpack.c.l.bf16 %v53
    %v118 = vunpack.c.l.bf16 %v54
    %v119 = vunpack.c.l.bf16 %v55
    %v120 = vunpack.c.l.bf16 %v56
    %v121 = vunpack.c.l.bf16 %v57
    %v122 = vunpack.c.l.bf16 %v58
    %v123 = vunpack.c.l.bf16 %v59
    %v124 = vunpack.c.l.bf16 %v60
    %v125 = vunpack.c.l.bf16 %v61
    %v126 = vunpack.c.l.bf16 %v62
    %v127 = vunpack.c.l.bf16 %v63
    %v128 = vunpack.c.l.bf16 %v64
    %v129 = vunpack.c.l.bf16 %v65
    %v130 = vunpack.c.l.bf16 %v66
    %v131 = vunpack.c.l.bf16 %v67
    %v132 = vunpack.c.l.bf16 %v68
    %v133 = vunpack.c.l.bf16 %v69
    %v134 = vunpack.c.l.bf16 %v70
    %v135 = vunpack.c.l.bf16 %v71
    %v136 = vunpack.c.l.bf16 %v72
    %v137 = vunpack.c.l.bf16 %v73
    %v138 = vunpack.c.l.bf16 %v74
    %v139 = vunpack.c.l.bf16 %v75
    %v140 = vunpack.c.l.bf16 %v76
    %v141 = vunpack.c.l.bf16 %v77
    %v142 = vunpack.c.l.bf16 %v78
    %v143 = vunpack.c.l.bf16 %v79
    %v144 = vunpack.c.l.bf16 %v80
    %v145 = vunpack.c.l.bf16 %v81
    %v146 = vunpack.c.l.bf16 %v82
    %v147 = vunpack.c.l.bf16 %v83
    %v148 = vunpack.c.l.bf16 %v84
    %v149 = vunpack.c.l.bf16 %v85
    %v150 = vunpack.c.l.bf16 %v86
    %v151 = vunpack.c.l.bf16 %v87
    %v152 = vunpack.c.l.bf16 %v88
    %v153 = vunpack.c.l.bf16 %v89
    %v154 = vunpack.c.l.bf16 %v90
    %v155 = vunpack.c.l.bf16 %v91
    %v156 = vunpack.c.l.bf16 %v92
    %v157 = vunpack.c.l.bf16 %v93
    %v158 = vunpack.c.l.bf16 %v94
    %v159 = vunpack.c.l.bf16 %v95
    %v160 = vunpack.c.l.bf16 %v96
    %162 = vset.pattern.permute.xlu0 64
    %163 = vperm.xlu0 %162, %v97
    %v164 = vpop.permute.xlu0 %163
    %167 = vset.pattern.permute.xlu0 64
    %168 = vperm.xlu0 %167, %v98
    %v169 = vpop.permute.xlu0 %168
    %172 = vset.pattern.permute.xlu0 64
    %173 = vperm.xlu0 %172, %v99
    %v174 = vpop.permute.xlu0 %173
    %177 = vset.pattern.permute.xlu0 64
    %178 = vperm.xlu0 %177, %v100
    %v179 = vpop.permute.xlu0 %178
    %182 = vset.pattern.permute.xlu0 64
    %183 = vperm.xlu0 %182, %v101
    %v184 = vpop.permute.xlu0 %183
    %187 = vset.pattern.permute.xlu0 64
    %188 = vperm.xlu0 %187, %v102
    %v189 = vpop.permute.xlu0 %188
    %192 = vset.pattern.permute.xlu0 64
    %193 = vperm.xlu0 %192, %v103
    %v194 = vpop.permute.xlu0 %193
    %197 = vset.pattern.permute.xlu0 64
    %198 = vperm.xlu0 %197, %v104
    %v199 = vpop.permute.xlu0 %198
    %202 = vset.pattern.permute.xlu0 64
    %203 = vperm.xlu0 %202, %v105
    %v204 = vpop.permute.xlu0 %203
    %207 = vset.pattern.permute.xlu0 64
    %208 = vperm.xlu0 %207, %v106
    %v209 = vpop.permute.xlu0 %208
    %212 = vset.pattern.permute.xlu0 64
    %213 = vperm.xlu0 %212, %v107
    %v214 = vpop.permute.xlu0 %213
    %217 = vset.pattern.permute.xlu0 64
    %218 = vperm.xlu0 %217, %v108
    %v219 = vpop.permute.xlu0 %218
    %222 = vset.pattern.permute.xlu0 64
    %223 = vperm.xlu0 %222, %v109
    %v224 = vpop.permute.xlu0 %223
    %227 = vset.pattern.permute.xlu0 64
    %228 = vperm.xlu0 %227, %v110
    %v229 = vpop.permute.xlu0 %228
    %232 = vset.pattern.permute.xlu0 64
    %233 = vperm.xlu0 %232, %v111
    %v234 = vpop.permute.xlu0 %233
    %237 = vset.pattern.permute.xlu0 64
    %238 = vperm.xlu0 %237, %v112
    %v239 = vpop.permute.xlu0 %238
    %242 = vset.pattern.permute.xlu0 64
    %243 = vperm.xlu0 %242, %v113
    %v244 = vpop.permute.xlu0 %243
    %247 = vset.pattern.permute.xlu0 64
    %248 = vperm.xlu0 %247, %v114
    %v249 = vpop.permute.xlu0 %248
    %252 = vset.pattern.permute.xlu0 64
    %253 = vperm.xlu0 %252, %v115
    %v254 = vpop.permute.xlu0 %253
    %257 = vset.pattern.permute.xlu0 64
    %258 = vperm.xlu0 %257, %v116
    %v259 = vpop.permute.xlu0 %258
    %262 = vset.pattern.permute.xlu0 64
    %263 = vperm.xlu0 %262, %v117
    %v264 = vpop.permute.xlu0 %263
    %267 = vset.pattern.permute.xlu0 64
    %268 = vperm.xlu0 %267, %v118
    %v269 = vpop.permute.xlu0 %268
    %272 = vset.pattern.permute.xlu0 64
    %273 = vperm.xlu0 %272, %v119
    %v274 = vpop.permute.xlu0 %273
    %277 = vset.pattern.permute.xlu0 64
    %278 = vperm.xlu0 %277, %v120
    %v279 = vpop.permute.xlu0 %278
    %282 = vset.pattern.permute.xlu0 64
    %283 = vperm.xlu0 %282, %v121
    %v284 = vpop.permute.xlu0 %283
    %287 = vset.pattern.permute.xlu0 64
    %288 = vperm.xlu0 %287, %v122
    %v289 = vpop.permute.xlu0 %288
    %292 = vset.pattern.permute.xlu0 64
    %293 = vperm.xlu0 %292, %v123
    %v294 = vpop.permute.xlu0 %293
    %297 = vset.pattern.permute.xlu0 64
    %298 = vperm.xlu0 %297, %v124
    %v299 = vpop.permute.xlu0 %298
    %302 = vset.pattern.permute.xlu0 64
    %303 = vperm.xlu0 %302, %v125
    %v304 = vpop.permute.xlu0 %303
    %307 = vset.pattern.permute.xlu0 64
    %308 = vperm.xlu0 %307, %v126
    %v309 = vpop.permute.xlu0 %308
    %312 = vset.pattern.permute.xlu0 64
    %313 = vperm.xlu0 %312, %v127
    %v314 = vpop.permute.xlu0 %313
    %317 = vset.pattern.permute.xlu0 64
    %318 = vperm.xlu0 %317, %v128
    %v319 = vpop.permute.xlu0 %318
    %322 = vset.pattern.permute.xlu0 64
    %323 = vperm.xlu0 %322, %v129
    %v324 = vpop.permute.xlu0 %323
    %327 = vset.pattern.permute.xlu0 64
    %328 = vperm.xlu0 %327, %v130
    %v329 = vpop.permute.xlu0 %328
    %332 = vset.pattern.permute.xlu0 64
    %333 = vperm.xlu0 %332, %v131
    %v334 = vpop.permute.xlu0 %333
    %337 = vset.pattern.permute.xlu0 64
    %338 = vperm.xlu0 %337, %v132
    %v339 = vpop.permute.xlu0 %338
    %342 = vset.pattern.permute.xlu0 64
    %343 = vperm.xlu0 %342, %v133
    %v344 = vpop.permute.xlu0 %343
    %347 = vset.pattern.permute.xlu0 64
    %348 = vperm.xlu0 %347, %v134
    %v349 = vpop.permute.xlu0 %348
    %352 = vset.pattern.permute.xlu0 64
    %353 = vperm.xlu0 %352, %v135
    %v354 = vpop.permute.xlu0 %353
    %357 = vset.pattern.permute.xlu0 64
    %358 = vperm.xlu0 %357, %v136
    %v359 = vpop.permute.xlu0 %358
    %362 = vset.pattern.permute.xlu0 64
    %363 = vperm.xlu0 %362, %v137
    %v364 = vpop.permute.xlu0 %363
    %367 = vset.pattern.permute.xlu0 64
    %368 = vperm.xlu0 %367, %v138
    %v369 = vpop.permute.xlu0 %368
    %372 = vset.pattern.permute.xlu0 64
    %373 = vperm.xlu0 %372, %v139
    %v374 = vpop.permute.xlu0 %373
    %377 = vset.pattern.permute.xlu0 64
    %378 = vperm.xlu0 %377, %v140
    %v379 = vpop.permute.xlu0 %378
    %382 = vset.pattern.permute.xlu0 64
    %383 = vperm.xlu0 %382, %v141
    %v384 = vpop.permute.xlu0 %383
    %387 = vset.pattern.permute.xlu0 64
    %388 = vperm.xlu0 %387, %v142
    %v389 = vpop.permute.xlu0 %388
    %392 = vset.pattern.permute.xlu0 64
    %393 = vperm.xlu0 %392, %v143
    %v394 = vpop.permute.xlu0 %393
    %397 = vset.pattern.permute.xlu0 64
    %398 = vperm.xlu0 %397, %v144
    %v399 = vpop.permute.xlu0 %398
    %402 = vset.pattern.permute.xlu0 64
    %403 = vperm.xlu0 %402, %v145
    %v404 = vpop.permute.xlu0 %403
    %407 = vset.pattern.permute.xlu0 64
    %408 = vperm.xlu0 %407, %v146
    %v409 = vpop.permute.xlu0 %408
    %412 = vset.pattern.permute.xlu0 64
    %413 = vperm.xlu0 %412, %v147
    %v414 = vpop.permute.xlu0 %413
    %417 = vset.pattern.permute.xlu0 64
    %418 = vperm.xlu0 %417, %v148
    %v419 = vpop.permute.xlu0 %418
    %422 = vset.pattern.permute.xlu0 64
    %423 = vperm.xlu0 %422, %v149
    %v424 = vpop.permute.xlu0 %423
    %427 = vset.pattern.permute.xlu0 64
    %428 = vperm.xlu0 %427, %v150
    %v429 = vpop.permute.xlu0 %428
    %432 = vset.pattern.permute.xlu0 64
    %433 = vperm.xlu0 %432, %v151
    %v434 = vpop.permute.xlu0 %433
    %437 = vset.pattern.permute.xlu0 64
    %438 = vperm.xlu0 %437, %v152
    %v439 = vpop.permute.xlu0 %438
    %442 = vset.pattern.permute.xlu0 64
    %443 = vperm.xlu0 %442, %v153
    %v444 = vpop.permute.xlu0 %443
    %447 = vset.pattern.permute.xlu0 64
    %448 = vperm.xlu0 %447, %v154
    %v449 = vpop.permute.xlu0 %448
    %452 = vset.pattern.permute.xlu0 64
    %453 = vperm.xlu0 %452, %v155
    %v454 = vpop.permute.xlu0 %453
    %457 = vset.pattern.permute.xlu0 64
    %458 = vperm.xlu0 %457, %v156
    %v459 = vpop.permute.xlu0 %458
    %462 = vset.pattern.permute.xlu0 64
    %463 = vperm.xlu0 %462, %v157
    %v464 = vpop.permute.xlu0 %463
    %467 = vset.pattern.permute.xlu0 64
    %468 = vperm.xlu0 %467, %v158
    %v469 = vpop.permute.xlu0 %468
    %472 = vset.pattern.permute.xlu0 64
    %473 = vperm.xlu0 %472, %v159
    %v474 = vpop.permute.xlu0 %473
    %477 = vset.pattern.permute.xlu0 64
    %478 = vperm.xlu0 %477, %v160
    %v479 = vpop.permute.xlu0 %478
    %v481 = vmul.f32 %v164, %v97
    %v482 = vmul.f32 %v169, %v98
    %v483 = vmul.f32 %v174, %v99
    %v484 = vmul.f32 %v179, %v100
    %v485 = vmul.f32 %v184, %v101
    %v486 = vmul.f32 %v189, %v102
    %v487 = vmul.f32 %v194, %v103
    %v488 = vmul.f32 %v199, %v104
    %v489 = vmul.f32 %v204, %v105
    %v490 = vmul.f32 %v209, %v106
    %v491 = vmul.f32 %v214, %v107
    %v492 = vmul.f32 %v219, %v108
    %v493 = vmul.f32 %v224, %v109
    %v494 = vmul.f32 %v229, %v110
    %v495 = vmul.f32 %v234, %v111
    %v496 = vmul.f32 %v239, %v112
    %v497 = vmul.f32 %v244, %v113
    %v498 = vmul.f32 %v249, %v114
    %v499 = vmul.f32 %v254, %v115
    %v500 = vmul.f32 %v259, %v116
    %v501 = vmul.f32 %v264, %v117
    %v502 = vmul.f32 %v269, %v118
    %v503 = vmul.f32 %v274, %v119
    %v504 = vmul.f32 %v279, %v120
    %v505 = vmul.f32 %v284, %v121
    %v506 = vmul.f32 %v289, %v122
    %v507 = vmul.f32 %v294, %v123
    %v508 = vmul.f32 %v299, %v124
    %v509 = vmul.f32 %v304, %v125
    %v510 = vmul.f32 %v309, %v126
    %v511 = vmul.f32 %v314, %v127
    %v512 = vmul.f32 %v319, %v128
    %v513 = vmul.f32 %v324, %v129
    %v514 = vmul.f32 %v329, %v130
    %v515 = vmul.f32 %v334, %v131
    %v516 = vmul.f32 %v339, %v132
    %v517 = vmul.f32 %v344, %v133
    %v518 = vmul.f32 %v349, %v134
    %v519 = vmul.f32 %v354, %v135
    %v520 = vmul.f32 %v359, %v136
    %v521 = vmul.f32 %v364, %v137
    %v522 = vmul.f32 %v369, %v138
    %v523 = vmul.f32 %v374, %v139
    %v524 = vmul.f32 %v379, %v140
    %v525 = vmul.f32 %v384, %v141
    %v526 = vmul.f32 %v389, %v142
    %v527 = vmul.f32 %v394, %v143
    %v528 = vmul.f32 %v399, %v144
    %v529 = vmul.f32 %v404, %v145
    %v530 = vmul.f32 %v409, %v146
    %v531 = vmul.f32 %v414, %v147
    %v532 = vmul.f32 %v419, %v148
    %v533 = vmul.f32 %v424, %v149
    %v534 = vmul.f32 %v429, %v150
    %v535 = vmul.f32 %v434, %v151
    %v536 = vmul.f32 %v439, %v152
    %v537 = vmul.f32 %v444, %v153
    %v538 = vmul.f32 %v449, %v154
    %v539 = vmul.f32 %v454, %v155
    %v540 = vmul.f32 %v459, %v156
    %v541 = vmul.f32 %v464, %v157
    %v542 = vmul.f32 %v469, %v158
    %v543 = vmul.f32 %v474, %v159
    %v544 = vmul.f32 %v479, %v160
    %545 = vset.pattern.permute.xlu0 65
    %546 = vperm.xlu0 %545, %v97
    %v547 = vpop.permute.xlu0 %546
    %549 = vset.pattern.permute.xlu0 65
    %550 = vperm.xlu0 %549, %v98
    %v551 = vpop.permute.xlu0 %550
    %553 = vset.pattern.permute.xlu0 65
    %554 = vperm.xlu0 %553, %v99
    %v555 = vpop.permute.xlu0 %554
    %557 = vset.pattern.permute.xlu0 65
    %558 = vperm.xlu0 %557, %v100
    %v559 = vpop.permute.xlu0 %558
    %561 = vset.pattern.permute.xlu0 65
    %562 = vperm.xlu0 %561, %v101
    %v563 = vpop.permute.xlu0 %562
    %565 = vset.pattern.permute.xlu0 65
    %566 = vperm.xlu0 %565, %v102
    %v567 = vpop.permute.xlu0 %566
    %569 = vset.pattern.permute.xlu0 65
    %570 = vperm.xlu0 %569, %v103
    %v571 = vpop.permute.xlu0 %570
    %573 = vset.pattern.permute.xlu0 65
    %574 = vperm.xlu0 %573, %v104
    %v575 = vpop.permute.xlu0 %574
    %577 = vset.pattern.permute.xlu0 65
    %578 = vperm.xlu0 %577, %v105
    %v579 = vpop.permute.xlu0 %578
    %581 = vset.pattern.permute.xlu0 65
    %582 = vperm.xlu0 %581, %v106
    %v583 = vpop.permute.xlu0 %582
    %585 = vset.pattern.permute.xlu0 65
    %586 = vperm.xlu0 %585, %v107
    %v587 = vpop.permute.xlu0 %586
    %589 = vset.pattern.permute.xlu0 65
    %590 = vperm.xlu0 %589, %v108
    %v591 = vpop.permute.xlu0 %590
    %593 = vset.pattern.permute.xlu0 65
    %594 = vperm.xlu0 %593, %v109
    %v595 = vpop.permute.xlu0 %594
    %597 = vset.pattern.permute.xlu0 65
    %598 = vperm.xlu0 %597, %v110
    %v599 = vpop.permute.xlu0 %598
    %601 = vset.pattern.permute.xlu0 65
    %602 = vperm.xlu0 %601, %v111
    %v603 = vpop.permute.xlu0 %602
    %605 = vset.pattern.permute.xlu0 65
    %606 = vperm.xlu0 %605, %v112
    %v607 = vpop.permute.xlu0 %606
    %609 = vset.pattern.permute.xlu0 65
    %610 = vperm.xlu0 %609, %v113
    %v611 = vpop.permute.xlu0 %610
    %613 = vset.pattern.permute.xlu0 65
    %614 = vperm.xlu0 %613, %v114
    %v615 = vpop.permute.xlu0 %614
    %617 = vset.pattern.permute.xlu0 65
    %618 = vperm.xlu0 %617, %v115
    %v619 = vpop.permute.xlu0 %618
    %621 = vset.pattern.permute.xlu0 65
    %622 = vperm.xlu0 %621, %v116
    %v623 = vpop.permute.xlu0 %622
    %625 = vset.pattern.permute.xlu0 65
    %626 = vperm.xlu0 %625, %v117
    %v627 = vpop.permute.xlu0 %626
    %629 = vset.pattern.permute.xlu0 65
    %630 = vperm.xlu0 %629, %v118
    %v631 = vpop.permute.xlu0 %630
    %633 = vset.pattern.permute.xlu0 65
    %634 = vperm.xlu0 %633, %v119
    %v635 = vpop.permute.xlu0 %634
    %637 = vset.pattern.permute.xlu0 65
    %638 = vperm.xlu0 %637, %v120
    %v639 = vpop.permute.xlu0 %638
    %641 = vset.pattern.permute.xlu0 65
    %642 = vperm.xlu0 %641, %v121
    %v643 = vpop.permute.xlu0 %642
    %645 = vset.pattern.permute.xlu0 65
    %646 = vperm.xlu0 %645, %v122
    %v647 = vpop.permute.xlu0 %646
    %649 = vset.pattern.permute.xlu0 65
    %650 = vperm.xlu0 %649, %v123
    %v651 = vpop.permute.xlu0 %650
    %653 = vset.pattern.permute.xlu0 65
    %654 = vperm.xlu0 %653, %v124
    %v655 = vpop.permute.xlu0 %654
    %657 = vset.pattern.permute.xlu0 65
    %658 = vperm.xlu0 %657, %v125
    %v659 = vpop.permute.xlu0 %658
    %661 = vset.pattern.permute.xlu0 65
    %662 = vperm.xlu0 %661, %v126
    %v663 = vpop.permute.xlu0 %662
    %665 = vset.pattern.permute.xlu0 65
    %666 = vperm.xlu0 %665, %v127
    %v667 = vpop.permute.xlu0 %666
    %669 = vset.pattern.permute.xlu0 65
    %670 = vperm.xlu0 %669, %v128
    %v671 = vpop.permute.xlu0 %670
    %673 = vset.pattern.permute.xlu0 65
    %674 = vperm.xlu0 %673, %v129
    %v675 = vpop.permute.xlu0 %674
    %677 = vset.pattern.permute.xlu0 65
    %678 = vperm.xlu0 %677, %v130
    %v679 = vpop.permute.xlu0 %678
    %681 = vset.pattern.permute.xlu0 65
    %682 = vperm.xlu0 %681, %v131
    %v683 = vpop.permute.xlu0 %682
    %685 = vset.pattern.permute.xlu0 65
    %686 = vperm.xlu0 %685, %v132
    %v687 = vpop.permute.xlu0 %686
    %689 = vset.pattern.permute.xlu0 65
    %690 = vperm.xlu0 %689, %v133
    %v691 = vpop.permute.xlu0 %690
    %693 = vset.pattern.permute.xlu0 65
    %694 = vperm.xlu0 %693, %v134
    %v695 = vpop.permute.xlu0 %694
    %697 = vset.pattern.permute.xlu0 65
    %698 = vperm.xlu0 %697, %v135
    %v699 = vpop.permute.xlu0 %698
    %701 = vset.pattern.permute.xlu0 65
    %702 = vperm.xlu0 %701, %v136
    %v703 = vpop.permute.xlu0 %702
    %705 = vset.pattern.permute.xlu0 65
    %706 = vperm.xlu0 %705, %v137
    %v707 = vpop.permute.xlu0 %706
    %709 = vset.pattern.permute.xlu0 65
    %710 = vperm.xlu0 %709, %v138
    %v711 = vpop.permute.xlu0 %710
    %713 = vset.pattern.permute.xlu0 65
    %714 = vperm.xlu0 %713, %v139
    %v715 = vpop.permute.xlu0 %714
    %717 = vset.pattern.permute.xlu0 65
    %718 = vperm.xlu0 %717, %v140
    %v719 = vpop.permute.xlu0 %718
    %721 = vset.pattern.permute.xlu0 65
    %722 = vperm.xlu0 %721, %v141
    %v723 = vpop.permute.xlu0 %722
    %725 = vset.pattern.permute.xlu0 65
    %726 = vperm.xlu0 %725, %v142
    %v727 = vpop.permute.xlu0 %726
    %729 = vset.pattern.permute.xlu0 65
    %730 = vperm.xlu0 %729, %v143
    %v731 = vpop.permute.xlu0 %730
    %733 = vset.pattern.permute.xlu0 65
    %734 = vperm.xlu0 %733, %v144
    %v735 = vpop.permute.xlu0 %734
    %737 = vset.pattern.permute.xlu0 65
    %738 = vperm.xlu0 %737, %v145
    %v739 = vpop.permute.xlu0 %738
    %741 = vset.pattern.permute.xlu0 65
    %742 = vperm.xlu0 %741, %v146
    %v743 = vpop.permute.xlu0 %742
    %745 = vset.pattern.permute.xlu0 65
    %746 = vperm.xlu0 %745, %v147
    %v747 = vpop.permute.xlu0 %746
    %749 = vset.pattern.permute.xlu0 65
    %750 = vperm.xlu0 %749, %v148
    %v751 = vpop.permute.xlu0 %750
    %753 = vset.pattern.permute.xlu0 65
    %754 = vperm.xlu0 %753, %v149
    %v755 = vpop.permute.xlu0 %754
    %757 = vset.pattern.permute.xlu0 65
    %758 = vperm.xlu0 %757, %v150
    %v759 = vpop.permute.xlu0 %758
    %761 = vset.pattern.permute.xlu0 65
    %762 = vperm.xlu0 %761, %v151
    %v763 = vpop.permute.xlu0 %762
    %765 = vset.pattern.permute.xlu0 65
    %766 = vperm.xlu0 %765, %v152
    %v767 = vpop.permute.xlu0 %766
    %769 = vset.pattern.permute.xlu0 65
    %770 = vperm.xlu0 %769, %v153
    %v771 = vpop.permute.xlu0 %770
    %773 = vset.pattern.permute.xlu0 65
    %774 = vperm.xlu0 %773, %v154
    %v775 = vpop.permute.xlu0 %774
    %777 = vset.pattern.permute.xlu0 65
    %778 = vperm.xlu0 %777, %v155
    %v779 = vpop.permute.xlu0 %778
    %781 = vset.pattern.permute.xlu0 65
    %782 = vperm.xlu0 %781, %v156
    %v783 = vpop.permute.xlu0 %782
    %785 = vset.pattern.permute.xlu0 65
    %786 = vperm.xlu0 %785, %v157
    %v787 = vpop.permute.xlu0 %786
    %789 = vset.pattern.permute.xlu0 65
    %790 = vperm.xlu0 %789, %v158
    %v791 = vpop.permute.xlu0 %790
    %793 = vset.pattern.permute.xlu0 65
    %794 = vperm.xlu0 %793, %v159
    %v795 = vpop.permute.xlu0 %794
    %797 = vset.pattern.permute.xlu0 65
    %798 = vperm.xlu0 %797, %v160
    %v799 = vpop.permute.xlu0 %798
    %v801 = vmul.f32 %v547, %v97
    %v802 = vmul.f32 %v551, %v98
    %v803 = vmul.f32 %v555, %v99
    %v804 = vmul.f32 %v559, %v100
    %v805 = vmul.f32 %v563, %v101
    %v806 = vmul.f32 %v567, %v102
    %v807 = vmul.f32 %v571, %v103
    %v808 = vmul.f32 %v575, %v104
    %v809 = vmul.f32 %v579, %v105
    %v810 = vmul.f32 %v583, %v106
    %v811 = vmul.f32 %v587, %v107
    %v812 = vmul.f32 %v591, %v108
    %v813 = vmul.f32 %v595, %v109
    %v814 = vmul.f32 %v599, %v110
    %v815 = vmul.f32 %v603, %v111
    %v816 = vmul.f32 %v607, %v112
    %v817 = vmul.f32 %v611, %v113
    %v818 = vmul.f32 %v615, %v114
    %v819 = vmul.f32 %v619, %v115
    %v820 = vmul.f32 %v623, %v116
    %v821 = vmul.f32 %v627, %v117
    %v822 = vmul.f32 %v631, %v118
    %v823 = vmul.f32 %v635, %v119
    %v824 = vmul.f32 %v639, %v120
    %v825 = vmul.f32 %v643, %v121
    %v826 = vmul.f32 %v647, %v122
    %v827 = vmul.f32 %v651, %v123
    %v828 = vmul.f32 %v655, %v124
    %v829 = vmul.f32 %v659, %v125
    %v830 = vmul.f32 %v663, %v126
    %v831 = vmul.f32 %v667, %v127
    %v832 = vmul.f32 %v671, %v128
    %v833 = vmul.f32 %v675, %v129
    %v834 = vmul.f32 %v679, %v130
    %v835 = vmul.f32 %v683, %v131
    %v836 = vmul.f32 %v687, %v132
    %v837 = vmul.f32 %v691, %v133
    %v838 = vmul.f32 %v695, %v134
    %v839 = vmul.f32 %v699, %v135
    %v840 = vmul.f32 %v703, %v136
    %v841 = vmul.f32 %v707, %v137
    %v842 = vmul.f32 %v711, %v138
    %v843 = vmul.f32 %v715, %v139
    %v844 = vmul.f32 %v719, %v140
    %v845 = vmul.f32 %v723, %v141
    %v846 = vmul.f32 %v727, %v142
    %v847 = vmul.f32 %v731, %v143
    %v848 = vmul.f32 %v735, %v144
    %v849 = vmul.f32 %v739, %v145
    %v850 = vmul.f32 %v743, %v146
    %v851 = vmul.f32 %v747, %v147
    %v852 = vmul.f32 %v751, %v148
    %v853 = vmul.f32 %v755, %v149
    %v854 = vmul.f32 %v759, %v150
    %v855 = vmul.f32 %v763, %v151
    %v856 = vmul.f32 %v767, %v152
    %v857 = vmul.f32 %v771, %v153
    %v858 = vmul.f32 %v775, %v154
    %v859 = vmul.f32 %v779, %v155
    %v860 = vmul.f32 %v783, %v156
    %v861 = vmul.f32 %v787, %v157
    %v862 = vmul.f32 %v791, %v158
    %v863 = vmul.f32 %v795, %v159
    %v864 = vmul.f32 %v799, %v160
    %929 = vrot.lane.b32.xlu0 %v801, 96
    %v930 = vpop.permute.xlu0 %929
    %931 = vrot.lane.b32.xlu0 %v802, 96
    %v932 = vpop.permute.xlu0 %931
    %933 = vrot.lane.b32.xlu0 %v803, 96
    %v934 = vpop.permute.xlu0 %933
    %935 = vrot.lane.b32.xlu0 %v804, 96
    %v936 = vpop.permute.xlu0 %935
    %937 = vrot.lane.b32.xlu0 %v805, 96
    %v938 = vpop.permute.xlu0 %937
    %939 = vrot.lane.b32.xlu0 %v806, 96
    %v940 = vpop.permute.xlu0 %939
    %941 = vrot.lane.b32.xlu0 %v807, 96
    %v942 = vpop.permute.xlu0 %941
    %943 = vrot.lane.b32.xlu0 %v808, 96
    %v944 = vpop.permute.xlu0 %943
    %945 = vrot.lane.b32.xlu0 %v809, 96
    %v946 = vpop.permute.xlu0 %945
    %947 = vrot.lane.b32.xlu0 %v810, 96
    %v948 = vpop.permute.xlu0 %947
    %949 = vrot.lane.b32.xlu0 %v811, 96
    %v950 = vpop.permute.xlu0 %949
    %951 = vrot.lane.b32.xlu0 %v812, 96
    %v952 = vpop.permute.xlu0 %951
    %953 = vrot.lane.b32.xlu0 %v813, 96
    %v954 = vpop.permute.xlu0 %953
    %955 = vrot.lane.b32.xlu0 %v814, 96
    %v956 = vpop.permute.xlu0 %955
    %957 = vrot.lane.b32.xlu0 %v815, 96
    %v958 = vpop.permute.xlu0 %957
    %959 = vrot.lane.b32.xlu0 %v816, 96
    %v960 = vpop.permute.xlu0 %959
    %961 = vrot.lane.b32.xlu0 %v817, 96
    %v962 = vpop.permute.xlu0 %961
    %963 = vrot.lane.b32.xlu0 %v818, 96
    %v964 = vpop.permute.xlu0 %963
    %965 = vrot.lane.b32.xlu0 %v819, 96
    %v966 = vpop.permute.xlu0 %965
    %967 = vrot.lane.b32.xlu0 %v820, 96
    %v968 = vpop.permute.xlu0 %967
    %969 = vrot.lane.b32.xlu0 %v821, 96
    %v970 = vpop.permute.xlu0 %969
    %971 = vrot.lane.b32.xlu0 %v822, 96
    %v972 = vpop.permute.xlu0 %971
    %973 = vrot.lane.b32.xlu0 %v823, 96
    %v974 = vpop.permute.xlu0 %973
    %975 = vrot.lane.b32.xlu0 %v824, 96
    %v976 = vpop.permute.xlu0 %975
    %977 = vrot.lane.b32.xlu0 %v825, 96
    %v978 = vpop.permute.xlu0 %977
    %979 = vrot.lane.b32.xlu0 %v826, 96
    %v980 = vpop.permute.xlu0 %979
    %981 = vrot.lane.b32.xlu0 %v827, 96
    %v982 = vpop.permute.xlu0 %981
    %983 = vrot.lane.b32.xlu0 %v828, 96
    %v984 = vpop.permute.xlu0 %983
    %985 = vrot.lane.b32.xlu0 %v829, 96
    %v986 = vpop.permute.xlu0 %985
    %987 = vrot.lane.b32.xlu0 %v830, 96
    %v988 = vpop.permute.xlu0 %987
    %989 = vrot.lane.b32.xlu0 %v831, 96
    %v990 = vpop.permute.xlu0 %989
    %991 = vrot.lane.b32.xlu0 %v832, 96
    %v992 = vpop.permute.xlu0 %991
    %993 = vrot.lane.b32.xlu0 %v833, 96
    %v994 = vpop.permute.xlu0 %993
    %995 = vrot.lane.b32.xlu0 %v834, 96
    %v996 = vpop.permute.xlu0 %995
    %997 = vrot.lane.b32.xlu0 %v835, 96
    %v998 = vpop.permute.xlu0 %997
    %999 = vrot.lane.b32.xlu0 %v836, 96
    %v1000 = vpop.permute.xlu0 %999
    %1001 = vrot.lane.b32.xlu0 %v837, 96
    %v1002 = vpop.permute.xlu0 %1001
    %1003 = vrot.lane.b32.xlu0 %v838, 96
    %v1004 = vpop.permute.xlu0 %1003
    %1005 = vrot.lane.b32.xlu0 %v839, 96
    %v1006 = vpop.permute.xlu0 %1005
    %1007 = vrot.lane.b32.xlu0 %v840, 96
    %v1008 = vpop.permute.xlu0 %1007
    %1009 = vrot.lane.b32.xlu0 %v841, 96
    %v1010 = vpop.permute.xlu0 %1009
    %1011 = vrot.lane.b32.xlu0 %v842, 96
    %v1012 = vpop.permute.xlu0 %1011
    %1013 = vrot.lane.b32.xlu0 %v843, 96
    %v1014 = vpop.permute.xlu0 %1013
    %1015 = vrot.lane.b32.xlu0 %v844, 96
    %v1016 = vpop.permute.xlu0 %1015
    %1017 = vrot.lane.b32.xlu0 %v845, 96
    %v1018 = vpop.permute.xlu0 %1017
    %1019 = vrot.lane.b32.xlu0 %v846, 96
    %v1020 = vpop.permute.xlu0 %1019
    %1021 = vrot.lane.b32.xlu0 %v847, 96
    %v1022 = vpop.permute.xlu0 %1021
    %1023 = vrot.lane.b32.xlu0 %v848, 96
    %v1024 = vpop.permute.xlu0 %1023
    %1025 = vrot.lane.b32.xlu0 %v849, 96
    %v1026 = vpop.permute.xlu0 %1025
    %1027 = vrot.lane.b32.xlu0 %v850, 96
    %v1028 = vpop.permute.xlu0 %1027
    %1029 = vrot.lane.b32.xlu0 %v851, 96
    %v1030 = vpop.permute.xlu0 %1029
    %1031 = vrot.lane.b32.xlu0 %v852, 96
    %v1032 = vpop.permute.xlu0 %1031
    %1033 = vrot.lane.b32.xlu0 %v853, 96
    %v1034 = vpop.permute.xlu0 %1033
    %1035 = vrot.lane.b32.xlu0 %v854, 96
    %v1036 = vpop.permute.xlu0 %1035
    %1037 = vrot.lane.b32.xlu0 %v855, 96
    %v1038 = vpop.permute.xlu0 %1037
    %1039 = vrot.lane.b32.xlu0 %v856, 96
    %v1040 = vpop.permute.xlu0 %1039
    %1041 = vrot.lane.b32.xlu0 %v857, 96
    %v1042 = vpop.permute.xlu0 %1041
    %1043 = vrot.lane.b32.xlu0 %v858, 96
    %v1044 = vpop.permute.xlu0 %1043
    %1045 = vrot.lane.b32.xlu0 %v859, 96
    %v1046 = vpop.permute.xlu0 %1045
    %1047 = vrot.lane.b32.xlu0 %v860, 96
    %v1048 = vpop.permute.xlu0 %1047
    %1049 = vrot.lane.b32.xlu0 %v861, 96
    %v1050 = vpop.permute.xlu0 %1049
    %1051 = vrot.lane.b32.xlu0 %v862, 96
    %v1052 = vpop.permute.xlu0 %1051
    %1053 = vrot.lane.b32.xlu0 %v863, 96
    %v1054 = vpop.permute.xlu0 %1053
    %1055 = vrot.lane.b32.xlu0 %v864, 96
    %v1056 = vpop.permute.xlu0 %1055
    %v1121 = vadd.f32 %v481, %v930
    %v1122 = vadd.f32 %v482, %v932
    %v1123 = vadd.f32 %v483, %v934
    %v1124 = vadd.f32 %v484, %v936
    %v1125 = vadd.f32 %v485, %v938
    %v1126 = vadd.f32 %v486, %v940
    %v1127 = vadd.f32 %v487, %v942
    %v1128 = vadd.f32 %v488, %v944
    %v1129 = vadd.f32 %v489, %v946
    %v1130 = vadd.f32 %v490, %v948
    %v1131 = vadd.f32 %v491, %v950
    %v1132 = vadd.f32 %v492, %v952
    %v1133 = vadd.f32 %v493, %v954
    %v1134 = vadd.f32 %v494, %v956
    %v1135 = vadd.f32 %v495, %v958
    %v1136 = vadd.f32 %v496, %v960
    %v1137 = vadd.f32 %v497, %v962
    %v1138 = vadd.f32 %v498, %v964
    %v1139 = vadd.f32 %v499, %v966
    %v1140 = vadd.f32 %v500, %v968
    %v1141 = vadd.f32 %v501, %v970
    %v1142 = vadd.f32 %v502, %v972
    %v1143 = vadd.f32 %v503, %v974
    %v1144 = vadd.f32 %v504, %v976
    %v1145 = vadd.f32 %v505, %v978
    %v1146 = vadd.f32 %v506, %v980
    %v1147 = vadd.f32 %v507, %v982
    %v1148 = vadd.f32 %v508, %v984
    %v1149 = vadd.f32 %v509, %v986
    %v1150 = vadd.f32 %v510, %v988
    %v1151 = vadd.f32 %v511, %v990
    %v1152 = vadd.f32 %v512, %v992
    %v1153 = vadd.f32 %v513, %v994
    %v1154 = vadd.f32 %v514, %v996
    %v1155 = vadd.f32 %v515, %v998
    %v1156 = vadd.f32 %v516, %v1000
    %v1157 = vadd.f32 %v517, %v1002
    %v1158 = vadd.f32 %v518, %v1004
    %v1159 = vadd.f32 %v519, %v1006
    %v1160 = vadd.f32 %v520, %v1008
    %v1161 = vadd.f32 %v521, %v1010
    %v1162 = vadd.f32 %v522, %v1012
    %v1163 = vadd.f32 %v523, %v1014
    %v1164 = vadd.f32 %v524, %v1016
    %v1165 = vadd.f32 %v525, %v1018
    %v1166 = vadd.f32 %v526, %v1020
    %v1167 = vadd.f32 %v527, %v1022
    %v1168 = vadd.f32 %v528, %v1024
    %v1169 = vadd.f32 %v529, %v1026
    %v1170 = vadd.f32 %v530, %v1028
    %v1171 = vadd.f32 %v531, %v1030
    %v1172 = vadd.f32 %v532, %v1032
    %v1173 = vadd.f32 %v533, %v1034
    %v1174 = vadd.f32 %v534, %v1036
    %v1175 = vadd.f32 %v535, %v1038
    %v1176 = vadd.f32 %v536, %v1040
    %v1177 = vadd.f32 %v537, %v1042
    %v1178 = vadd.f32 %v538, %v1044
    %v1179 = vadd.f32 %v539, %v1046
    %v1180 = vadd.f32 %v540, %v1048
    %v1181 = vadd.f32 %v541, %v1050
    %v1182 = vadd.f32 %v542, %v1052
    %v1183 = vadd.f32 %v543, %v1054
    %v1184 = vadd.f32 %v544, %v1056
    %v1185 = vld [vmem:[%s6] sm:$0x1]
    %v1186 = vld [vmem:[%s6 + $0x1] sm:$0x1]
    %v1187 = vld [vmem:[%s6 + $0x2] sm:$0x1]
    %v1188 = vpack.c.bf16 %v1122, %v1121
    %v1189 = vpack.c.bf16 %v1124, %v1123
    %v1190 = vpack.c.bf16 %v1126, %v1125
    %v1191 = vpack.c.bf16 %v1128, %v1127
    %v1192 = vpack.c.bf16 %v1130, %v1129
    %v1193 = vpack.c.bf16 %v1132, %v1131
    %v1194 = vpack.c.bf16 %v1134, %v1133
    %v1195 = vpack.c.bf16 %v1136, %v1135
    %v1196 = vpack.c.bf16 %v1138, %v1137
    %v1197 = vpack.c.bf16 %v1140, %v1139
    %v1198 = vpack.c.bf16 %v1142, %v1141
    %v1199 = vpack.c.bf16 %v1144, %v1143
    %v1200 = vpack.c.bf16 %v1146, %v1145
    %v1201 = vpack.c.bf16 %v1148, %v1147
    %v1202 = vpack.c.bf16 %v1150, %v1149
    %v1203 = vpack.c.bf16 %v1152, %v1151
    %v1204 = vpack.c.bf16 %v1154, %v1153
    %v1205 = vpack.c.bf16 %v1156, %v1155
    %v1206 = vpack.c.bf16 %v1158, %v1157
    %v1207 = vpack.c.bf16 %v1160, %v1159
    %v1208 = vpack.c.bf16 %v1162, %v1161
    %v1209 = vpack.c.bf16 %v1164, %v1163
    %v1210 = vpack.c.bf16 %v1166, %v1165
    %v1211 = vpack.c.bf16 %v1168, %v1167
    %v1212 = vpack.c.bf16 %v1170, %v1169
    %v1213 = vpack.c.bf16 %v1172, %v1171
    %v1214 = vpack.c.bf16 %v1174, %v1173
    %v1215 = vpack.c.bf16 %v1176, %v1175
    %v1216 = vpack.c.bf16 %v1178, %v1177
    %v1217 = vpack.c.bf16 %v1180, %v1179
    %v1218 = vpack.c.bf16 %v1182, %v1181
    %v1219 = vpack.c.bf16 %v1184, %v1183
    %v1220 = vld [vmem:[%s2] sm:$0xf]
    %v1221 = vld [vmem:[%s2 + $0x4] sm:$0xf]
    %v1222 = vld [vmem:[%s2 + $0x8] sm:$0xf]
    %v1223 = vld [vmem:[%s2 + $0xc] sm:$0xf]
    %v1224 = vld [vmem:[%s1] sm:$0xf]
    %v1225 = vld [vmem:[%s1 + $0x4] sm:$0xf]
    %v1226 = vld [vmem:[%s1 + $0x8] sm:$0xf]
    %v1227 = vld [vmem:[%s1 + $0xc] sm:$0xf]
    %v1228 = vld [vmem:[%s1 + $0x10] sm:$0xf]
    %v1229 = vld [vmem:[%s1 + $0x14] sm:$0xf]
    %v1230 = vld [vmem:[%s1 + $0x18] sm:$0xf]
    %v1231 = vld [vmem:[%s1 + $0x1c] sm:$0xf]
    %v1232 = vld [vmem:[%s1 + $0x20] sm:$0xf]
    %v1233 = vld [vmem:[%s1 + $0x24] sm:$0xf]
    %v1234 = vld [vmem:[%s1 + $0x28] sm:$0xf]
    %v1235 = vld [vmem:[%s1 + $0x2c] sm:$0xf]
    %v1236 = vld [vmem:[%s1 + $0x30] sm:$0xf]
    %v1237 = vld [vmem:[%s1 + $0x34] sm:$0xf]
    %v1238 = vld [vmem:[%s1 + $0x38] sm:$0xf]
    %v1239 = vld [vmem:[%s1 + $0x3c] sm:$0xf]
    %v1240 = vld [vmem:[%s1 + $0x40] sm:$0xf]
    %v1241 = vld [vmem:[%s1 + $0x44] sm:$0xf]
    %v1242 = vld [vmem:[%s1 + $0x48] sm:$0xf]
    %v1243 = vld [vmem:[%s1 + $0x4c] sm:$0xf]
    %v1244 = vld [vmem:[%s1 + $0x50] sm:$0xf]
    %v1245 = vld [vmem:[%s1 + $0x54] sm:$0xf]
    %v1246 = vld [vmem:[%s1 + $0x58] sm:$0xf]
    %v1247 = vld [vmem:[%s1 + $0x5c] sm:$0xf]
    %v1248 = vld [vmem:[%s1 + $0x60] sm:$0xf]
    %v1249 = vld [vmem:[%s1 + $0x64] sm:$0xf]
    %v1250 = vld [vmem:[%s1 + $0x68] sm:$0xf]
    %v1251 = vld [vmem:[%s1 + $0x6c] sm:$0xf]
    %v1252 = vld [vmem:[%s1 + $0x70] sm:$0xf]
    %v1253 = vld [vmem:[%s1 + $0x74] sm:$0xf]
    %v1254 = vld [vmem:[%s1 + $0x78] sm:$0xf]
    %v1255 = vld [vmem:[%s1 + $0x7c] sm:$0xf]
    %v1256 = vld [vmem:[%s1 + $0x80] sm:$0xf]
    %v1257 = vld [vmem:[%s1 + $0x84] sm:$0xf]
    %v1258 = vld [vmem:[%s1 + $0x88] sm:$0xf]
    %v1259 = vld [vmem:[%s1 + $0x8c] sm:$0xf]
    %v1260 = vld [vmem:[%s1 + $0x90] sm:$0xf]
    %v1261 = vld [vmem:[%s1 + $0x94] sm:$0xf]
    %v1262 = vld [vmem:[%s1 + $0x98] sm:$0xf]
    %v1263 = vld [vmem:[%s1 + $0x9c] sm:$0xf]
    %v1264 = vld [vmem:[%s1 + $0xa0] sm:$0xf]
    %v1265 = vld [vmem:[%s1 + $0xa4] sm:$0xf]
    %v1266 = vld [vmem:[%s1 + $0xa8] sm:$0xf]
    %v1267 = vld [vmem:[%s1 + $0xac] sm:$0xf]
    %v1268 = vld [vmem:[%s1 + $0xb0] sm:$0xf]
    %v1269 = vld [vmem:[%s1 + $0xb4] sm:$0xf]
    %v1270 = vld [vmem:[%s1 + $0xb8] sm:$0xf]
    %v1271 = vld [vmem:[%s1 + $0xbc] sm:$0xf]
    %v1272 = vld [vmem:[%s1 + $0xc0] sm:$0xf]
    %v1273 = vld [vmem:[%s1 + $0xc4] sm:$0xf]
    %v1274 = vld [vmem:[%s1 + $0xc8] sm:$0xf]
    %v1275 = vld [vmem:[%s1 + $0xcc] sm:$0xf]
    %v1276 = vld [vmem:[%s1 + $0xd0] sm:$0xf]
    %v1277 = vld [vmem:[%s1 + $0xd4] sm:$0xf]
    %v1278 = vld [vmem:[%s1 + $0xd8] sm:$0xf]
    %v1279 = vld [vmem:[%s1 + $0xdc] sm:$0xf]
    %v1280 = vld [vmem:[%s1 + $0xe0] sm:$0xf]
    %v1281 = vld [vmem:[%s1 + $0xe4] sm:$0xf]
    %v1282 = vld [vmem:[%s1 + $0xe8] sm:$0xf]
    %v1283 = vld [vmem:[%s1 + $0xec] sm:$0xf]
    %v1284 = vld [vmem:[%s1 + $0xf0] sm:$0xf]
    %v1285 = vld [vmem:[%s1 + $0xf4] sm:$0xf]
    %v1286 = vld [vmem:[%s1 + $0xf8] sm:$0xf]
    %v1287 = vld [vmem:[%s1 + $0xfc] sm:$0xf]
    %v1288 = vld [vmem:[%s3] sm:$0xf]
    %v1289 = vld [vmem:[%s3 + $0x4] sm:$0xf]
    %v1290 = vld [vmem:[%s3 + $0x8] sm:$0xf]
    %v1291 = vld [vmem:[%s3 + $0xc] sm:$0xf]
    %v1292 = vld [vmem:[%s3 + $0x10] sm:$0xf]
    %v1293 = vld [vmem:[%s3 + $0x14] sm:$0xf]
    %v1294 = vld [vmem:[%s3 + $0x18] sm:$0xf]
    %v1295 = vld [vmem:[%s3 + $0x1c] sm:$0xf]
    %v1360 = vunpack.c.l.b16 %v1224
    %v1361 = vunpack.c.l.b16 %v1225
    %v1362 = vunpack.c.l.b16 %v1226
    %v1363 = vunpack.c.l.b16 %v1227
    %v1364 = vunpack.c.l.b16 %v1228
    %v1365 = vunpack.c.l.b16 %v1229
    %v1366 = vunpack.c.l.b16 %v1230
    %v1367 = vunpack.c.l.b16 %v1231
    %v1368 = vunpack.c.l.b16 %v1232
    %v1369 = vunpack.c.l.b16 %v1233
    %v1370 = vunpack.c.l.b16 %v1234
    %v1371 = vunpack.c.l.b16 %v1235
    %v1372 = vunpack.c.l.b16 %v1236
    %v1373 = vunpack.c.l.b16 %v1237
    %v1374 = vunpack.c.l.b16 %v1238
    %v1375 = vunpack.c.l.b16 %v1239
    %v1376 = vunpack.c.l.b16 %v1240
    %v1377 = vunpack.c.l.b16 %v1241
    %v1378 = vunpack.c.l.b16 %v1242
    %v1379 = vunpack.c.l.b16 %v1243
    %v1380 = vunpack.c.l.b16 %v1244
    %v1381 = vunpack.c.l.b16 %v1245
    %v1382 = vunpack.c.l.b16 %v1246
    %v1383 = vunpack.c.l.b16 %v1247
    %v1384 = vunpack.c.l.b16 %v1248
    %v1385 = vunpack.c.l.b16 %v1249
    %v1386 = vunpack.c.l.b16 %v1250
    %v1387 = vunpack.c.l.b16 %v1251
    %v1388 = vunpack.c.l.b16 %v1252
    %v1389 = vunpack.c.l.b16 %v1253
    %v1390 = vunpack.c.l.b16 %v1254
    %v1391 = vunpack.c.l.b16 %v1255
    %v1392 = vunpack.c.l.b16 %v1256
    %v1393 = vunpack.c.l.b16 %v1257
    %v1394 = vunpack.c.l.b16 %v1258
    %v1395 = vunpack.c.l.b16 %v1259
    %v1396 = vunpack.c.l.b16 %v1260
    %v1397 = vunpack.c.l.b16 %v1261
    %v1398 = vunpack.c.l.b16 %v1262
    %v1399 = vunpack.c.l.b16 %v1263
    %v1400 = vunpack.c.l.b16 %v1264
    %v1401 = vunpack.c.l.b16 %v1265
    %v1402 = vunpack.c.l.b16 %v1266
    %v1403 = vunpack.c.l.b16 %v1267
    %v1404 = vunpack.c.l.b16 %v1268
    %v1405 = vunpack.c.l.b16 %v1269
    %v1406 = vunpack.c.l.b16 %v1270
    %v1407 = vunpack.c.l.b16 %v1271
    %v1408 = vunpack.c.l.b16 %v1272
    %v1409 = vunpack.c.l.b16 %v1273
    %v1410 = vunpack.c.l.b16 %v1274
    %v1411 = vunpack.c.l.b16 %v1275
    %v1412 = vunpack.c.l.b16 %v1276
    %v1413 = vunpack.c.l.b16 %v1277
    %v1414 = vunpack.c.l.b16 %v1278
    %v1415 = vunpack.c.l.b16 %v1279
    %v1416 = vunpack.c.l.b16 %v1280
    %v1417 = vunpack.c.l.b16 %v1281
    %v1418 = vunpack.c.l.b16 %v1282
    %v1419 = vunpack.c.l.b16 %v1283
    %v1420 = vunpack.c.l.b16 %v1284
    %v1421 = vunpack.c.l.b16 %v1285
    %v1422 = vunpack.c.l.b16 %v1286
    %v1423 = vunpack.c.l.b16 %v1287
    %v1424 = vpack.c.b16 %v1361, %v1360
    %v1425 = vpack.c.b16 %v1363, %v1362
    %v1426 = vpack.c.b16 %v1365, %v1364
    %v1427 = vpack.c.b16 %v1367, %v1366
    %v1428 = vpack.c.b16 %v1369, %v1368
    %v1429 = vpack.c.b16 %v1371, %v1370
    %v1430 = vpack.c.b16 %v1373, %v1372
    %v1431 = vpack.c.b16 %v1375, %v1374
    %v1432 = vpack.c.b16 %v1377, %v1376
    %v1433 = vpack.c.b16 %v1379, %v1378
    %v1434 = vpack.c.b16 %v1381, %v1380
    %v1435 = vpack.c.b16 %v1383, %v1382
    %v1436 = vpack.c.b16 %v1385, %v1384
    %v1437 = vpack.c.b16 %v1387, %v1386
    %v1438 = vpack.c.b16 %v1389, %v1388
    %v1439 = vpack.c.b16 %v1391, %v1390
    %v1440 = vpack.c.b16 %v1393, %v1392
    %v1441 = vpack.c.b16 %v1395, %v1394
    %v1442 = vpack.c.b16 %v1397, %v1396
    %v1443 = vpack.c.b16 %v1399, %v1398
    %v1444 = vpack.c.b16 %v1401, %v1400
    %v1445 = vpack.c.b16 %v1403, %v1402
    %v1446 = vpack.c.b16 %v1405, %v1404
    %v1447 = vpack.c.b16 %v1407, %v1406
    %v1448 = vpack.c.b16 %v1409, %v1408
    %v1449 = vpack.c.b16 %v1411, %v1410
    %v1450 = vpack.c.b16 %v1413, %v1412
    %v1451 = vpack.c.b16 %v1415, %v1414
    %v1452 = vpack.c.b16 %v1417, %v1416
    %v1453 = vpack.c.b16 %v1419, %v1418
    %v1454 = vpack.c.b16 %v1421, %v1420
    %v1455 = vpack.c.b16 %v1423, %v1422
    %v1464 = vunpack.c.l.b16 %v1288
    %v1465 = vunpack.c.l.b16 %v1289
    %v1466 = vunpack.c.l.b16 %v1290
    %v1467 = vunpack.c.l.b16 %v1291
    %v1468 = vunpack.c.l.b16 %v1292
    %v1469 = vunpack.c.l.b16 %v1293
    %v1470 = vunpack.c.l.b16 %v1294
    %v1471 = vunpack.c.l.b16 %v1295
    %v1472 = vpack.c.b16 %v1465, %v1464
    %v1473 = vpack.c.b16 %v1467, %v1466
    %v1474 = vpack.c.b16 %v1469, %v1468
    %v1475 = vpack.c.b16 %v1471, %v1470
    %vm1480 = vcmask 523264
    %v1482 = vsel %vm1480, %v1424, 0
    %v1485 = vsel %vm1480, %v1425, 0
    %v1488 = vsel %vm1480, %v1426, 0
    %v1491 = vsel %vm1480, %v1427, 0
    %v1494 = vsel %vm1480, %v1428, 0
    %v1497 = vsel %vm1480, %v1429, 0
    %v1500 = vsel %vm1480, %v1430, 0
    %v1503 = vsel %vm1480, %v1431, 0
    %v1506 = vsel %vm1480, %v1432, 0
    %v1509 = vsel %vm1480, %v1433, 0
    %v1512 = vsel %vm1480, %v1434, 0
    %v1515 = vsel %vm1480, %v1435, 0
    %v1518 = vsel %vm1480, %v1436, 0
    %v1521 = vsel %vm1480, %v1437, 0
    %v1524 = vsel %vm1480, %v1438, 0
    %v1527 = vsel %vm1480, %v1439, 0
    %v1530 = vsel %vm1480, %v1440, 0
    %v1533 = vsel %vm1480, %v1441, 0
    %v1536 = vsel %vm1480, %v1442, 0
    %v1539 = vsel %vm1480, %v1443, 0
    %v1542 = vsel %vm1480, %v1444, 0
    %v1545 = vsel %vm1480, %v1445, 0
    %v1548 = vsel %vm1480, %v1446, 0
    %v1551 = vsel %vm1480, %v1447, 0
    %v1554 = vsel %vm1480, %v1448, 0
    %v1557 = vsel %vm1480, %v1449, 0
    %v1560 = vsel %vm1480, %v1450, 0
    %v1563 = vsel %vm1480, %v1451, 0
    %v1566 = vsel %vm1480, %v1452, 0
    %v1569 = vsel %vm1480, %v1453, 0
    %v1572 = vsel %vm1480, %v1454, 0
    %v1575 = vsel %vm1480, %v1455, 0
    %1577 = vmatprep.subr.bf16.mxu0 0
    %1578 = vmatpush1.bf16.msra.mxu0 0
    %1579 = vmatprep.subr.bf16.mxu0 0
    %1580 = vmatpush1.bf16.msra.mxu0 0
    %1581 = vmatprep.subr.bf16.mxu0 0
    %1582 = vmatpush1.bf16.msra.mxu0 0
    %1583 = vmatprep.subr.bf16.mxu0 0
    %1584 = vmatpush1.bf16.msra.mxu0 0
    %1585 = vmatprep.subr.bf16.mxu0 0
    %1586 = vmatpush1.bf16.msra.mxu0 %v1475
    %1587 = vmatprep.subr.bf16.mxu0 0
    %1588 = vmatpush1.bf16.msra.mxu0 %v1474
    %1589 = vmatprep.subr.bf16.mxu0 0
    %1590 = vmatpush1.bf16.msra.mxu0 %v1473
    %1591 = vmatprep.subr.bf16.mxu0 0
    %1592 = vmatpush1.bf16.msra.mxu0 %v1472
    %1593 = vmatprep.subr.bf16.mxu0 0
    %1594 = vmatpush2.bf16.msra.mxu0 0
    %1595 = vmatprep.subr.bf16.mxu0 0
    %1596 = vmatpush2.bf16.msra.mxu0 0
    %1597 = vmatprep.subr.bf16.mxu0 0
    %1598 = vmatpush2.bf16.msra.mxu0 0
    %1599 = vmatprep.subr.bf16.mxu0 0
    %1600 = vmatpush2.bf16.msra.mxu0 0
    %1601 = vmatprep.subr.bf16.mxu0 0
    %1602 = vmatpush2.bf16.msra.mxu0 0
    %1603 = vmatprep.subr.bf16.mxu0 0
    %1604 = vmatpush2.bf16.msra.mxu0 0
    %1605 = vmatprep.subr.bf16.mxu0 0
    %1606 = vmatpush2.bf16.msra.mxu0 0
    %1607 = vmatprep.subr.bf16.mxu0 0
    %1608 = vmatpush2.bf16.msra.mxu0 0
    %1609 = vmatprep.mubr.bf16.mxu0 0
    %1610 = vmatmul.mubr.bf16.gmra.mxu0 %v1482
    %v1611 = vpop.f32.mrf.mxu0
    %v1612 = vadd.f32 0.0, %v1611
    %v1613 = vpop.f32.mrf.mxu0
    %v1614 = vpop.f32.mrf.mxu0
    %v1615 = vadd.f32 0.0, %v1614
    %v1616 = vpop.f32.mrf.mxu0
    %1617 = vmatprep.mubr.bf16.mxu0 0
    %1618 = vmatmul.mubr.bf16.gmra.mxu0 %v1485
    %v1619 = vpop.f32.mrf.mxu0
    %v1620 = vadd.f32 0.0, %v1619
    %v1621 = vpop.f32.mrf.mxu0
    %v1622 = vpop.f32.mrf.mxu0
    %v1623 = vadd.f32 0.0, %v1622
    %v1624 = vpop.f32.mrf.mxu0
    %1625 = vmatprep.mubr.bf16.mxu0 0
    %1626 = vmatmul.mubr.bf16.gmra.mxu0 %v1488
    %v1627 = vpop.f32.mrf.mxu0
    %v1628 = vadd.f32 0.0, %v1627
    %v1629 = vpop.f32.mrf.mxu0
    %v1630 = vpop.f32.mrf.mxu0
    %v1631 = vadd.f32 0.0, %v1630
    %v1632 = vpop.f32.mrf.mxu0
    %1633 = vmatprep.mubr.bf16.mxu0 0
    %1634 = vmatmul.mubr.bf16.gmra.mxu0 %v1491
    %v1635 = vpop.f32.mrf.mxu0
    %v1636 = vadd.f32 0.0, %v1635
    %v1637 = vpop.f32.mrf.mxu0
    %v1638 = vpop.f32.mrf.mxu0
    %v1639 = vadd.f32 0.0, %v1638
    %v1640 = vpop.f32.mrf.mxu0
    %1641 = vmatprep.mubr.bf16.mxu0 0
    %1642 = vmatmul.mubr.bf16.gmra.mxu0 %v1494
    %v1643 = vpop.f32.mrf.mxu0
    %v1644 = vadd.f32 0.0, %v1643
    %v1645 = vpop.f32.mrf.mxu0
    %v1646 = vpop.f32.mrf.mxu0
    %v1647 = vadd.f32 0.0, %v1646
    %v1648 = vpop.f32.mrf.mxu0
    %1649 = vmatprep.mubr.bf16.mxu0 0
    %1650 = vmatmul.mubr.bf16.gmra.mxu0 %v1497
    %v1651 = vpop.f32.mrf.mxu0
    %v1652 = vadd.f32 0.0, %v1651
    %v1653 = vpop.f32.mrf.mxu0
    %v1654 = vpop.f32.mrf.mxu0
    %v1655 = vadd.f32 0.0, %v1654
    %v1656 = vpop.f32.mrf.mxu0
    %1657 = vmatprep.mubr.bf16.mxu0 0
    %1658 = vmatmul.mubr.bf16.gmra.mxu0 %v1500
    %v1659 = vpop.f32.mrf.mxu0
    %v1660 = vadd.f32 0.0, %v1659
    %v1661 = vpop.f32.mrf.mxu0
    %v1662 = vpop.f32.mrf.mxu0
    %v1663 = vadd.f32 0.0, %v1662
    %v1664 = vpop.f32.mrf.mxu0
    %1665 = vmatprep.mubr.bf16.mxu0 0
    %1666 = vmatmul.mubr.bf16.gmra.mxu0 %v1503
    %v1667 = vpop.f32.mrf.mxu0
    %v1668 = vadd.f32 0.0, %v1667
    %v1669 = vpop.f32.mrf.mxu0
    %v1670 = vpop.f32.mrf.mxu0
    %v1671 = vadd.f32 0.0, %v1670
    %v1672 = vpop.f32.mrf.mxu0
    %1673 = vmatprep.mubr.bf16.mxu0 0
    %1674 = vmatmul.mubr.bf16.gmra.mxu0 %v1506
    %v1675 = vpop.f32.mrf.mxu0
    %v1676 = vadd.f32 0.0, %v1675
    %v1677 = vpop.f32.mrf.mxu0
    %v1678 = vpop.f32.mrf.mxu0
    %v1679 = vadd.f32 0.0, %v1678
    %v1680 = vpop.f32.mrf.mxu0
    %1681 = vmatprep.mubr.bf16.mxu0 0
    %1682 = vmatmul.mubr.bf16.gmra.mxu0 %v1509
    %v1683 = vpop.f32.mrf.mxu0
    %v1684 = vadd.f32 0.0, %v1683
    %v1685 = vpop.f32.mrf.mxu0
    %v1686 = vpop.f32.mrf.mxu0
    %v1687 = vadd.f32 0.0, %v1686
    %v1688 = vpop.f32.mrf.mxu0
    %1689 = vmatprep.mubr.bf16.mxu0 0
    %1690 = vmatmul.mubr.bf16.gmra.mxu0 %v1512
    %v1691 = vpop.f32.mrf.mxu0
    %v1692 = vadd.f32 0.0, %v1691
    %v1693 = vpop.f32.mrf.mxu0
    %v1694 = vpop.f32.mrf.mxu0
    %v1695 = vadd.f32 0.0, %v1694
    %v1696 = vpop.f32.mrf.mxu0
    %1697 = vmatprep.mubr.bf16.mxu0 0
    %1698 = vmatmul.mubr.bf16.gmra.mxu0 %v1515
    %v1699 = vpop.f32.mrf.mxu0
    %v1700 = vadd.f32 0.0, %v1699
    %v1701 = vpop.f32.mrf.mxu0
    %v1702 = vpop.f32.mrf.mxu0
    %v1703 = vadd.f32 0.0, %v1702
    %v1704 = vpop.f32.mrf.mxu0
    %1705 = vmatprep.mubr.bf16.mxu0 0
    %1706 = vmatmul.mubr.bf16.gmra.mxu0 %v1518
    %v1707 = vpop.f32.mrf.mxu0
    %v1708 = vadd.f32 0.0, %v1707
    %v1709 = vpop.f32.mrf.mxu0
    %v1710 = vpop.f32.mrf.mxu0
    %v1711 = vadd.f32 0.0, %v1710
    %v1712 = vpop.f32.mrf.mxu0
    %1713 = vmatprep.mubr.bf16.mxu0 0
    %1714 = vmatmul.mubr.bf16.gmra.mxu0 %v1521
    %v1715 = vpop.f32.mrf.mxu0
    %v1716 = vadd.f32 0.0, %v1715
    %v1717 = vpop.f32.mrf.mxu0
    %v1718 = vpop.f32.mrf.mxu0
    %v1719 = vadd.f32 0.0, %v1718
    %v1720 = vpop.f32.mrf.mxu0
    %1721 = vmatprep.mubr.bf16.mxu0 0
    %1722 = vmatmul.mubr.bf16.gmra.mxu0 %v1524
    %v1723 = vpop.f32.mrf.mxu0
    %v1724 = vadd.f32 0.0, %v1723
    %v1725 = vpop.f32.mrf.mxu0
    %v1726 = vpop.f32.mrf.mxu0
    %v1727 = vadd.f32 0.0, %v1726
    %v1728 = vpop.f32.mrf.mxu0
    %1729 = vmatprep.mubr.bf16.mxu0 0
    %1730 = vmatmul.mubr.bf16.gmra.mxu0 %v1527
    %v1731 = vpop.f32.mrf.mxu0
    %v1732 = vadd.f32 0.0, %v1731
    %v1733 = vpop.f32.mrf.mxu0
    %v1734 = vpop.f32.mrf.mxu0
    %v1735 = vadd.f32 0.0, %v1734
    %v1736 = vpop.f32.mrf.mxu0
    %1737 = vmatprep.mubr.bf16.mxu0 0
    %1738 = vmatmul.mubr.bf16.gmra.mxu0 %v1530
    %v1739 = vpop.f32.mrf.mxu0
    %v1740 = vadd.f32 0.0, %v1739
    %v1741 = vpop.f32.mrf.mxu0
    %v1742 = vpop.f32.mrf.mxu0
    %v1743 = vadd.f32 0.0, %v1742
    %v1744 = vpop.f32.mrf.mxu0
    %1745 = vmatprep.mubr.bf16.mxu0 0
    %1746 = vmatmul.mubr.bf16.gmra.mxu0 %v1533
    %v1747 = vpop.f32.mrf.mxu0
    %v1748 = vadd.f32 0.0, %v1747
    %v1749 = vpop.f32.mrf.mxu0
    %v1750 = vpop.f32.mrf.mxu0
    %v1751 = vadd.f32 0.0, %v1750
    %v1752 = vpop.f32.mrf.mxu0
    %1753 = vmatprep.mubr.bf16.mxu0 0
    %1754 = vmatmul.mubr.bf16.gmra.mxu0 %v1536
    %v1755 = vpop.f32.mrf.mxu0
    %v1756 = vadd.f32 0.0, %v1755
    %v1757 = vpop.f32.mrf.mxu0
    %v1758 = vpop.f32.mrf.mxu0
    %v1759 = vadd.f32 0.0, %v1758
    %v1760 = vpop.f32.mrf.mxu0
    %1761 = vmatprep.mubr.bf16.mxu0 0
    %1762 = vmatmul.mubr.bf16.gmra.mxu0 %v1539
    %v1763 = vpop.f32.mrf.mxu0
    %v1764 = vadd.f32 0.0, %v1763
    %v1765 = vpop.f32.mrf.mxu0
    %v1766 = vpop.f32.mrf.mxu0
    %v1767 = vadd.f32 0.0, %v1766
    %v1768 = vpop.f32.mrf.mxu0
    %1769 = vmatprep.mubr.bf16.mxu0 0
    %1770 = vmatmul.mubr.bf16.gmra.mxu0 %v1542
    %v1771 = vpop.f32.mrf.mxu0
    %v1772 = vadd.f32 0.0, %v1771
    %v1773 = vpop.f32.mrf.mxu0
    %v1774 = vpop.f32.mrf.mxu0
    %v1775 = vadd.f32 0.0, %v1774
    %v1776 = vpop.f32.mrf.mxu0
    %1777 = vmatprep.mubr.bf16.mxu0 0
    %1778 = vmatmul.mubr.bf16.gmra.mxu0 %v1545
    %v1779 = vpop.f32.mrf.mxu0
    %v1780 = vadd.f32 0.0, %v1779
    %v1781 = vpop.f32.mrf.mxu0
    %v1782 = vpop.f32.mrf.mxu0
    %v1783 = vadd.f32 0.0, %v1782
    %v1784 = vpop.f32.mrf.mxu0
    %1785 = vmatprep.mubr.bf16.mxu0 0
    %1786 = vmatmul.mubr.bf16.gmra.mxu0 %v1548
    %v1787 = vpop.f32.mrf.mxu0
    %v1788 = vadd.f32 0.0, %v1787
    %v1789 = vpop.f32.mrf.mxu0
    %v1790 = vpop.f32.mrf.mxu0
    %v1791 = vadd.f32 0.0, %v1790
    %v1792 = vpop.f32.mrf.mxu0
    %1793 = vmatprep.mubr.bf16.mxu0 0
    %1794 = vmatmul.mubr.bf16.gmra.mxu0 %v1551
    %v1795 = vpop.f32.mrf.mxu0
    %v1796 = vadd.f32 0.0, %v1795
    %v1797 = vpop.f32.mrf.mxu0
    %v1798 = vpop.f32.mrf.mxu0
    %v1799 = vadd.f32 0.0, %v1798
    %v1800 = vpop.f32.mrf.mxu0
    %1801 = vmatprep.mubr.bf16.mxu0 0
    %1802 = vmatmul.mubr.bf16.gmra.mxu0 %v1554
    %v1803 = vpop.f32.mrf.mxu0
    %v1804 = vadd.f32 0.0, %v1803
    %v1805 = vpop.f32.mrf.mxu0
    %v1806 = vpop.f32.mrf.mxu0
    %v1807 = vadd.f32 0.0, %v1806
    %v1808 = vpop.f32.mrf.mxu0
    %1809 = vmatprep.mubr.bf16.mxu0 0
    %1810 = vmatmul.mubr.bf16.gmra.mxu0 %v1557
    %v1811 = vpop.f32.mrf.mxu0
    %v1812 = vadd.f32 0.0, %v1811
    %v1813 = vpop.f32.mrf.mxu0
    %v1814 = vpop.f32.mrf.mxu0
    %v1815 = vadd.f32 0.0, %v1814
    %v1816 = vpop.f32.mrf.mxu0
    %1817 = vmatprep.mubr.bf16.mxu0 0
    %1818 = vmatmul.mubr.bf16.gmra.mxu0 %v1560
    %v1819 = vpop.f32.mrf.mxu0
    %v1820 = vadd.f32 0.0, %v1819
    %v1821 = vpop.f32.mrf.mxu0
    %v1822 = vpop.f32.mrf.mxu0
    %v1823 = vadd.f32 0.0, %v1822
    %v1824 = vpop.f32.mrf.mxu0
    %1825 = vmatprep.mubr.bf16.mxu0 0
    %1826 = vmatmul.mubr.bf16.gmra.mxu0 %v1563
    %v1827 = vpop.f32.mrf.mxu0
    %v1828 = vadd.f32 0.0, %v1827
    %v1829 = vpop.f32.mrf.mxu0
    %v1830 = vpop.f32.mrf.mxu0
    %v1831 = vadd.f32 0.0, %v1830
    %v1832 = vpop.f32.mrf.mxu0
    %1833 = vmatprep.mubr.bf16.mxu0 0
    %1834 = vmatmul.mubr.bf16.gmra.mxu0 %v1566
    %v1835 = vpop.f32.mrf.mxu0
    %v1836 = vadd.f32 0.0, %v1835
    %v1837 = vpop.f32.mrf.mxu0
    %v1838 = vpop.f32.mrf.mxu0
    %v1839 = vadd.f32 0.0, %v1838
    %v1840 = vpop.f32.mrf.mxu0
    %1841 = vmatprep.mubr.bf16.mxu0 0
    %1842 = vmatmul.mubr.bf16.gmra.mxu0 %v1569
    %v1843 = vpop.f32.mrf.mxu0
    %v1844 = vadd.f32 0.0, %v1843
    %v1845 = vpop.f32.mrf.mxu0
    %v1846 = vpop.f32.mrf.mxu0
    %v1847 = vadd.f32 0.0, %v1846
    %v1848 = vpop.f32.mrf.mxu0
    %1849 = vmatprep.mubr.bf16.mxu0 0
    %1850 = vmatmul.mubr.bf16.gmra.mxu0 %v1572
    %v1851 = vpop.f32.mrf.mxu0
    %v1852 = vadd.f32 0.0, %v1851
    %v1853 = vpop.f32.mrf.mxu0
    %v1854 = vpop.f32.mrf.mxu0
    %v1855 = vadd.f32 0.0, %v1854
    %v1856 = vpop.f32.mrf.mxu0
    %1857 = vmatprep.mubr.bf16.mxu0 0
    %1858 = vmatmul.mubr.bf16.gmra.mxu0 %v1575
    %v1859 = vpop.f32.mrf.mxu0
    %v1860 = vadd.f32 0.0, %v1859
    %v1861 = vpop.f32.mrf.mxu0
    %v1862 = vpop.f32.mrf.mxu0
    %v1863 = vadd.f32 0.0, %v1862
    %v1864 = vpop.f32.mrf.mxu0
    %1865 = vdwg.mxu0
    %v1870 = vunpack.c.l.b16 %v1220
    %v1871 = vunpack.c.l.b16 %v1221
    %v1872 = vunpack.c.l.b16 %v1222
    %v1873 = vunpack.c.l.b16 %v1223
    %v1874 = vpack.c.b16 %v1871, %v1870
    %v1875 = vpack.c.b16 %v1873, %v1872
    %vm1878 = vcmask 261120
    %v1880 = vsel %vm1878, %v1188, 0
    %v1883 = vsel %vm1878, %v1189, 0
    %v1886 = vsel %vm1878, %v1190, 0
    %v1889 = vsel %vm1878, %v1191, 0
    %v1892 = vsel %vm1878, %v1192, 0
    %v1895 = vsel %vm1878, %v1193, 0
    %v1898 = vsel %vm1878, %v1194, 0
    %v1901 = vsel %vm1878, %v1195, 0
    %v1904 = vsel %vm1878, %v1196, 0
    %v1907 = vsel %vm1878, %v1197, 0
    %v1910 = vsel %vm1878, %v1198, 0
    %v1913 = vsel %vm1878, %v1199, 0
    %v1916 = vsel %vm1878, %v1200, 0
    %v1919 = vsel %vm1878, %v1201, 0
    %v1922 = vsel %vm1878, %v1202, 0
    %v1925 = vsel %vm1878, %v1203, 0
    %v1928 = vsel %vm1878, %v1204, 0
    %v1931 = vsel %vm1878, %v1205, 0
    %v1934 = vsel %vm1878, %v1206, 0
    %v1937 = vsel %vm1878, %v1207, 0
    %v1940 = vsel %vm1878, %v1208, 0
    %v1943 = vsel %vm1878, %v1209, 0
    %v1946 = vsel %vm1878, %v1210, 0
    %v1949 = vsel %vm1878, %v1211, 0
    %v1952 = vsel %vm1878, %v1212, 0
    %v1955 = vsel %vm1878, %v1213, 0
    %v1958 = vsel %vm1878, %v1214, 0
    %v1961 = vsel %vm1878, %v1215, 0
    %v1964 = vsel %vm1878, %v1216, 0
    %v1967 = vsel %vm1878, %v1217, 0
    %v1970 = vsel %vm1878, %v1218, 0
    %v1973 = vsel %vm1878, %v1219, 0
    %1975 = vmatprep.subr.bf16.mxu0 0
    %1976 = vmatpush1.bf16.msra.mxu0 0
    %1977 = vmatprep.subr.bf16.mxu0 0
    %1978 = vmatpush1.bf16.msra.mxu0 0
    %1979 = vmatprep.subr.bf16.mxu0 0
    %1980 = vmatpush1.bf16.msra.mxu0 0
    %1981 = vmatprep.subr.bf16.mxu0 0
    %1982 = vmatpush1.bf16.msra.mxu0 0
    %1983 = vmatprep.subr.bf16.mxu0 0
    %1984 = vmatpush1.bf16.msra.mxu0 0
    %1985 = vmatprep.subr.bf16.mxu0 0
    %1986 = vmatpush1.bf16.msra.mxu0 0
    %1987 = vmatprep.subr.bf16.mxu0 0
    %1988 = vmatpush1.bf16.msra.mxu0 %v1875
    %1989 = vmatprep.subr.bf16.mxu0 0
    %1990 = vmatpush1.bf16.msra.mxu0 %v1874
    %1991 = vmatprep.subr.bf16.mxu0 0
    %1992 = vmatpush2.bf16.msra.mxu0 0
    %1993 = vmatprep.subr.bf16.mxu0 0
    %1994 = vmatpush2.bf16.msra.mxu0 0
    %1995 = vmatprep.subr.bf16.mxu0 0
    %1996 = vmatpush2.bf16.msra.mxu0 0
    %1997 = vmatprep.subr.bf16.mxu0 0
    %1998 = vmatpush2.bf16.msra.mxu0 0
    %1999 = vmatprep.subr.bf16.mxu0 0
    %2000 = vmatpush2.bf16.msra.mxu0 0
    %2001 = vmatprep.subr.bf16.mxu0 0
    %2002 = vmatpush2.bf16.msra.mxu0 0
    %2003 = vmatprep.subr.bf16.mxu0 0
    %2004 = vmatpush2.bf16.msra.mxu0 0
    %2005 = vmatprep.subr.bf16.mxu0 0
    %2006 = vmatpush2.bf16.msra.mxu0 0
    %2007 = vmatprep.mubr.bf16.mxu0 0
    %2008 = vmatmul.mubr.bf16.gmra.mxu0 %v1880
    %v2009 = vpop.f32.mrf.mxu0
    %v2010 = vadd.f32 %v1612, %v2009
    %v2011 = vpop.f32.mrf.mxu0
    %v2012 = vpop.f32.mrf.mxu0
    %v2013 = vadd.f32 %v1615, %v2012
    %v2014 = vpop.f32.mrf.mxu0
    %2015 = vmatprep.mubr.bf16.mxu0 0
    %2016 = vmatmul.mubr.bf16.gmra.mxu0 %v1883
    %v2017 = vpop.f32.mrf.mxu0
    %v2018 = vadd.f32 %v1620, %v2017
    %v2019 = vpop.f32.mrf.mxu0
    %v2020 = vpop.f32.mrf.mxu0
    %v2021 = vadd.f32 %v1623, %v2020
    %v2022 = vpop.f32.mrf.mxu0
    %2023 = vmatprep.mubr.bf16.mxu0 0
    %2024 = vmatmul.mubr.bf16.gmra.mxu0 %v1886
    %v2025 = vpop.f32.mrf.mxu0
    %v2026 = vadd.f32 %v1628, %v2025
    %v2027 = vpop.f32.mrf.mxu0
    %v2028 = vpop.f32.mrf.mxu0
    %v2029 = vadd.f32 %v1631, %v2028
    %v2030 = vpop.f32.mrf.mxu0
    %2031 = vmatprep.mubr.bf16.mxu0 0
    %2032 = vmatmul.mubr.bf16.gmra.mxu0 %v1889
    %v2033 = vpop.f32.mrf.mxu0
    %v2034 = vadd.f32 %v1636, %v2033
    %v2035 = vpop.f32.mrf.mxu0
    %v2036 = vpop.f32.mrf.mxu0
    %v2037 = vadd.f32 %v1639, %v2036
    %v2038 = vpop.f32.mrf.mxu0
    %2039 = vmatprep.mubr.bf16.mxu0 0
    %2040 = vmatmul.mubr.bf16.gmra.mxu0 %v1892
    %v2041 = vpop.f32.mrf.mxu0
    %v2042 = vadd.f32 %v1644, %v2041
    %v2043 = vpop.f32.mrf.mxu0
    %v2044 = vpop.f32.mrf.mxu0
    %v2045 = vadd.f32 %v1647, %v2044
    %v2046 = vpop.f32.mrf.mxu0
    %2047 = vmatprep.mubr.bf16.mxu0 0
    %2048 = vmatmul.mubr.bf16.gmra.mxu0 %v1895
    %v2049 = vpop.f32.mrf.mxu0
    %v2050 = vadd.f32 %v1652, %v2049
    %v2051 = vpop.f32.mrf.mxu0
    %v2052 = vpop.f32.mrf.mxu0
    %v2053 = vadd.f32 %v1655, %v2052
    %v2054 = vpop.f32.mrf.mxu0
    %2055 = vmatprep.mubr.bf16.mxu0 0
    %2056 = vmatmul.mubr.bf16.gmra.mxu0 %v1898
    %v2057 = vpop.f32.mrf.mxu0
    %v2058 = vadd.f32 %v1660, %v2057
    %v2059 = vpop.f32.mrf.mxu0
    %v2060 = vpop.f32.mrf.mxu0
    %v2061 = vadd.f32 %v1663, %v2060
    %v2062 = vpop.f32.mrf.mxu0
    %2063 = vmatprep.mubr.bf16.mxu0 0
    %2064 = vmatmul.mubr.bf16.gmra.mxu0 %v1901
    %v2065 = vpop.f32.mrf.mxu0
    %v2066 = vadd.f32 %v1668, %v2065
    %v2067 = vpop.f32.mrf.mxu0
    %v2068 = vpop.f32.mrf.mxu0
    %v2069 = vadd.f32 %v1671, %v2068
    %v2070 = vpop.f32.mrf.mxu0
    %2071 = vmatprep.mubr.bf16.mxu0 0
    %2072 = vmatmul.mubr.bf16.gmra.mxu0 %v1904
    %v2073 = vpop.f32.mrf.mxu0
    %v2074 = vadd.f32 %v1676, %v2073
    %v2075 = vpop.f32.mrf.mxu0
    %v2076 = vpop.f32.mrf.mxu0
    %v2077 = vadd.f32 %v1679, %v2076
    %v2078 = vpop.f32.mrf.mxu0
    %2079 = vmatprep.mubr.bf16.mxu0 0
    %2080 = vmatmul.mubr.bf16.gmra.mxu0 %v1907
    %v2081 = vpop.f32.mrf.mxu0
    %v2082 = vadd.f32 %v1684, %v2081
    %v2083 = vpop.f32.mrf.mxu0
    %v2084 = vpop.f32.mrf.mxu0
    %v2085 = vadd.f32 %v1687, %v2084
    %v2086 = vpop.f32.mrf.mxu0
    %2087 = vmatprep.mubr.bf16.mxu0 0
    %2088 = vmatmul.mubr.bf16.gmra.mxu0 %v1910
    %v2089 = vpop.f32.mrf.mxu0
    %v2090 = vadd.f32 %v1692, %v2089
    %v2091 = vpop.f32.mrf.mxu0
    %v2092 = vpop.f32.mrf.mxu0
    %v2093 = vadd.f32 %v1695, %v2092
    %v2094 = vpop.f32.mrf.mxu0
    %2095 = vmatprep.mubr.bf16.mxu0 0
    %2096 = vmatmul.mubr.bf16.gmra.mxu0 %v1913
    %v2097 = vpop.f32.mrf.mxu0
    %v2098 = vadd.f32 %v1700, %v2097
    %v2099 = vpop.f32.mrf.mxu0
    %v2100 = vpop.f32.mrf.mxu0
    %v2101 = vadd.f32 %v1703, %v2100
    %v2102 = vpop.f32.mrf.mxu0
    %2103 = vmatprep.mubr.bf16.mxu0 0
    %2104 = vmatmul.mubr.bf16.gmra.mxu0 %v1916
    %v2105 = vpop.f32.mrf.mxu0
    %v2106 = vadd.f32 %v1708, %v2105
    %v2107 = vpop.f32.mrf.mxu0
    %v2108 = vpop.f32.mrf.mxu0
    %v2109 = vadd.f32 %v1711, %v2108
    %v2110 = vpop.f32.mrf.mxu0
    %2111 = vmatprep.mubr.bf16.mxu0 0
    %2112 = vmatmul.mubr.bf16.gmra.mxu0 %v1919
    %v2113 = vpop.f32.mrf.mxu0
    %v2114 = vadd.f32 %v1716, %v2113
    %v2115 = vpop.f32.mrf.mxu0
    %v2116 = vpop.f32.mrf.mxu0
    %v2117 = vadd.f32 %v1719, %v2116
    %v2118 = vpop.f32.mrf.mxu0
    %2119 = vmatprep.mubr.bf16.mxu0 0
    %2120 = vmatmul.mubr.bf16.gmra.mxu0 %v1922
    %v2121 = vpop.f32.mrf.mxu0
    %v2122 = vadd.f32 %v1724, %v2121
    %v2123 = vpop.f32.mrf.mxu0
    %v2124 = vpop.f32.mrf.mxu0
    %v2125 = vadd.f32 %v1727, %v2124
    %v2126 = vpop.f32.mrf.mxu0
    %2127 = vmatprep.mubr.bf16.mxu0 0
    %2128 = vmatmul.mubr.bf16.gmra.mxu0 %v1925
    %v2129 = vpop.f32.mrf.mxu0
    %v2130 = vadd.f32 %v1732, %v2129
    %v2131 = vpop.f32.mrf.mxu0
    %v2132 = vpop.f32.mrf.mxu0
    %v2133 = vadd.f32 %v1735, %v2132
    %v2134 = vpop.f32.mrf.mxu0
    %2135 = vmatprep.mubr.bf16.mxu0 0
    %2136 = vmatmul.mubr.bf16.gmra.mxu0 %v1928
    %v2137 = vpop.f32.mrf.mxu0
    %v2138 = vadd.f32 %v1740, %v2137
    %v2139 = vpop.f32.mrf.mxu0
    %v2140 = vpop.f32.mrf.mxu0
    %v2141 = vadd.f32 %v1743, %v2140
    %v2142 = vpop.f32.mrf.mxu0
    %2143 = vmatprep.mubr.bf16.mxu0 0
    %2144 = vmatmul.mubr.bf16.gmra.mxu0 %v1931
    %v2145 = vpop.f32.mrf.mxu0
    %v2146 = vadd.f32 %v1748, %v2145
    %v2147 = vpop.f32.mrf.mxu0
    %v2148 = vpop.f32.mrf.mxu0
    %v2149 = vadd.f32 %v1751, %v2148
    %v2150 = vpop.f32.mrf.mxu0
    %2151 = vmatprep.mubr.bf16.mxu0 0
    %2152 = vmatmul.mubr.bf16.gmra.mxu0 %v1934
    %v2153 = vpop.f32.mrf.mxu0
    %v2154 = vadd.f32 %v1756, %v2153
    %v2155 = vpop.f32.mrf.mxu0
    %v2156 = vpop.f32.mrf.mxu0
    %v2157 = vadd.f32 %v1759, %v2156
    %v2158 = vpop.f32.mrf.mxu0
    %2159 = vmatprep.mubr.bf16.mxu0 0
    %2160 = vmatmul.mubr.bf16.gmra.mxu0 %v1937
    %v2161 = vpop.f32.mrf.mxu0
    %v2162 = vadd.f32 %v1764, %v2161
    %v2163 = vpop.f32.mrf.mxu0
    %v2164 = vpop.f32.mrf.mxu0
    %v2165 = vadd.f32 %v1767, %v2164
    %v2166 = vpop.f32.mrf.mxu0
    %2167 = vmatprep.mubr.bf16.mxu0 0
    %2168 = vmatmul.mubr.bf16.gmra.mxu0 %v1940
    %v2169 = vpop.f32.mrf.mxu0
    %v2170 = vadd.f32 %v1772, %v2169
    %v2171 = vpop.f32.mrf.mxu0
    %v2172 = vpop.f32.mrf.mxu0
    %v2173 = vadd.f32 %v1775, %v2172
    %v2174 = vpop.f32.mrf.mxu0
    %2175 = vmatprep.mubr.bf16.mxu0 0
    %2176 = vmatmul.mubr.bf16.gmra.mxu0 %v1943
    %v2177 = vpop.f32.mrf.mxu0
    %v2178 = vadd.f32 %v1780, %v2177
    %v2179 = vpop.f32.mrf.mxu0
    %v2180 = vpop.f32.mrf.mxu0
    %v2181 = vadd.f32 %v1783, %v2180
    %v2182 = vpop.f32.mrf.mxu0
    %2183 = vmatprep.mubr.bf16.mxu0 0
    %2184 = vmatmul.mubr.bf16.gmra.mxu0 %v1946
    %v2185 = vpop.f32.mrf.mxu0
    %v2186 = vadd.f32 %v1788, %v2185
    %v2187 = vpop.f32.mrf.mxu0
    %v2188 = vpop.f32.mrf.mxu0
    %v2189 = vadd.f32 %v1791, %v2188
    %v2190 = vpop.f32.mrf.mxu0
    %2191 = vmatprep.mubr.bf16.mxu0 0
    %2192 = vmatmul.mubr.bf16.gmra.mxu0 %v1949
    %v2193 = vpop.f32.mrf.mxu0
    %v2194 = vadd.f32 %v1796, %v2193
    %v2195 = vpop.f32.mrf.mxu0
    %v2196 = vpop.f32.mrf.mxu0
    %v2197 = vadd.f32 %v1799, %v2196
    %v2198 = vpop.f32.mrf.mxu0
    %2199 = vmatprep.mubr.bf16.mxu0 0
    %2200 = vmatmul.mubr.bf16.gmra.mxu0 %v1952
    %v2201 = vpop.f32.mrf.mxu0
    %v2202 = vadd.f32 %v1804, %v2201
    %v2203 = vpop.f32.mrf.mxu0
    %v2204 = vpop.f32.mrf.mxu0
    %v2205 = vadd.f32 %v1807, %v2204
    %v2206 = vpop.f32.mrf.mxu0
    %2207 = vmatprep.mubr.bf16.mxu0 0
    %2208 = vmatmul.mubr.bf16.gmra.mxu0 %v1955
    %v2209 = vpop.f32.mrf.mxu0
    %v2210 = vadd.f32 %v1812, %v2209
    %v2211 = vpop.f32.mrf.mxu0
    %v2212 = vpop.f32.mrf.mxu0
    %v2213 = vadd.f32 %v1815, %v2212
    %v2214 = vpop.f32.mrf.mxu0
    %2215 = vmatprep.mubr.bf16.mxu0 0
    %2216 = vmatmul.mubr.bf16.gmra.mxu0 %v1958
    %v2217 = vpop.f32.mrf.mxu0
    %v2218 = vadd.f32 %v1820, %v2217
    %v2219 = vpop.f32.mrf.mxu0
    %v2220 = vpop.f32.mrf.mxu0
    %v2221 = vadd.f32 %v1823, %v2220
    %v2222 = vpop.f32.mrf.mxu0
    %2223 = vmatprep.mubr.bf16.mxu0 0
    %2224 = vmatmul.mubr.bf16.gmra.mxu0 %v1961
    %v2225 = vpop.f32.mrf.mxu0
    %v2226 = vadd.f32 %v1828, %v2225
    %v2227 = vpop.f32.mrf.mxu0
    %v2228 = vpop.f32.mrf.mxu0
    %v2229 = vadd.f32 %v1831, %v2228
    %v2230 = vpop.f32.mrf.mxu0
    %2231 = vmatprep.mubr.bf16.mxu0 0
    %2232 = vmatmul.mubr.bf16.gmra.mxu0 %v1964
    %v2233 = vpop.f32.mrf.mxu0
    %v2234 = vadd.f32 %v1836, %v2233
    %v2235 = vpop.f32.mrf.mxu0
    %v2236 = vpop.f32.mrf.mxu0
    %v2237 = vadd.f32 %v1839, %v2236
    %v2238 = vpop.f32.mrf.mxu0
    %2239 = vmatprep.mubr.bf16.mxu0 0
    %2240 = vmatmul.mubr.bf16.gmra.mxu0 %v1967
    %v2241 = vpop.f32.mrf.mxu0
    %v2242 = vadd.f32 %v1844, %v2241
    %v2243 = vpop.f32.mrf.mxu0
    %v2244 = vpop.f32.mrf.mxu0
    %v2245 = vadd.f32 %v1847, %v2244
    %v2246 = vpop.f32.mrf.mxu0
    %2247 = vmatprep.mubr.bf16.mxu0 0
    %2248 = vmatmul.mubr.bf16.gmra.mxu0 %v1970
    %v2249 = vpop.f32.mrf.mxu0
    %v2250 = vadd.f32 %v1852, %v2249
    %v2251 = vpop.f32.mrf.mxu0
    %v2252 = vpop.f32.mrf.mxu0
    %v2253 = vadd.f32 %v1855, %v2252
    %v2254 = vpop.f32.mrf.mxu0
    %2255 = vmatprep.mubr.bf16.mxu0 0
    %2256 = vmatmul.mubr.bf16.gmra.mxu0 %v1973
    %v2257 = vpop.f32.mrf.mxu0
    %v2258 = vadd.f32 %v1860, %v2257
    %v2259 = vpop.f32.mrf.mxu0
    %v2260 = vpop.f32.mrf.mxu0
    %v2261 = vadd.f32 %v1863, %v2260
    %v2262 = vpop.f32.mrf.mxu0
    %2263 = vdwg.mxu0
    %v2264 = vlaneseq
    %v2265 = vshrl.u32 %v2264, 7
    %v2266 = vsub.s32 0, %v2265
    %v2267 = vrot.slane %v1185, %v2266
    %v2268 = vadd.f32 %v2010, %v2267
    %v2269 = vadd.f32 %v2013, %v2267
    %v2270 = vadd.f32 %v2018, %v2267
    %v2271 = vadd.f32 %v2021, %v2267
    %v2272 = vadd.f32 %v2026, %v2267
    %v2273 = vadd.f32 %v2029, %v2267
    %v2274 = vadd.f32 %v2034, %v2267
    %v2275 = vadd.f32 %v2037, %v2267
    %v2276 = vadd.f32 %v2042, %v2267
    %v2277 = vadd.f32 %v2045, %v2267
    %v2278 = vadd.f32 %v2050, %v2267
    %v2279 = vadd.f32 %v2053, %v2267
    %v2280 = vadd.f32 %v2058, %v2267
    %v2281 = vadd.f32 %v2061, %v2267
    %v2282 = vadd.f32 %v2066, %v2267
    %v2283 = vadd.f32 %v2069, %v2267
    %v2284 = vadd.f32 %v2074, %v2267
    %v2285 = vadd.f32 %v2077, %v2267
    %v2286 = vadd.f32 %v2082, %v2267
    %v2287 = vadd.f32 %v2085, %v2267
    %v2288 = vadd.f32 %v2090, %v2267
    %v2289 = vadd.f32 %v2093, %v2267
    %v2290 = vadd.f32 %v2098, %v2267
    %v2291 = vadd.f32 %v2101, %v2267
    %v2292 = vadd.f32 %v2106, %v2267
    %v2293 = vadd.f32 %v2109, %v2267
    %v2294 = vadd.f32 %v2114, %v2267
    %v2295 = vadd.f32 %v2117, %v2267
    %v2296 = vadd.f32 %v2122, %v2267
    %v2297 = vadd.f32 %v2125, %v2267
    %v2298 = vadd.f32 %v2130, %v2267
    %v2299 = vadd.f32 %v2133, %v2267
    %v2300 = vadd.f32 %v2138, %v2267
    %v2301 = vadd.f32 %v2141, %v2267
    %v2302 = vadd.f32 %v2146, %v2267
    %v2303 = vadd.f32 %v2149, %v2267
    %v2304 = vadd.f32 %v2154, %v2267
    %v2305 = vadd.f32 %v2157, %v2267
    %v2306 = vadd.f32 %v2162, %v2267
    %v2307 = vadd.f32 %v2165, %v2267
    %v2308 = vadd.f32 %v2170, %v2267
    %v2309 = vadd.f32 %v2173, %v2267
    %v2310 = vadd.f32 %v2178, %v2267
    %v2311 = vadd.f32 %v2181, %v2267
    %v2312 = vadd.f32 %v2186, %v2267
    %v2313 = vadd.f32 %v2189, %v2267
    %v2314 = vadd.f32 %v2194, %v2267
    %v2315 = vadd.f32 %v2197, %v2267
    %v2316 = vadd.f32 %v2202, %v2267
    %v2317 = vadd.f32 %v2205, %v2267
    %v2318 = vadd.f32 %v2210, %v2267
    %v2319 = vadd.f32 %v2213, %v2267
    %v2320 = vadd.f32 %v2218, %v2267
    %v2321 = vadd.f32 %v2221, %v2267
    %v2322 = vadd.f32 %v2226, %v2267
    %v2323 = vadd.f32 %v2229, %v2267
    %v2324 = vadd.f32 %v2234, %v2267
    %v2325 = vadd.f32 %v2237, %v2267
    %v2326 = vadd.f32 %v2242, %v2267
    %v2327 = vadd.f32 %v2245, %v2267
    %v2328 = vadd.f32 %v2250, %v2267
    %v2329 = vadd.f32 %v2253, %v2267
    %v2330 = vadd.f32 %v2258, %v2267
    %v2331 = vadd.f32 %v2261, %v2267
    %v2332 = vsub.f32 0.0, %v2268
    %v2333 = vsub.f32 0.0, %v2269
    %v2334 = vsub.f32 0.0, %v2270
    %v2335 = vsub.f32 0.0, %v2271
    %v2336 = vsub.f32 0.0, %v2272
    %v2337 = vsub.f32 0.0, %v2273
    %v2338 = vsub.f32 0.0, %v2274
    %v2339 = vsub.f32 0.0, %v2275
    %v2340 = vsub.f32 0.0, %v2276
    %v2341 = vsub.f32 0.0, %v2277
    %v2342 = vsub.f32 0.0, %v2278
    %v2343 = vsub.f32 0.0, %v2279
    %v2344 = vsub.f32 0.0, %v2280
    %v2345 = vsub.f32 0.0, %v2281
    %v2346 = vsub.f32 0.0, %v2282
    %v2347 = vsub.f32 0.0, %v2283
    %v2348 = vsub.f32 0.0, %v2284
    %v2349 = vsub.f32 0.0, %v2285
    %v2350 = vsub.f32 0.0, %v2286
    %v2351 = vsub.f32 0.0, %v2287
    %v2352 = vsub.f32 0.0, %v2288
    %v2353 = vsub.f32 0.0, %v2289
    %v2354 = vsub.f32 0.0, %v2290
    %v2355 = vsub.f32 0.0, %v2291
    %v2356 = vsub.f32 0.0, %v2292
    %v2357 = vsub.f32 0.0, %v2293
    %v2358 = vsub.f32 0.0, %v2294
    %v2359 = vsub.f32 0.0, %v2295
    %v2360 = vsub.f32 0.0, %v2296
    %v2361 = vsub.f32 0.0, %v2297
    %v2362 = vsub.f32 0.0, %v2298
    %v2363 = vsub.f32 0.0, %v2299
    %v2364 = vsub.f32 0.0, %v2300
    %v2365 = vsub.f32 0.0, %v2301
    %v2366 = vsub.f32 0.0, %v2302
    %v2367 = vsub.f32 0.0, %v2303
    %v2368 = vsub.f32 0.0, %v2304
    %v2369 = vsub.f32 0.0, %v2305
    %v2370 = vsub.f32 0.0, %v2306
    %v2371 = vsub.f32 0.0, %v2307
    %v2372 = vsub.f32 0.0, %v2308
    %v2373 = vsub.f32 0.0, %v2309
    %v2374 = vsub.f32 0.0, %v2310
    %v2375 = vsub.f32 0.0, %v2311
    %v2376 = vsub.f32 0.0, %v2312
    %v2377 = vsub.f32 0.0, %v2313
    %v2378 = vsub.f32 0.0, %v2314
    %v2379 = vsub.f32 0.0, %v2315
    %v2380 = vsub.f32 0.0, %v2316
    %v2381 = vsub.f32 0.0, %v2317
    %v2382 = vsub.f32 0.0, %v2318
    %v2383 = vsub.f32 0.0, %v2319
    %v2384 = vsub.f32 0.0, %v2320
    %v2385 = vsub.f32 0.0, %v2321
    %v2386 = vsub.f32 0.0, %v2322
    %v2387 = vsub.f32 0.0, %v2323
    %v2388 = vsub.f32 0.0, %v2324
    %v2389 = vsub.f32 0.0, %v2325
    %v2390 = vsub.f32 0.0, %v2326
    %v2391 = vsub.f32 0.0, %v2327
    %v2392 = vsub.f32 0.0, %v2328
    %v2393 = vsub.f32 0.0, %v2329
    %v2394 = vsub.f32 0.0, %v2330
    %v2395 = vsub.f32 0.0, %v2331
    %v2396 = vmul.f32 %v2332, 1.442695
    %v2397 = vpow.pop %v2396
    %v2398 = vmul.f32 %v2333, 1.442695
    %v2399 = vpow.pop %v2398
    %v2400 = vmul.f32 %v2334, 1.442695
    %v2401 = vpow.pop %v2400
    %v2402 = vmul.f32 %v2335, 1.442695
    %v2403 = vpow.pop %v2402
    %v2404 = vmul.f32 %v2336, 1.442695
    %v2405 = vpow.pop %v2404
    %v2406 = vmul.f32 %v2337, 1.442695
    %v2407 = vpow.pop %v2406
    %v2408 = vmul.f32 %v2338, 1.442695
    %v2409 = vpow.pop %v2408
    %v2410 = vmul.f32 %v2339, 1.442695
    %v2411 = vpow.pop %v2410
    %v2412 = vmul.f32 %v2340, 1.442695
    %v2413 = vpow.pop %v2412
    %v2414 = vmul.f32 %v2341, 1.442695
    %v2415 = vpow.pop %v2414
    %v2416 = vmul.f32 %v2342, 1.442695
    %v2417 = vpow.pop %v2416
    %v2418 = vmul.f32 %v2343, 1.442695
    %v2419 = vpow.pop %v2418
    %v2420 = vmul.f32 %v2344, 1.442695
    %v2421 = vpow.pop %v2420
    %v2422 = vmul.f32 %v2345, 1.442695
    %v2423 = vpow.pop %v2422
    %v2424 = vmul.f32 %v2346, 1.442695
    %v2425 = vpow.pop %v2424
    %v2426 = vmul.f32 %v2347, 1.442695
    %v2427 = vpow.pop %v2426
    %v2428 = vmul.f32 %v2348, 1.442695
    %v2429 = vpow.pop %v2428
    %v2430 = vmul.f32 %v2349, 1.442695
    %v2431 = vpow.pop %v2430
    %v2432 = vmul.f32 %v2350, 1.442695
    %v2433 = vpow.pop %v2432
    %v2434 = vmul.f32 %v2351, 1.442695
    %v2435 = vpow.pop %v2434
    %v2436 = vmul.f32 %v2352, 1.442695
    %v2437 = vpow.pop %v2436
    %v2438 = vmul.f32 %v2353, 1.442695
    %v2439 = vpow.pop %v2438
    %v2440 = vmul.f32 %v2354, 1.442695
    %v2441 = vpow.pop %v2440
    %v2442 = vmul.f32 %v2355, 1.442695
    %v2443 = vpow.pop %v2442
    %v2444 = vmul.f32 %v2356, 1.442695
    %v2445 = vpow.pop %v2444
    %v2446 = vmul.f32 %v2357, 1.442695
    %v2447 = vpow.pop %v2446
    %v2448 = vmul.f32 %v2358, 1.442695
    %v2449 = vpow.pop %v2448
    %v2450 = vmul.f32 %v2359, 1.442695
    %v2451 = vpow.pop %v2450
    %v2452 = vmul.f32 %v2360, 1.442695
    %v2453 = vpow.pop %v2452
    %v2454 = vmul.f32 %v2361, 1.442695
    %v2455 = vpow.pop %v2454
    %v2456 = vmul.f32 %v2362, 1.442695
    %v2457 = vpow.pop %v2456
    %v2458 = vmul.f32 %v2363, 1.442695
    %v2459 = vpow.pop %v2458
    %v2460 = vmul.f32 %v2364, 1.442695
    %v2461 = vpow.pop %v2460
    %v2462 = vmul.f32 %v2365, 1.442695
    %v2463 = vpow.pop %v2462
    %v2464 = vmul.f32 %v2366, 1.442695
    %v2465 = vpow.pop %v2464
    %v2466 = vmul.f32 %v2367, 1.442695
    %v2467 = vpow.pop %v2466
    %v2468 = vmul.f32 %v2368, 1.442695
    %v2469 = vpow.pop %v2468
    %v2470 = vmul.f32 %v2369, 1.442695
    %v2471 = vpow.pop %v2470
    %v2472 = vmul.f32 %v2370, 1.442695
    %v2473 = vpow.pop %v2472
    %v2474 = vmul.f32 %v2371, 1.442695
    %v2475 = vpow.pop %v2474
    %v2476 = vmul.f32 %v2372, 1.442695
    %v2477 = vpow.pop %v2476
    %v2478 = vmul.f32 %v2373, 1.442695
    %v2479 = vpow.pop %v2478
    %v2480 = vmul.f32 %v2374, 1.442695
    %v2481 = vpow.pop %v2480
    %v2482 = vmul.f32 %v2375, 1.442695
    %v2483 = vpow.pop %v2482
    %v2484 = vmul.f32 %v2376, 1.442695
    %v2485 = vpow.pop %v2484
    %v2486 = vmul.f32 %v2377, 1.442695
    %v2487 = vpow.pop %v2486
    %v2488 = vmul.f32 %v2378, 1.442695
    %v2489 = vpow.pop %v2488
    %v2490 = vmul.f32 %v2379, 1.442695
    %v2491 = vpow.pop %v2490
    %v2492 = vmul.f32 %v2380, 1.442695
    %v2493 = vpow.pop %v2492
    %v2494 = vmul.f32 %v2381, 1.442695
    %v2495 = vpow.pop %v2494
    %v2496 = vmul.f32 %v2382, 1.442695
    %v2497 = vpow.pop %v2496
    %v2498 = vmul.f32 %v2383, 1.442695
    %v2499 = vpow.pop %v2498
    %v2500 = vmul.f32 %v2384, 1.442695
    %v2501 = vpow.pop %v2500
    %v2502 = vmul.f32 %v2385, 1.442695
    %v2503 = vpow.pop %v2502
    %v2504 = vmul.f32 %v2386, 1.442695
    %v2505 = vpow.pop %v2504
    %v2506 = vmul.f32 %v2387, 1.442695
    %v2507 = vpow.pop %v2506
    %v2508 = vmul.f32 %v2388, 1.442695
    %v2509 = vpow.pop %v2508
    %v2510 = vmul.f32 %v2389, 1.442695
    %v2511 = vpow.pop %v2510
    %v2512 = vmul.f32 %v2390, 1.442695
    %v2513 = vpow.pop %v2512
    %v2514 = vmul.f32 %v2391, 1.442695
    %v2515 = vpow.pop %v2514
    %v2516 = vmul.f32 %v2392, 1.442695
    %v2517 = vpow.pop %v2516
    %v2518 = vmul.f32 %v2393, 1.442695
    %v2519 = vpow.pop %v2518
    %v2520 = vmul.f32 %v2394, 1.442695
    %v2521 = vpow.pop %v2520
    %v2522 = vmul.f32 %v2395, 1.442695
    %v2523 = vpow.pop %v2522
    %v2524 = vadd.f32 %v2397, 1.0
    %v2525 = vadd.f32 %v2399, 1.0
    %v2526 = vadd.f32 %v2401, 1.0
    %v2527 = vadd.f32 %v2403, 1.0
    %v2528 = vadd.f32 %v2405, 1.0
    %v2529 = vadd.f32 %v2407, 1.0
    %v2530 = vadd.f32 %v2409, 1.0
    %v2531 = vadd.f32 %v2411, 1.0
    %v2532 = vadd.f32 %v2413, 1.0
    %v2533 = vadd.f32 %v2415, 1.0
    %v2534 = vadd.f32 %v2417, 1.0
    %v2535 = vadd.f32 %v2419, 1.0
    %v2536 = vadd.f32 %v2421, 1.0
    %v2537 = vadd.f32 %v2423, 1.0
    %v2538 = vadd.f32 %v2425, 1.0
    %v2539 = vadd.f32 %v2427, 1.0
    %v2540 = vadd.f32 %v2429, 1.0
    %v2541 = vadd.f32 %v2431, 1.0
    %v2542 = vadd.f32 %v2433, 1.0
    %v2543 = vadd.f32 %v2435, 1.0
    %v2544 = vadd.f32 %v2437, 1.0
    %v2545 = vadd.f32 %v2439, 1.0
    %v2546 = vadd.f32 %v2441, 1.0
    %v2547 = vadd.f32 %v2443, 1.0
    %v2548 = vadd.f32 %v2445, 1.0
    %v2549 = vadd.f32 %v2447, 1.0
    %v2550 = vadd.f32 %v2449, 1.0
    %v2551 = vadd.f32 %v2451, 1.0
    %v2552 = vadd.f32 %v2453, 1.0
    %v2553 = vadd.f32 %v2455, 1.0
    %v2554 = vadd.f32 %v2457, 1.0
    %v2555 = vadd.f32 %v2459, 1.0
    %v2556 = vadd.f32 %v2461, 1.0
    %v2557 = vadd.f32 %v2463, 1.0
    %v2558 = vadd.f32 %v2465, 1.0
    %v2559 = vadd.f32 %v2467, 1.0
    %v2560 = vadd.f32 %v2469, 1.0
    %v2561 = vadd.f32 %v2471, 1.0
    %v2562 = vadd.f32 %v2473, 1.0
    %v2563 = vadd.f32 %v2475, 1.0
    %v2564 = vadd.f32 %v2477, 1.0
    %v2565 = vadd.f32 %v2479, 1.0
    %v2566 = vadd.f32 %v2481, 1.0
    %v2567 = vadd.f32 %v2483, 1.0
    %v2568 = vadd.f32 %v2485, 1.0
    %v2569 = vadd.f32 %v2487, 1.0
    %v2570 = vadd.f32 %v2489, 1.0
    %v2571 = vadd.f32 %v2491, 1.0
    %v2572 = vadd.f32 %v2493, 1.0
    %v2573 = vadd.f32 %v2495, 1.0
    %v2574 = vadd.f32 %v2497, 1.0
    %v2575 = vadd.f32 %v2499, 1.0
    %v2576 = vadd.f32 %v2501, 1.0
    %v2577 = vadd.f32 %v2503, 1.0
    %v2578 = vadd.f32 %v2505, 1.0
    %v2579 = vadd.f32 %v2507, 1.0
    %v2580 = vadd.f32 %v2509, 1.0
    %v2581 = vadd.f32 %v2511, 1.0
    %v2582 = vadd.f32 %v2513, 1.0
    %v2583 = vadd.f32 %v2515, 1.0
    %v2584 = vadd.f32 %v2517, 1.0
    %v2585 = vadd.f32 %v2519, 1.0
    %v2586 = vadd.f32 %v2521, 1.0
    %v2587 = vadd.f32 %v2523, 1.0
    %v2588 = vrcp.pop %v2524
    %v2589 = vrcp.pop %v2525
    %v2590 = vrcp.pop %v2526
    %v2591 = vrcp.pop %v2527
    %v2592 = vrcp.pop %v2528
    %v2593 = vrcp.pop %v2529
    %v2594 = vrcp.pop %v2530
    %v2595 = vrcp.pop %v2531
    %v2596 = vrcp.pop %v2532
    %v2597 = vrcp.pop %v2533
    %v2598 = vrcp.pop %v2534
    %v2599 = vrcp.pop %v2535
    %v2600 = vrcp.pop %v2536
    %v2601 = vrcp.pop %v2537
    %v2602 = vrcp.pop %v2538
    %v2603 = vrcp.pop %v2539
    %v2604 = vrcp.pop %v2540
    %v2605 = vrcp.pop %v2541
    %v2606 = vrcp.pop %v2542
    %v2607 = vrcp.pop %v2543
    %v2608 = vrcp.pop %v2544
    %v2609 = vrcp.pop %v2545
    %v2610 = vrcp.pop %v2546
    %v2611 = vrcp.pop %v2547
    %v2612 = vrcp.pop %v2548
    %v2613 = vrcp.pop %v2549
    %v2614 = vrcp.pop %v2550
    %v2615 = vrcp.pop %v2551
    %v2616 = vrcp.pop %v2552
    %v2617 = vrcp.pop %v2553
    %v2618 = vrcp.pop %v2554
    %v2619 = vrcp.pop %v2555
    %v2620 = vrcp.pop %v2556
    %v2621 = vrcp.pop %v2557
    %v2622 = vrcp.pop %v2558
    %v2623 = vrcp.pop %v2559
    %v2624 = vrcp.pop %v2560
    %v2625 = vrcp.pop %v2561
    %v2626 = vrcp.pop %v2562
    %v2627 = vrcp.pop %v2563
    %v2628 = vrcp.pop %v2564
    %v2629 = vrcp.pop %v2565
    %v2630 = vrcp.pop %v2566
    %v2631 = vrcp.pop %v2567
    %v2632 = vrcp.pop %v2568
    %v2633 = vrcp.pop %v2569
    %v2634 = vrcp.pop %v2570
    %v2635 = vrcp.pop %v2571
    %v2636 = vrcp.pop %v2572
    %v2637 = vrcp.pop %v2573
    %v2638 = vrcp.pop %v2574
    %v2639 = vrcp.pop %v2575
    %v2640 = vrcp.pop %v2576
    %v2641 = vrcp.pop %v2577
    %v2642 = vrcp.pop %v2578
    %v2643 = vrcp.pop %v2579
    %v2644 = vrcp.pop %v2580
    %v2645 = vrcp.pop %v2581
    %v2646 = vrcp.pop %v2582
    %v2647 = vrcp.pop %v2583
    %v2648 = vrcp.pop %v2584
    %v2649 = vrcp.pop %v2585
    %v2650 = vrcp.pop %v2586
    %v2651 = vrcp.pop %v2587
    %v2652 = vmul.f32 %v2268, %v2588
    %v2653 = vmul.f32 %v2269, %v2589
    %v2654 = vmul.f32 %v2270, %v2590
    %v2655 = vmul.f32 %v2271, %v2591
    %v2656 = vmul.f32 %v2272, %v2592
    %v2657 = vmul.f32 %v2273, %v2593
    %v2658 = vmul.f32 %v2274, %v2594
    %v2659 = vmul.f32 %v2275, %v2595
    %v2660 = vmul.f32 %v2276, %v2596
    %v2661 = vmul.f32 %v2277, %v2597
    %v2662 = vmul.f32 %v2278, %v2598
    %v2663 = vmul.f32 %v2279, %v2599
    %v2664 = vmul.f32 %v2280, %v2600
    %v2665 = vmul.f32 %v2281, %v2601
    %v2666 = vmul.f32 %v2282, %v2602
    %v2667 = vmul.f32 %v2283, %v2603
    %v2668 = vmul.f32 %v2284, %v2604
    %v2669 = vmul.f32 %v2285, %v2605
    %v2670 = vmul.f32 %v2286, %v2606
    %v2671 = vmul.f32 %v2287, %v2607
    %v2672 = vmul.f32 %v2288, %v2608
    %v2673 = vmul.f32 %v2289, %v2609
    %v2674 = vmul.f32 %v2290, %v2610
    %v2675 = vmul.f32 %v2291, %v2611
    %v2676 = vmul.f32 %v2292, %v2612
    %v2677 = vmul.f32 %v2293, %v2613
    %v2678 = vmul.f32 %v2294, %v2614
    %v2679 = vmul.f32 %v2295, %v2615
    %v2680 = vmul.f32 %v2296, %v2616
    %v2681 = vmul.f32 %v2297, %v2617
    %v2682 = vmul.f32 %v2298, %v2618
    %v2683 = vmul.f32 %v2299, %v2619
    %v2684 = vmul.f32 %v2300, %v2620
    %v2685 = vmul.f32 %v2301, %v2621
    %v2686 = vmul.f32 %v2302, %v2622
    %v2687 = vmul.f32 %v2303, %v2623
    %v2688 = vmul.f32 %v2304, %v2624
    %v2689 = vmul.f32 %v2305, %v2625
    %v2690 = vmul.f32 %v2306, %v2626
    %v2691 = vmul.f32 %v2307, %v2627
    %v2692 = vmul.f32 %v2308, %v2628
    %v2693 = vmul.f32 %v2309, %v2629
    %v2694 = vmul.f32 %v2310, %v2630
    %v2695 = vmul.f32 %v2311, %v2631
    %v2696 = vmul.f32 %v2312, %v2632
    %v2697 = vmul.f32 %v2313, %v2633
    %v2698 = vmul.f32 %v2314, %v2634
    %v2699 = vmul.f32 %v2315, %v2635
    %v2700 = vmul.f32 %v2316, %v2636
    %v2701 = vmul.f32 %v2317, %v2637
    %v2702 = vmul.f32 %v2318, %v2638
    %v2703 = vmul.f32 %v2319, %v2639
    %v2704 = vmul.f32 %v2320, %v2640
    %v2705 = vmul.f32 %v2321, %v2641
    %v2706 = vmul.f32 %v2322, %v2642
    %v2707 = vmul.f32 %v2323, %v2643
    %v2708 = vmul.f32 %v2324, %v2644
    %v2709 = vmul.f32 %v2325, %v2645
    %v2710 = vmul.f32 %v2326, %v2646
    %v2711 = vmul.f32 %v2327, %v2647
    %v2712 = vmul.f32 %v2328, %v2648
    %v2713 = vmul.f32 %v2329, %v2649
    %v2714 = vmul.f32 %v2330, %v2650
    %v2715 = vmul.f32 %v2331, %v2651
    %v2716 = vpack.c.bf16 %v2653, %v2652
    %v2717 = vpack.c.bf16 %v2655, %v2654
    %v2718 = vpack.c.bf16 %v2657, %v2656
    %v2719 = vpack.c.bf16 %v2659, %v2658
    %v2720 = vpack.c.bf16 %v2661, %v2660
    %v2721 = vpack.c.bf16 %v2663, %v2662
    %v2722 = vpack.c.bf16 %v2665, %v2664
    %v2723 = vpack.c.bf16 %v2667, %v2666
    %v2724 = vpack.c.bf16 %v2669, %v2668
    %v2725 = vpack.c.bf16 %v2671, %v2670
    %v2726 = vpack.c.bf16 %v2673, %v2672
    %v2727 = vpack.c.bf16 %v2675, %v2674
    %v2728 = vpack.c.bf16 %v2677, %v2676
    %v2729 = vpack.c.bf16 %v2679, %v2678
    %v2730 = vpack.c.bf16 %v2681, %v2680
    %v2731 = vpack.c.bf16 %v2683, %v2682
    %v2732 = vpack.c.bf16 %v2685, %v2684
    %v2733 = vpack.c.bf16 %v2687, %v2686
    %v2734 = vpack.c.bf16 %v2689, %v2688
    %v2735 = vpack.c.bf16 %v2691, %v2690
    %v2736 = vpack.c.bf16 %v2693, %v2692
    %v2737 = vpack.c.bf16 %v2695, %v2694
    %v2738 = vpack.c.bf16 %v2697, %v2696
    %v2739 = vpack.c.bf16 %v2699, %v2698
    %v2740 = vpack.c.bf16 %v2701, %v2700
    %v2741 = vpack.c.bf16 %v2703, %v2702
    %v2742 = vpack.c.bf16 %v2705, %v2704
    %v2743 = vpack.c.bf16 %v2707, %v2706
    %v2744 = vpack.c.bf16 %v2709, %v2708
    %v2745 = vpack.c.bf16 %v2711, %v2710
    %v2746 = vpack.c.bf16 %v2713, %v2712
    %v2747 = vpack.c.bf16 %v2715, %v2714
    %v2748 = vld [vmem:[%s4] sm:$0xf]
    %v2749 = vld [vmem:[%s4 + $0x4] sm:$0xf]
    %v2750 = vld [vmem:[%s4 + $0x8] sm:$0xf]
    %v2751 = vld [vmem:[%s4 + $0xc] sm:$0xf]
    %v2752 = vld [vmem:[%s4 + $0x10] sm:$0xf]
    %v2753 = vld [vmem:[%s4 + $0x14] sm:$0xf]
    %v2754 = vld [vmem:[%s4 + $0x18] sm:$0xf]
    %v2755 = vld [vmem:[%s4 + $0x1c] sm:$0xf]
    %v2756 = vld [vmem:[%s4 + $0x20] sm:$0xf]
    %v2757 = vld [vmem:[%s4 + $0x24] sm:$0xf]
    %v2758 = vld [vmem:[%s4 + $0x28] sm:$0xf]
    %v2759 = vld [vmem:[%s4 + $0x2c] sm:$0xf]
    %v2760 = vld [vmem:[%s4 + $0x30] sm:$0xf]
    %v2761 = vld [vmem:[%s4 + $0x34] sm:$0xf]
    %v2762 = vld [vmem:[%s4 + $0x38] sm:$0xf]
    %v2763 = vld [vmem:[%s4 + $0x3c] sm:$0xf]
    %v2764 = vlaneseq
    %v2765 = vshrl.u32 %v2764, 7
    %v2766 = vsub.s32 0, %v2765
    %v2767 = vrot.slane %v1186, %v2766
    %v2784 = vunpack.c.l.b16 %v2748
    %v2785 = vunpack.c.l.b16 %v2749
    %v2786 = vunpack.c.l.b16 %v2750
    %v2787 = vunpack.c.l.b16 %v2751
    %v2788 = vunpack.c.l.b16 %v2752
    %v2789 = vunpack.c.l.b16 %v2753
    %v2790 = vunpack.c.l.b16 %v2754
    %v2791 = vunpack.c.l.b16 %v2755
    %v2792 = vunpack.c.l.b16 %v2756
    %v2793 = vunpack.c.l.b16 %v2757
    %v2794 = vunpack.c.l.b16 %v2758
    %v2795 = vunpack.c.l.b16 %v2759
    %v2796 = vunpack.c.l.b16 %v2760
    %v2797 = vunpack.c.l.b16 %v2761
    %v2798 = vunpack.c.l.b16 %v2762
    %v2799 = vunpack.c.l.b16 %v2763
    %v2800 = vpack.c.b16 %v2785, %v2784
    %v2801 = vpack.c.b16 %v2787, %v2786
    %v2802 = vpack.c.b16 %v2789, %v2788
    %v2803 = vpack.c.b16 %v2791, %v2790
    %v2804 = vpack.c.b16 %v2793, %v2792
    %v2805 = vpack.c.b16 %v2795, %v2794
    %v2806 = vpack.c.b16 %v2797, %v2796
    %v2807 = vpack.c.b16 %v2799, %v2798
    %2816 = vmatprep.subr.bf16.mxu0 0
    %2817 = vmatpush1.bf16.msra.mxu0 %v2807
    %2818 = vmatprep.subr.bf16.mxu0 0
    %2819 = vmatpush1.bf16.msra.mxu0 %v2806
    %2820 = vmatprep.subr.bf16.mxu0 0
    %2821 = vmatpush1.bf16.msra.mxu0 %v2805
    %2822 = vmatprep.subr.bf16.mxu0 0
    %2823 = vmatpush1.bf16.msra.mxu0 %v2804
    %2824 = vmatprep.subr.bf16.mxu0 0
    %2825 = vmatpush1.bf16.msra.mxu0 %v2803
    %2826 = vmatprep.subr.bf16.mxu0 0
    %2827 = vmatpush1.bf16.msra.mxu0 %v2802
    %2828 = vmatprep.subr.bf16.mxu0 0
    %2829 = vmatpush1.bf16.msra.mxu0 %v2801
    %2830 = vmatprep.subr.bf16.mxu0 0
    %2831 = vmatpush1.bf16.msra.mxu0 %v2800
    %2832 = vmatprep.subr.bf16.mxu0 0
    %2833 = vmatpush2.bf16.msra.mxu0 0
    %2834 = vmatprep.subr.bf16.mxu0 0
    %2835 = vmatpush2.bf16.msra.mxu0 0
    %2836 = vmatprep.subr.bf16.mxu0 0
    %2837 = vmatpush2.bf16.msra.mxu0 0
    %2838 = vmatprep.subr.bf16.mxu0 0
    %2839 = vmatpush2.bf16.msra.mxu0 0
    %2840 = vmatprep.subr.bf16.mxu0 0
    %2841 = vmatpush2.bf16.msra.mxu0 0
    %2842 = vmatprep.subr.bf16.mxu0 0
    %2843 = vmatpush2.bf16.msra.mxu0 0
    %2844 = vmatprep.subr.bf16.mxu0 0
    %2845 = vmatpush2.bf16.msra.mxu0 0
    %2846 = vmatprep.subr.bf16.mxu0 0
    %2847 = vmatpush2.bf16.msra.mxu0 0
    %2848 = vmatprep.mubr.bf16.mxu0 0
    %2849 = vmatmul.mubr.bf16.gmra.mxu0 %v2716
    %v2850 = vpop.f32.mrf.mxu0
    %v2851 = vadd.f32 %v2767, %v2850
    %v2852 = vpop.f32.mrf.mxu0
    %v2853 = vpop.f32.mrf.mxu0
    %v2854 = vadd.f32 %v2767, %v2853
    %v2855 = vpop.f32.mrf.mxu0
    %2856 = vmatprep.mubr.bf16.mxu0 0
    %2857 = vmatmul.mubr.bf16.gmra.mxu0 %v2717
    %v2858 = vpop.f32.mrf.mxu0
    %v2859 = vadd.f32 %v2767, %v2858
    %v2860 = vpop.f32.mrf.mxu0
    %v2861 = vpop.f32.mrf.mxu0
    %v2862 = vadd.f32 %v2767, %v2861
    %v2863 = vpop.f32.mrf.mxu0
    %2864 = vmatprep.mubr.bf16.mxu0 0
    %2865 = vmatmul.mubr.bf16.gmra.mxu0 %v2718
    %v2866 = vpop.f32.mrf.mxu0
    %v2867 = vadd.f32 %v2767, %v2866
    %v2868 = vpop.f32.mrf.mxu0
    %v2869 = vpop.f32.mrf.mxu0
    %v2870 = vadd.f32 %v2767, %v2869
    %v2871 = vpop.f32.mrf.mxu0
    %2872 = vmatprep.mubr.bf16.mxu0 0
    %2873 = vmatmul.mubr.bf16.gmra.mxu0 %v2719
    %v2874 = vpop.f32.mrf.mxu0
    %v2875 = vadd.f32 %v2767, %v2874
    %v2876 = vpop.f32.mrf.mxu0
    %v2877 = vpop.f32.mrf.mxu0
    %v2878 = vadd.f32 %v2767, %v2877
    %v2879 = vpop.f32.mrf.mxu0
    %2880 = vmatprep.mubr.bf16.mxu0 0
    %2881 = vmatmul.mubr.bf16.gmra.mxu0 %v2720
    %v2882 = vpop.f32.mrf.mxu0
    %v2883 = vadd.f32 %v2767, %v2882
    %v2884 = vpop.f32.mrf.mxu0
    %v2885 = vpop.f32.mrf.mxu0
    %v2886 = vadd.f32 %v2767, %v2885
    %v2887 = vpop.f32.mrf.mxu0
    %2888 = vmatprep.mubr.bf16.mxu0 0
    %2889 = vmatmul.mubr.bf16.gmra.mxu0 %v2721
    %v2890 = vpop.f32.mrf.mxu0
    %v2891 = vadd.f32 %v2767, %v2890
    %v2892 = vpop.f32.mrf.mxu0
    %v2893 = vpop.f32.mrf.mxu0
    %v2894 = vadd.f32 %v2767, %v2893
    %v2895 = vpop.f32.mrf.mxu0
    %2896 = vmatprep.mubr.bf16.mxu0 0
    %2897 = vmatmul.mubr.bf16.gmra.mxu0 %v2722
    %v2898 = vpop.f32.mrf.mxu0
    %v2899 = vadd.f32 %v2767, %v2898
    %v2900 = vpop.f32.mrf.mxu0
    %v2901 = vpop.f32.mrf.mxu0
    %v2902 = vadd.f32 %v2767, %v2901
    %v2903 = vpop.f32.mrf.mxu0
    %2904 = vmatprep.mubr.bf16.mxu0 0
    %2905 = vmatmul.mubr.bf16.gmra.mxu0 %v2723
    %v2906 = vpop.f32.mrf.mxu0
    %v2907 = vadd.f32 %v2767, %v2906
    %v2908 = vpop.f32.mrf.mxu0
    %v2909 = vpop.f32.mrf.mxu0
    %v2910 = vadd.f32 %v2767, %v2909
    %v2911 = vpop.f32.mrf.mxu0
    %2912 = vmatprep.mubr.bf16.mxu0 0
    %2913 = vmatmul.mubr.bf16.gmra.mxu0 %v2724
    %v2914 = vpop.f32.mrf.mxu0
    %v2915 = vadd.f32 %v2767, %v2914
    %v2916 = vpop.f32.mrf.mxu0
    %v2917 = vpop.f32.mrf.mxu0
    %v2918 = vadd.f32 %v2767, %v2917
    %v2919 = vpop.f32.mrf.mxu0
    %2920 = vmatprep.mubr.bf16.mxu0 0
    %2921 = vmatmul.mubr.bf16.gmra.mxu0 %v2725
    %v2922 = vpop.f32.mrf.mxu0
    %v2923 = vadd.f32 %v2767, %v2922
    %v2924 = vpop.f32.mrf.mxu0
    %v2925 = vpop.f32.mrf.mxu0
    %v2926 = vadd.f32 %v2767, %v2925
    %v2927 = vpop.f32.mrf.mxu0
    %2928 = vmatprep.mubr.bf16.mxu0 0
    %2929 = vmatmul.mubr.bf16.gmra.mxu0 %v2726
    %v2930 = vpop.f32.mrf.mxu0
    %v2931 = vadd.f32 %v2767, %v2930
    %v2932 = vpop.f32.mrf.mxu0
    %v2933 = vpop.f32.mrf.mxu0
    %v2934 = vadd.f32 %v2767, %v2933
    %v2935 = vpop.f32.mrf.mxu0
    %2936 = vmatprep.mubr.bf16.mxu0 0
    %2937 = vmatmul.mubr.bf16.gmra.mxu0 %v2727
    %v2938 = vpop.f32.mrf.mxu0
    %v2939 = vadd.f32 %v2767, %v2938
    %v2940 = vpop.f32.mrf.mxu0
    %v2941 = vpop.f32.mrf.mxu0
    %v2942 = vadd.f32 %v2767, %v2941
    %v2943 = vpop.f32.mrf.mxu0
    %2944 = vmatprep.mubr.bf16.mxu0 0
    %2945 = vmatmul.mubr.bf16.gmra.mxu0 %v2728
    %v2946 = vpop.f32.mrf.mxu0
    %v2947 = vadd.f32 %v2767, %v2946
    %v2948 = vpop.f32.mrf.mxu0
    %v2949 = vpop.f32.mrf.mxu0
    %v2950 = vadd.f32 %v2767, %v2949
    %v2951 = vpop.f32.mrf.mxu0
    %2952 = vmatprep.mubr.bf16.mxu0 0
    %2953 = vmatmul.mubr.bf16.gmra.mxu0 %v2729
    %v2954 = vpop.f32.mrf.mxu0
    %v2955 = vadd.f32 %v2767, %v2954
    %v2956 = vpop.f32.mrf.mxu0
    %v2957 = vpop.f32.mrf.mxu0
    %v2958 = vadd.f32 %v2767, %v2957
    %v2959 = vpop.f32.mrf.mxu0
    %2960 = vmatprep.mubr.bf16.mxu0 0
    %2961 = vmatmul.mubr.bf16.gmra.mxu0 %v2730
    %v2962 = vpop.f32.mrf.mxu0
    %v2963 = vadd.f32 %v2767, %v2962
    %v2964 = vpop.f32.mrf.mxu0
    %v2965 = vpop.f32.mrf.mxu0
    %v2966 = vadd.f32 %v2767, %v2965
    %v2967 = vpop.f32.mrf.mxu0
    %2968 = vmatprep.mubr.bf16.mxu0 0
    %2969 = vmatmul.mubr.bf16.gmra.mxu0 %v2731
    %v2970 = vpop.f32.mrf.mxu0
    %v2971 = vadd.f32 %v2767, %v2970
    %v2972 = vpop.f32.mrf.mxu0
    %v2973 = vpop.f32.mrf.mxu0
    %v2974 = vadd.f32 %v2767, %v2973
    %v2975 = vpop.f32.mrf.mxu0
    %2976 = vmatprep.mubr.bf16.mxu0 0
    %2977 = vmatmul.mubr.bf16.gmra.mxu0 %v2732
    %v2978 = vpop.f32.mrf.mxu0
    %v2979 = vadd.f32 %v2767, %v2978
    %v2980 = vpop.f32.mrf.mxu0
    %v2981 = vpop.f32.mrf.mxu0
    %v2982 = vadd.f32 %v2767, %v2981
    %v2983 = vpop.f32.mrf.mxu0
    %2984 = vmatprep.mubr.bf16.mxu0 0
    %2985 = vmatmul.mubr.bf16.gmra.mxu0 %v2733
    %v2986 = vpop.f32.mrf.mxu0
    %v2987 = vadd.f32 %v2767, %v2986
    %v2988 = vpop.f32.mrf.mxu0
    %v2989 = vpop.f32.mrf.mxu0
    %v2990 = vadd.f32 %v2767, %v2989
    %v2991 = vpop.f32.mrf.mxu0
    %2992 = vmatprep.mubr.bf16.mxu0 0
    %2993 = vmatmul.mubr.bf16.gmra.mxu0 %v2734
    %v2994 = vpop.f32.mrf.mxu0
    %v2995 = vadd.f32 %v2767, %v2994
    %v2996 = vpop.f32.mrf.mxu0
    %v2997 = vpop.f32.mrf.mxu0
    %v2998 = vadd.f32 %v2767, %v2997
    %v2999 = vpop.f32.mrf.mxu0
    %3000 = vmatprep.mubr.bf16.mxu0 0
    %3001 = vmatmul.mubr.bf16.gmra.mxu0 %v2735
    %v3002 = vpop.f32.mrf.mxu0
    %v3003 = vadd.f32 %v2767, %v3002
    %v3004 = vpop.f32.mrf.mxu0
    %v3005 = vpop.f32.mrf.mxu0
    %v3006 = vadd.f32 %v2767, %v3005
    %v3007 = vpop.f32.mrf.mxu0
    %3008 = vmatprep.mubr.bf16.mxu0 0
    %3009 = vmatmul.mubr.bf16.gmra.mxu0 %v2736
    %v3010 = vpop.f32.mrf.mxu0
    %v3011 = vadd.f32 %v2767, %v3010
    %v3012 = vpop.f32.mrf.mxu0
    %v3013 = vpop.f32.mrf.mxu0
    %v3014 = vadd.f32 %v2767, %v3013
    %v3015 = vpop.f32.mrf.mxu0
    %3016 = vmatprep.mubr.bf16.mxu0 0
    %3017 = vmatmul.mubr.bf16.gmra.mxu0 %v2737
    %v3018 = vpop.f32.mrf.mxu0
    %v3019 = vadd.f32 %v2767, %v3018
    %v3020 = vpop.f32.mrf.mxu0
    %v3021 = vpop.f32.mrf.mxu0
    %v3022 = vadd.f32 %v2767, %v3021
    %v3023 = vpop.f32.mrf.mxu0
    %3024 = vmatprep.mubr.bf16.mxu0 0
    %3025 = vmatmul.mubr.bf16.gmra.mxu0 %v2738
    %v3026 = vpop.f32.mrf.mxu0
    %v3027 = vadd.f32 %v2767, %v3026
    %v3028 = vpop.f32.mrf.mxu0
    %v3029 = vpop.f32.mrf.mxu0
    %v3030 = vadd.f32 %v2767, %v3029
    %v3031 = vpop.f32.mrf.mxu0
    %3032 = vmatprep.mubr.bf16.mxu0 0
    %3033 = vmatmul.mubr.bf16.gmra.mxu0 %v2739
    %v3034 = vpop.f32.mrf.mxu0
    %v3035 = vadd.f32 %v2767, %v3034
    %v3036 = vpop.f32.mrf.mxu0
    %v3037 = vpop.f32.mrf.mxu0
    %v3038 = vadd.f32 %v2767, %v3037
    %v3039 = vpop.f32.mrf.mxu0
    %3040 = vmatprep.mubr.bf16.mxu0 0
    %3041 = vmatmul.mubr.bf16.gmra.mxu0 %v2740
    %v3042 = vpop.f32.mrf.mxu0
    %v3043 = vadd.f32 %v2767, %v3042
    %v3044 = vpop.f32.mrf.mxu0
    %v3045 = vpop.f32.mrf.mxu0
    %v3046 = vadd.f32 %v2767, %v3045
    %v3047 = vpop.f32.mrf.mxu0
    %3048 = vmatprep.mubr.bf16.mxu0 0
    %3049 = vmatmul.mubr.bf16.gmra.mxu0 %v2741
    %v3050 = vpop.f32.mrf.mxu0
    %v3051 = vadd.f32 %v2767, %v3050
    %v3052 = vpop.f32.mrf.mxu0
    %v3053 = vpop.f32.mrf.mxu0
    %v3054 = vadd.f32 %v2767, %v3053
    %v3055 = vpop.f32.mrf.mxu0
    %3056 = vmatprep.mubr.bf16.mxu0 0
    %3057 = vmatmul.mubr.bf16.gmra.mxu0 %v2742
    %v3058 = vpop.f32.mrf.mxu0
    %v3059 = vadd.f32 %v2767, %v3058
    %v3060 = vpop.f32.mrf.mxu0
    %v3061 = vpop.f32.mrf.mxu0
    %v3062 = vadd.f32 %v2767, %v3061
    %v3063 = vpop.f32.mrf.mxu0
    %3064 = vmatprep.mubr.bf16.mxu0 0
    %3065 = vmatmul.mubr.bf16.gmra.mxu0 %v2743
    %v3066 = vpop.f32.mrf.mxu0
    %v3067 = vadd.f32 %v2767, %v3066
    %v3068 = vpop.f32.mrf.mxu0
    %v3069 = vpop.f32.mrf.mxu0
    %v3070 = vadd.f32 %v2767, %v3069
    %v3071 = vpop.f32.mrf.mxu0
    %3072 = vmatprep.mubr.bf16.mxu0 0
    %3073 = vmatmul.mubr.bf16.gmra.mxu0 %v2744
    %v3074 = vpop.f32.mrf.mxu0
    %v3075 = vadd.f32 %v2767, %v3074
    %v3076 = vpop.f32.mrf.mxu0
    %v3077 = vpop.f32.mrf.mxu0
    %v3078 = vadd.f32 %v2767, %v3077
    %v3079 = vpop.f32.mrf.mxu0
    %3080 = vmatprep.mubr.bf16.mxu0 0
    %3081 = vmatmul.mubr.bf16.gmra.mxu0 %v2745
    %v3082 = vpop.f32.mrf.mxu0
    %v3083 = vadd.f32 %v2767, %v3082
    %v3084 = vpop.f32.mrf.mxu0
    %v3085 = vpop.f32.mrf.mxu0
    %v3086 = vadd.f32 %v2767, %v3085
    %v3087 = vpop.f32.mrf.mxu0
    %3088 = vmatprep.mubr.bf16.mxu0 0
    %3089 = vmatmul.mubr.bf16.gmra.mxu0 %v2746
    %v3090 = vpop.f32.mrf.mxu0
    %v3091 = vadd.f32 %v2767, %v3090
    %v3092 = vpop.f32.mrf.mxu0
    %v3093 = vpop.f32.mrf.mxu0
    %v3094 = vadd.f32 %v2767, %v3093
    %v3095 = vpop.f32.mrf.mxu0
    %3096 = vmatprep.mubr.bf16.mxu0 0
    %3097 = vmatmul.mubr.bf16.gmra.mxu0 %v2747
    %v3098 = vpop.f32.mrf.mxu0
    %v3099 = vadd.f32 %v2767, %v3098
    %v3100 = vpop.f32.mrf.mxu0
    %v3101 = vpop.f32.mrf.mxu0
    %v3102 = vadd.f32 %v2767, %v3101
    %v3103 = vpop.f32.mrf.mxu0
    %3104 = vdwg.mxu0
    %v3105 = vsub.f32 0.0, %v2851
    %v3106 = vsub.f32 0.0, %v2854
    %v3107 = vsub.f32 0.0, %v2859
    %v3108 = vsub.f32 0.0, %v2862
    %v3109 = vsub.f32 0.0, %v2867
    %v3110 = vsub.f32 0.0, %v2870
    %v3111 = vsub.f32 0.0, %v2875
    %v3112 = vsub.f32 0.0, %v2878
    %v3113 = vsub.f32 0.0, %v2883
    %v3114 = vsub.f32 0.0, %v2886
    %v3115 = vsub.f32 0.0, %v2891
    %v3116 = vsub.f32 0.0, %v2894
    %v3117 = vsub.f32 0.0, %v2899
    %v3118 = vsub.f32 0.0, %v2902
    %v3119 = vsub.f32 0.0, %v2907
    %v3120 = vsub.f32 0.0, %v2910
    %v3121 = vsub.f32 0.0, %v2915
    %v3122 = vsub.f32 0.0, %v2918
    %v3123 = vsub.f32 0.0, %v2923
    %v3124 = vsub.f32 0.0, %v2926
    %v3125 = vsub.f32 0.0, %v2931
    %v3126 = vsub.f32 0.0, %v2934
    %v3127 = vsub.f32 0.0, %v2939
    %v3128 = vsub.f32 0.0, %v2942
    %v3129 = vsub.f32 0.0, %v2947
    %v3130 = vsub.f32 0.0, %v2950
    %v3131 = vsub.f32 0.0, %v2955
    %v3132 = vsub.f32 0.0, %v2958
    %v3133 = vsub.f32 0.0, %v2963
    %v3134 = vsub.f32 0.0, %v2966
    %v3135 = vsub.f32 0.0, %v2971
    %v3136 = vsub.f32 0.0, %v2974
    %v3137 = vsub.f32 0.0, %v2979
    %v3138 = vsub.f32 0.0, %v2982
    %v3139 = vsub.f32 0.0, %v2987
    %v3140 = vsub.f32 0.0, %v2990
    %v3141 = vsub.f32 0.0, %v2995
    %v3142 = vsub.f32 0.0, %v2998
    %v3143 = vsub.f32 0.0, %v3003
    %v3144 = vsub.f32 0.0, %v3006
    %v3145 = vsub.f32 0.0, %v3011
    %v3146 = vsub.f32 0.0, %v3014
    %v3147 = vsub.f32 0.0, %v3019
    %v3148 = vsub.f32 0.0, %v3022
    %v3149 = vsub.f32 0.0, %v3027
    %v3150 = vsub.f32 0.0, %v3030
    %v3151 = vsub.f32 0.0, %v3035
    %v3152 = vsub.f32 0.0, %v3038
    %v3153 = vsub.f32 0.0, %v3043
    %v3154 = vsub.f32 0.0, %v3046
    %v3155 = vsub.f32 0.0, %v3051
    %v3156 = vsub.f32 0.0, %v3054
    %v3157 = vsub.f32 0.0, %v3059
    %v3158 = vsub.f32 0.0, %v3062
    %v3159 = vsub.f32 0.0, %v3067
    %v3160 = vsub.f32 0.0, %v3070
    %v3161 = vsub.f32 0.0, %v3075
    %v3162 = vsub.f32 0.0, %v3078
    %v3163 = vsub.f32 0.0, %v3083
    %v3164 = vsub.f32 0.0, %v3086
    %v3165 = vsub.f32 0.0, %v3091
    %v3166 = vsub.f32 0.0, %v3094
    %v3167 = vsub.f32 0.0, %v3099
    %v3168 = vsub.f32 0.0, %v3102
    %v3169 = vmul.f32 %v3105, 1.442695
    %v3170 = vpow.pop %v3169
    %v3171 = vmul.f32 %v3106, 1.442695
    %v3172 = vpow.pop %v3171
    %v3173 = vmul.f32 %v3107, 1.442695
    %v3174 = vpow.pop %v3173
    %v3175 = vmul.f32 %v3108, 1.442695
    %v3176 = vpow.pop %v3175
    %v3177 = vmul.f32 %v3109, 1.442695
    %v3178 = vpow.pop %v3177
    %v3179 = vmul.f32 %v3110, 1.442695
    %v3180 = vpow.pop %v3179
    %v3181 = vmul.f32 %v3111, 1.442695
    %v3182 = vpow.pop %v3181
    %v3183 = vmul.f32 %v3112, 1.442695
    %v3184 = vpow.pop %v3183
    %v3185 = vmul.f32 %v3113, 1.442695
    %v3186 = vpow.pop %v3185
    %v3187 = vmul.f32 %v3114, 1.442695
    %v3188 = vpow.pop %v3187
    %v3189 = vmul.f32 %v3115, 1.442695
    %v3190 = vpow.pop %v3189
    %v3191 = vmul.f32 %v3116, 1.442695
    %v3192 = vpow.pop %v3191
    %v3193 = vmul.f32 %v3117, 1.442695
    %v3194 = vpow.pop %v3193
    %v3195 = vmul.f32 %v3118, 1.442695
    %v3196 = vpow.pop %v3195
    %v3197 = vmul.f32 %v3119, 1.442695
    %v3198 = vpow.pop %v3197
    %v3199 = vmul.f32 %v3120, 1.442695
    %v3200 = vpow.pop %v3199
    %v3201 = vmul.f32 %v3121, 1.442695
    %v3202 = vpow.pop %v3201
    %v3203 = vmul.f32 %v3122, 1.442695
    %v3204 = vpow.pop %v3203
    %v3205 = vmul.f32 %v3123, 1.442695
    %v3206 = vpow.pop %v3205
    %v3207 = vmul.f32 %v3124, 1.442695
    %v3208 = vpow.pop %v3207
    %v3209 = vmul.f32 %v3125, 1.442695
    %v3210 = vpow.pop %v3209
    %v3211 = vmul.f32 %v3126, 1.442695
    %v3212 = vpow.pop %v3211
    %v3213 = vmul.f32 %v3127, 1.442695
    %v3214 = vpow.pop %v3213
    %v3215 = vmul.f32 %v3128, 1.442695
    %v3216 = vpow.pop %v3215
    %v3217 = vmul.f32 %v3129, 1.442695
    %v3218 = vpow.pop %v3217
    %v3219 = vmul.f32 %v3130, 1.442695
    %v3220 = vpow.pop %v3219
    %v3221 = vmul.f32 %v3131, 1.442695
    %v3222 = vpow.pop %v3221
    %v3223 = vmul.f32 %v3132, 1.442695
    %v3224 = vpow.pop %v3223
    %v3225 = vmul.f32 %v3133, 1.442695
    %v3226 = vpow.pop %v3225
    %v3227 = vmul.f32 %v3134, 1.442695
    %v3228 = vpow.pop %v3227
    %v3229 = vmul.f32 %v3135, 1.442695
    %v3230 = vpow.pop %v3229
    %v3231 = vmul.f32 %v3136, 1.442695
    %v3232 = vpow.pop %v3231
    %v3233 = vmul.f32 %v3137, 1.442695
    %v3234 = vpow.pop %v3233
    %v3235 = vmul.f32 %v3138, 1.442695
    %v3236 = vpow.pop %v3235
    %v3237 = vmul.f32 %v3139, 1.442695
    %v3238 = vpow.pop %v3237
    %v3239 = vmul.f32 %v3140, 1.442695
    %v3240 = vpow.pop %v3239
    %v3241 = vmul.f32 %v3141, 1.442695
    %v3242 = vpow.pop %v3241
    %v3243 = vmul.f32 %v3142, 1.442695
    %v3244 = vpow.pop %v3243
    %v3245 = vmul.f32 %v3143, 1.442695
    %v3246 = vpow.pop %v3245
    %v3247 = vmul.f32 %v3144, 1.442695
    %v3248 = vpow.pop %v3247
    %v3249 = vmul.f32 %v3145, 1.442695
    %v3250 = vpow.pop %v3249
    %v3251 = vmul.f32 %v3146, 1.442695
    %v3252 = vpow.pop %v3251
    %v3253 = vmul.f32 %v3147, 1.442695
    %v3254 = vpow.pop %v3253
    %v3255 = vmul.f32 %v3148, 1.442695
    %v3256 = vpow.pop %v3255
    %v3257 = vmul.f32 %v3149, 1.442695
    %v3258 = vpow.pop %v3257
    %v3259 = vmul.f32 %v3150, 1.442695
    %v3260 = vpow.pop %v3259
    %v3261 = vmul.f32 %v3151, 1.442695
    %v3262 = vpow.pop %v3261
    %v3263 = vmul.f32 %v3152, 1.442695
    %v3264 = vpow.pop %v3263
    %v3265 = vmul.f32 %v3153, 1.442695
    %v3266 = vpow.pop %v3265
    %v3267 = vmul.f32 %v3154, 1.442695
    %v3268 = vpow.pop %v3267
    %v3269 = vmul.f32 %v3155, 1.442695
    %v3270 = vpow.pop %v3269
    %v3271 = vmul.f32 %v3156, 1.442695
    %v3272 = vpow.pop %v3271
    %v3273 = vmul.f32 %v3157, 1.442695
    %v3274 = vpow.pop %v3273
    %v3275 = vmul.f32 %v3158, 1.442695
    %v3276 = vpow.pop %v3275
    %v3277 = vmul.f32 %v3159, 1.442695
    %v3278 = vpow.pop %v3277
    %v3279 = vmul.f32 %v3160, 1.442695
    %v3280 = vpow.pop %v3279
    %v3281 = vmul.f32 %v3161, 1.442695
    %v3282 = vpow.pop %v3281
    %v3283 = vmul.f32 %v3162, 1.442695
    %v3284 = vpow.pop %v3283
    %v3285 = vmul.f32 %v3163, 1.442695
    %v3286 = vpow.pop %v3285
    %v3287 = vmul.f32 %v3164, 1.442695
    %v3288 = vpow.pop %v3287
    %v3289 = vmul.f32 %v3165, 1.442695
    %v3290 = vpow.pop %v3289
    %v3291 = vmul.f32 %v3166, 1.442695
    %v3292 = vpow.pop %v3291
    %v3293 = vmul.f32 %v3167, 1.442695
    %v3294 = vpow.pop %v3293
    %v3295 = vmul.f32 %v3168, 1.442695
    %v3296 = vpow.pop %v3295
    %v3297 = vadd.f32 %v3170, 1.0
    %v3298 = vadd.f32 %v3172, 1.0
    %v3299 = vadd.f32 %v3174, 1.0
    %v3300 = vadd.f32 %v3176, 1.0
    %v3301 = vadd.f32 %v3178, 1.0
    %v3302 = vadd.f32 %v3180, 1.0
    %v3303 = vadd.f32 %v3182, 1.0
    %v3304 = vadd.f32 %v3184, 1.0
    %v3305 = vadd.f32 %v3186, 1.0
    %v3306 = vadd.f32 %v3188, 1.0
    %v3307 = vadd.f32 %v3190, 1.0
    %v3308 = vadd.f32 %v3192, 1.0
    %v3309 = vadd.f32 %v3194, 1.0
    %v3310 = vadd.f32 %v3196, 1.0
    %v3311 = vadd.f32 %v3198, 1.0
    %v3312 = vadd.f32 %v3200, 1.0
    %v3313 = vadd.f32 %v3202, 1.0
    %v3314 = vadd.f32 %v3204, 1.0
    %v3315 = vadd.f32 %v3206, 1.0
    %v3316 = vadd.f32 %v3208, 1.0
    %v3317 = vadd.f32 %v3210, 1.0
    %v3318 = vadd.f32 %v3212, 1.0
    %v3319 = vadd.f32 %v3214, 1.0
    %v3320 = vadd.f32 %v3216, 1.0
    %v3321 = vadd.f32 %v3218, 1.0
    %v3322 = vadd.f32 %v3220, 1.0
    %v3323 = vadd.f32 %v3222, 1.0
    %v3324 = vadd.f32 %v3224, 1.0
    %v3325 = vadd.f32 %v3226, 1.0
    %v3326 = vadd.f32 %v3228, 1.0
    %v3327 = vadd.f32 %v3230, 1.0
    %v3328 = vadd.f32 %v3232, 1.0
    %v3329 = vadd.f32 %v3234, 1.0
    %v3330 = vadd.f32 %v3236, 1.0
    %v3331 = vadd.f32 %v3238, 1.0
    %v3332 = vadd.f32 %v3240, 1.0
    %v3333 = vadd.f32 %v3242, 1.0
    %v3334 = vadd.f32 %v3244, 1.0
    %v3335 = vadd.f32 %v3246, 1.0
    %v3336 = vadd.f32 %v3248, 1.0
    %v3337 = vadd.f32 %v3250, 1.0
    %v3338 = vadd.f32 %v3252, 1.0
    %v3339 = vadd.f32 %v3254, 1.0
    %v3340 = vadd.f32 %v3256, 1.0
    %v3341 = vadd.f32 %v3258, 1.0
    %v3342 = vadd.f32 %v3260, 1.0
    %v3343 = vadd.f32 %v3262, 1.0
    %v3344 = vadd.f32 %v3264, 1.0
    %v3345 = vadd.f32 %v3266, 1.0
    %v3346 = vadd.f32 %v3268, 1.0
    %v3347 = vadd.f32 %v3270, 1.0
    %v3348 = vadd.f32 %v3272, 1.0
    %v3349 = vadd.f32 %v3274, 1.0
    %v3350 = vadd.f32 %v3276, 1.0
    %v3351 = vadd.f32 %v3278, 1.0
    %v3352 = vadd.f32 %v3280, 1.0
    %v3353 = vadd.f32 %v3282, 1.0
    %v3354 = vadd.f32 %v3284, 1.0
    %v3355 = vadd.f32 %v3286, 1.0
    %v3356 = vadd.f32 %v3288, 1.0
    %v3357 = vadd.f32 %v3290, 1.0
    %v3358 = vadd.f32 %v3292, 1.0
    %v3359 = vadd.f32 %v3294, 1.0
    %v3360 = vadd.f32 %v3296, 1.0
    %v3361 = vrcp.pop %v3297
    %v3362 = vrcp.pop %v3298
    %v3363 = vrcp.pop %v3299
    %v3364 = vrcp.pop %v3300
    %v3365 = vrcp.pop %v3301
    %v3366 = vrcp.pop %v3302
    %v3367 = vrcp.pop %v3303
    %v3368 = vrcp.pop %v3304
    %v3369 = vrcp.pop %v3305
    %v3370 = vrcp.pop %v3306
    %v3371 = vrcp.pop %v3307
    %v3372 = vrcp.pop %v3308
    %v3373 = vrcp.pop %v3309
    %v3374 = vrcp.pop %v3310
    %v3375 = vrcp.pop %v3311
    %v3376 = vrcp.pop %v3312
    %v3377 = vrcp.pop %v3313
    %v3378 = vrcp.pop %v3314
    %v3379 = vrcp.pop %v3315
    %v3380 = vrcp.pop %v3316
    %v3381 = vrcp.pop %v3317
    %v3382 = vrcp.pop %v3318
    %v3383 = vrcp.pop %v3319
    %v3384 = vrcp.pop %v3320
    %v3385 = vrcp.pop %v3321
    %v3386 = vrcp.pop %v3322
    %v3387 = vrcp.pop %v3323
    %v3388 = vrcp.pop %v3324
    %v3389 = vrcp.pop %v3325
    %v3390 = vrcp.pop %v3326
    %v3391 = vrcp.pop %v3327
    %v3392 = vrcp.pop %v3328
    %v3393 = vrcp.pop %v3329
    %v3394 = vrcp.pop %v3330
    %v3395 = vrcp.pop %v3331
    %v3396 = vrcp.pop %v3332
    %v3397 = vrcp.pop %v3333
    %v3398 = vrcp.pop %v3334
    %v3399 = vrcp.pop %v3335
    %v3400 = vrcp.pop %v3336
    %v3401 = vrcp.pop %v3337
    %v3402 = vrcp.pop %v3338
    %v3403 = vrcp.pop %v3339
    %v3404 = vrcp.pop %v3340
    %v3405 = vrcp.pop %v3341
    %v3406 = vrcp.pop %v3342
    %v3407 = vrcp.pop %v3343
    %v3408 = vrcp.pop %v3344
    %v3409 = vrcp.pop %v3345
    %v3410 = vrcp.pop %v3346
    %v3411 = vrcp.pop %v3347
    %v3412 = vrcp.pop %v3348
    %v3413 = vrcp.pop %v3349
    %v3414 = vrcp.pop %v3350
    %v3415 = vrcp.pop %v3351
    %v3416 = vrcp.pop %v3352
    %v3417 = vrcp.pop %v3353
    %v3418 = vrcp.pop %v3354
    %v3419 = vrcp.pop %v3355
    %v3420 = vrcp.pop %v3356
    %v3421 = vrcp.pop %v3357
    %v3422 = vrcp.pop %v3358
    %v3423 = vrcp.pop %v3359
    %v3424 = vrcp.pop %v3360
    %v3425 = vmul.f32 %v2851, %v3361
    %v3426 = vmul.f32 %v2854, %v3362
    %v3427 = vmul.f32 %v2859, %v3363
    %v3428 = vmul.f32 %v2862, %v3364
    %v3429 = vmul.f32 %v2867, %v3365
    %v3430 = vmul.f32 %v2870, %v3366
    %v3431 = vmul.f32 %v2875, %v3367
    %v3432 = vmul.f32 %v2878, %v3368
    %v3433 = vmul.f32 %v2883, %v3369
    %v3434 = vmul.f32 %v2886, %v3370
    %v3435 = vmul.f32 %v2891, %v3371
    %v3436 = vmul.f32 %v2894, %v3372
    %v3437 = vmul.f32 %v2899, %v3373
    %v3438 = vmul.f32 %v2902, %v3374
    %v3439 = vmul.f32 %v2907, %v3375
    %v3440 = vmul.f32 %v2910, %v3376
    %v3441 = vmul.f32 %v2915, %v3377
    %v3442 = vmul.f32 %v2918, %v3378
    %v3443 = vmul.f32 %v2923, %v3379
    %v3444 = vmul.f32 %v2926, %v3380
    %v3445 = vmul.f32 %v2931, %v3381
    %v3446 = vmul.f32 %v2934, %v3382
    %v3447 = vmul.f32 %v2939, %v3383
    %v3448 = vmul.f32 %v2942, %v3384
    %v3449 = vmul.f32 %v2947, %v3385
    %v3450 = vmul.f32 %v2950, %v3386
    %v3451 = vmul.f32 %v2955, %v3387
    %v3452 = vmul.f32 %v2958, %v3388
    %v3453 = vmul.f32 %v2963, %v3389
    %v3454 = vmul.f32 %v2966, %v3390
    %v3455 = vmul.f32 %v2971, %v3391
    %v3456 = vmul.f32 %v2974, %v3392
    %v3457 = vmul.f32 %v2979, %v3393
    %v3458 = vmul.f32 %v2982, %v3394
    %v3459 = vmul.f32 %v2987, %v3395
    %v3460 = vmul.f32 %v2990, %v3396
    %v3461 = vmul.f32 %v2995, %v3397
    %v3462 = vmul.f32 %v2998, %v3398
    %v3463 = vmul.f32 %v3003, %v3399
    %v3464 = vmul.f32 %v3006, %v3400
    %v3465 = vmul.f32 %v3011, %v3401
    %v3466 = vmul.f32 %v3014, %v3402
    %v3467 = vmul.f32 %v3019, %v3403
    %v3468 = vmul.f32 %v3022, %v3404
    %v3469 = vmul.f32 %v3027, %v3405
    %v3470 = vmul.f32 %v3030, %v3406
    %v3471 = vmul.f32 %v3035, %v3407
    %v3472 = vmul.f32 %v3038, %v3408
    %v3473 = vmul.f32 %v3043, %v3409
    %v3474 = vmul.f32 %v3046, %v3410
    %v3475 = vmul.f32 %v3051, %v3411
    %v3476 = vmul.f32 %v3054, %v3412
    %v3477 = vmul.f32 %v3059, %v3413
    %v3478 = vmul.f32 %v3062, %v3414
    %v3479 = vmul.f32 %v3067, %v3415
    %v3480 = vmul.f32 %v3070, %v3416
    %v3481 = vmul.f32 %v3075, %v3417
    %v3482 = vmul.f32 %v3078, %v3418
    %v3483 = vmul.f32 %v3083, %v3419
    %v3484 = vmul.f32 %v3086, %v3420
    %v3485 = vmul.f32 %v3091, %v3421
    %v3486 = vmul.f32 %v3094, %v3422
    %v3487 = vmul.f32 %v3099, %v3423
    %v3488 = vmul.f32 %v3102, %v3424
    %v3489 = vpack.c.bf16 %v3426, %v3425
    %v3490 = vpack.c.bf16 %v3428, %v3427
    %v3491 = vpack.c.bf16 %v3430, %v3429
    %v3492 = vpack.c.bf16 %v3432, %v3431
    %v3493 = vpack.c.bf16 %v3434, %v3433
    %v3494 = vpack.c.bf16 %v3436, %v3435
    %v3495 = vpack.c.bf16 %v3438, %v3437
    %v3496 = vpack.c.bf16 %v3440, %v3439
    %v3497 = vpack.c.bf16 %v3442, %v3441
    %v3498 = vpack.c.bf16 %v3444, %v3443
    %v3499 = vpack.c.bf16 %v3446, %v3445
    %v3500 = vpack.c.bf16 %v3448, %v3447
    %v3501 = vpack.c.bf16 %v3450, %v3449
    %v3502 = vpack.c.bf16 %v3452, %v3451
    %v3503 = vpack.c.bf16 %v3454, %v3453
    %v3504 = vpack.c.bf16 %v3456, %v3455
    %v3505 = vpack.c.bf16 %v3458, %v3457
    %v3506 = vpack.c.bf16 %v3460, %v3459
    %v3507 = vpack.c.bf16 %v3462, %v3461
    %v3508 = vpack.c.bf16 %v3464, %v3463
    %v3509 = vpack.c.bf16 %v3466, %v3465
    %v3510 = vpack.c.bf16 %v3468, %v3467
    %v3511 = vpack.c.bf16 %v3470, %v3469
    %v3512 = vpack.c.bf16 %v3472, %v3471
    %v3513 = vpack.c.bf16 %v3474, %v3473
    %v3514 = vpack.c.bf16 %v3476, %v3475
    %v3515 = vpack.c.bf16 %v3478, %v3477
    %v3516 = vpack.c.bf16 %v3480, %v3479
    %v3517 = vpack.c.bf16 %v3482, %v3481
    %v3518 = vpack.c.bf16 %v3484, %v3483
    %v3519 = vpack.c.bf16 %v3486, %v3485
    %v3520 = vpack.c.bf16 %v3488, %v3487
    %v3521 = vld [vmem:[%s5] sm:$0xf]
    %v3522 = vld [vmem:[%s5 + $0x4] sm:$0xf]
    %v3523 = vld [vmem:[%s5 + $0x8] sm:$0xf]
    %v3524 = vld [vmem:[%s5 + $0xc] sm:$0xf]
    %v3525 = vld [vmem:[%s5 + $0x10] sm:$0xf]
    %v3526 = vld [vmem:[%s5 + $0x14] sm:$0xf]
    %v3527 = vld [vmem:[%s5 + $0x18] sm:$0xf]
    %v3528 = vld [vmem:[%s5 + $0x1c] sm:$0xf]
    %v3529 = vld [vmem:[%s5 + $0x20] sm:$0xf]
    %v3530 = vld [vmem:[%s5 + $0x24] sm:$0xf]
    %v3531 = vld [vmem:[%s5 + $0x28] sm:$0xf]
    %v3532 = vld [vmem:[%s5 + $0x2c] sm:$0xf]
    %v3533 = vld [vmem:[%s5 + $0x30] sm:$0xf]
    %v3534 = vld [vmem:[%s5 + $0x34] sm:$0xf]
    %v3535 = vld [vmem:[%s5 + $0x38] sm:$0xf]
    %v3536 = vld [vmem:[%s5 + $0x3c] sm:$0xf]
    %v3537 = vlaneseq
    %v3538 = vshrl.u32 %v3537, 7
    %v3539 = vsub.s32 0, %v3538
    %v3540 = vrot.slane %v1187, %v3539
    %v3557 = vunpack.c.l.b16 %v3521
    %v3558 = vunpack.c.l.b16 %v3522
    %v3559 = vunpack.c.l.b16 %v3523
    %v3560 = vunpack.c.l.b16 %v3524
    %v3561 = vunpack.c.l.b16 %v3525
    %v3562 = vunpack.c.l.b16 %v3526
    %v3563 = vunpack.c.l.b16 %v3527
    %v3564 = vunpack.c.l.b16 %v3528
    %v3565 = vunpack.c.l.b16 %v3529
    %v3566 = vunpack.c.l.b16 %v3530
    %v3567 = vunpack.c.l.b16 %v3531
    %v3568 = vunpack.c.l.b16 %v3532
    %v3569 = vunpack.c.l.b16 %v3533
    %v3570 = vunpack.c.l.b16 %v3534
    %v3571 = vunpack.c.l.b16 %v3535
    %v3572 = vunpack.c.l.b16 %v3536
    %v3573 = vpack.c.b16 %v3558, %v3557
    %v3574 = vpack.c.b16 %v3560, %v3559
    %v3575 = vpack.c.b16 %v3562, %v3561
    %v3576 = vpack.c.b16 %v3564, %v3563
    %v3577 = vpack.c.b16 %v3566, %v3565
    %v3578 = vpack.c.b16 %v3568, %v3567
    %v3579 = vpack.c.b16 %v3570, %v3569
    %v3580 = vpack.c.b16 %v3572, %v3571
    %3589 = vmatprep.subr.bf16.mxu0 0
    %3590 = vmatpush1.bf16.msra.mxu0 %v3580
    %3591 = vmatprep.subr.bf16.mxu0 0
    %3592 = vmatpush1.bf16.msra.mxu0 %v3579
    %3593 = vmatprep.subr.bf16.mxu0 0
    %3594 = vmatpush1.bf16.msra.mxu0 %v3578
    %3595 = vmatprep.subr.bf16.mxu0 0
    %3596 = vmatpush1.bf16.msra.mxu0 %v3577
    %3597 = vmatprep.subr.bf16.mxu0 0
    %3598 = vmatpush1.bf16.msra.mxu0 %v3576
    %3599 = vmatprep.subr.bf16.mxu0 0
    %3600 = vmatpush1.bf16.msra.mxu0 %v3575
    %3601 = vmatprep.subr.bf16.mxu0 0
    %3602 = vmatpush1.bf16.msra.mxu0 %v3574
    %3603 = vmatprep.subr.bf16.mxu0 0
    %3604 = vmatpush1.bf16.msra.mxu0 %v3573
    %3605 = vmatprep.subr.bf16.mxu0 0
    %3606 = vmatpush2.bf16.msra.mxu0 0
    %3607 = vmatprep.subr.bf16.mxu0 0
    %3608 = vmatpush2.bf16.msra.mxu0 0
    %3609 = vmatprep.subr.bf16.mxu0 0
    %3610 = vmatpush2.bf16.msra.mxu0 0
    %3611 = vmatprep.subr.bf16.mxu0 0
    %3612 = vmatpush2.bf16.msra.mxu0 0
    %3613 = vmatprep.subr.bf16.mxu0 0
    %3614 = vmatpush2.bf16.msra.mxu0 0
    %3615 = vmatprep.subr.bf16.mxu0 0
    %3616 = vmatpush2.bf16.msra.mxu0 0
    %3617 = vmatprep.subr.bf16.mxu0 0
    %3618 = vmatpush2.bf16.msra.mxu0 0
    %3619 = vmatprep.subr.bf16.mxu0 0
    %3620 = vmatpush2.bf16.msra.mxu0 0
    %3621 = vmatprep.mubr.bf16.mxu0 0
    %3622 = vmatmul.mubr.bf16.gmra.mxu0 %v3489
    %v3623 = vpop.f32.mrf.mxu0
    %v3624 = vadd.f32 %v3540, %v3623
    %v3625 = vpop.f32.mrf.mxu0
    %v3626 = vpop.f32.mrf.mxu0
    %v3627 = vadd.f32 %v3540, %v3626
    %v3628 = vpop.f32.mrf.mxu0
    %3629 = vmatprep.mubr.bf16.mxu0 0
    %3630 = vmatmul.mubr.bf16.gmra.mxu0 %v3490
    %v3631 = vpop.f32.mrf.mxu0
    %v3632 = vadd.f32 %v3540, %v3631
    %v3633 = vpop.f32.mrf.mxu0
    %v3634 = vpop.f32.mrf.mxu0
    %v3635 = vadd.f32 %v3540, %v3634
    %v3636 = vpop.f32.mrf.mxu0
    %3637 = vmatprep.mubr.bf16.mxu0 0
    %3638 = vmatmul.mubr.bf16.gmra.mxu0 %v3491
    %v3639 = vpop.f32.mrf.mxu0
    %v3640 = vadd.f32 %v3540, %v3639
    %v3641 = vpop.f32.mrf.mxu0
    %v3642 = vpop.f32.mrf.mxu0
    %v3643 = vadd.f32 %v3540, %v3642
    %v3644 = vpop.f32.mrf.mxu0
    %3645 = vmatprep.mubr.bf16.mxu0 0
    %3646 = vmatmul.mubr.bf16.gmra.mxu0 %v3492
    %v3647 = vpop.f32.mrf.mxu0
    %v3648 = vadd.f32 %v3540, %v3647
    %v3649 = vpop.f32.mrf.mxu0
    %v3650 = vpop.f32.mrf.mxu0
    %v3651 = vadd.f32 %v3540, %v3650
    %v3652 = vpop.f32.mrf.mxu0
    %3653 = vmatprep.mubr.bf16.mxu0 0
    %3654 = vmatmul.mubr.bf16.gmra.mxu0 %v3493
    %v3655 = vpop.f32.mrf.mxu0
    %v3656 = vadd.f32 %v3540, %v3655
    %v3657 = vpop.f32.mrf.mxu0
    %v3658 = vpop.f32.mrf.mxu0
    %v3659 = vadd.f32 %v3540, %v3658
    %v3660 = vpop.f32.mrf.mxu0
    %3661 = vmatprep.mubr.bf16.mxu0 0
    %3662 = vmatmul.mubr.bf16.gmra.mxu0 %v3494
    %v3663 = vpop.f32.mrf.mxu0
    %v3664 = vadd.f32 %v3540, %v3663
    %v3665 = vpop.f32.mrf.mxu0
    %v3666 = vpop.f32.mrf.mxu0
    %v3667 = vadd.f32 %v3540, %v3666
    %v3668 = vpop.f32.mrf.mxu0
    %3669 = vmatprep.mubr.bf16.mxu0 0
    %3670 = vmatmul.mubr.bf16.gmra.mxu0 %v3495
    %v3671 = vpop.f32.mrf.mxu0
    %v3672 = vadd.f32 %v3540, %v3671
    %v3673 = vpop.f32.mrf.mxu0
    %v3674 = vpop.f32.mrf.mxu0
    %v3675 = vadd.f32 %v3540, %v3674
    %v3676 = vpop.f32.mrf.mxu0
    %3677 = vmatprep.mubr.bf16.mxu0 0
    %3678 = vmatmul.mubr.bf16.gmra.mxu0 %v3496
    %v3679 = vpop.f32.mrf.mxu0
    %v3680 = vadd.f32 %v3540, %v3679
    %v3681 = vpop.f32.mrf.mxu0
    %v3682 = vpop.f32.mrf.mxu0
    %v3683 = vadd.f32 %v3540, %v3682
    %v3684 = vpop.f32.mrf.mxu0
    %3685 = vmatprep.mubr.bf16.mxu0 0
    %3686 = vmatmul.mubr.bf16.gmra.mxu0 %v3497
    %v3687 = vpop.f32.mrf.mxu0
    %v3688 = vadd.f32 %v3540, %v3687
    %v3689 = vpop.f32.mrf.mxu0
    %v3690 = vpop.f32.mrf.mxu0
    %v3691 = vadd.f32 %v3540, %v3690
    %v3692 = vpop.f32.mrf.mxu0
    %3693 = vmatprep.mubr.bf16.mxu0 0
    %3694 = vmatmul.mubr.bf16.gmra.mxu0 %v3498
    %v3695 = vpop.f32.mrf.mxu0
    %v3696 = vadd.f32 %v3540, %v3695
    %v3697 = vpop.f32.mrf.mxu0
    %v3698 = vpop.f32.mrf.mxu0
    %v3699 = vadd.f32 %v3540, %v3698
    %v3700 = vpop.f32.mrf.mxu0
    %3701 = vmatprep.mubr.bf16.mxu0 0
    %3702 = vmatmul.mubr.bf16.gmra.mxu0 %v3499
    %v3703 = vpop.f32.mrf.mxu0
    %v3704 = vadd.f32 %v3540, %v3703
    %v3705 = vpop.f32.mrf.mxu0
    %v3706 = vpop.f32.mrf.mxu0
    %v3707 = vadd.f32 %v3540, %v3706
    %v3708 = vpop.f32.mrf.mxu0
    %3709 = vmatprep.mubr.bf16.mxu0 0
    %3710 = vmatmul.mubr.bf16.gmra.mxu0 %v3500
    %v3711 = vpop.f32.mrf.mxu0
    %v3712 = vadd.f32 %v3540, %v3711
    %v3713 = vpop.f32.mrf.mxu0
    %v3714 = vpop.f32.mrf.mxu0
    %v3715 = vadd.f32 %v3540, %v3714
    %v3716 = vpop.f32.mrf.mxu0
    %3717 = vmatprep.mubr.bf16.mxu0 0
    %3718 = vmatmul.mubr.bf16.gmra.mxu0 %v3501
    %v3719 = vpop.f32.mrf.mxu0
    %v3720 = vadd.f32 %v3540, %v3719
    %v3721 = vpop.f32.mrf.mxu0
    %v3722 = vpop.f32.mrf.mxu0
    %v3723 = vadd.f32 %v3540, %v3722
    %v3724 = vpop.f32.mrf.mxu0
    %3725 = vmatprep.mubr.bf16.mxu0 0
    %3726 = vmatmul.mubr.bf16.gmra.mxu0 %v3502
    %v3727 = vpop.f32.mrf.mxu0
    %v3728 = vadd.f32 %v3540, %v3727
    %v3729 = vpop.f32.mrf.mxu0
    %v3730 = vpop.f32.mrf.mxu0
    %v3731 = vadd.f32 %v3540, %v3730
    %v3732 = vpop.f32.mrf.mxu0
    %3733 = vmatprep.mubr.bf16.mxu0 0
    %3734 = vmatmul.mubr.bf16.gmra.mxu0 %v3503
    %v3735 = vpop.f32.mrf.mxu0
    %v3736 = vadd.f32 %v3540, %v3735
    %v3737 = vpop.f32.mrf.mxu0
    %v3738 = vpop.f32.mrf.mxu0
    %v3739 = vadd.f32 %v3540, %v3738
    %v3740 = vpop.f32.mrf.mxu0
    %3741 = vmatprep.mubr.bf16.mxu0 0
    %3742 = vmatmul.mubr.bf16.gmra.mxu0 %v3504
    %v3743 = vpop.f32.mrf.mxu0
    %v3744 = vadd.f32 %v3540, %v3743
    %v3745 = vpop.f32.mrf.mxu0
    %v3746 = vpop.f32.mrf.mxu0
    %v3747 = vadd.f32 %v3540, %v3746
    %v3748 = vpop.f32.mrf.mxu0
    %3749 = vmatprep.mubr.bf16.mxu0 0
    %3750 = vmatmul.mubr.bf16.gmra.mxu0 %v3505
    %v3751 = vpop.f32.mrf.mxu0
    %v3752 = vadd.f32 %v3540, %v3751
    %v3753 = vpop.f32.mrf.mxu0
    %v3754 = vpop.f32.mrf.mxu0
    %v3755 = vadd.f32 %v3540, %v3754
    %v3756 = vpop.f32.mrf.mxu0
    %3757 = vmatprep.mubr.bf16.mxu0 0
    %3758 = vmatmul.mubr.bf16.gmra.mxu0 %v3506
    %v3759 = vpop.f32.mrf.mxu0
    %v3760 = vadd.f32 %v3540, %v3759
    %v3761 = vpop.f32.mrf.mxu0
    %v3762 = vpop.f32.mrf.mxu0
    %v3763 = vadd.f32 %v3540, %v3762
    %v3764 = vpop.f32.mrf.mxu0
    %3765 = vmatprep.mubr.bf16.mxu0 0
    %3766 = vmatmul.mubr.bf16.gmra.mxu0 %v3507
    %v3767 = vpop.f32.mrf.mxu0
    %v3768 = vadd.f32 %v3540, %v3767
    %v3769 = vpop.f32.mrf.mxu0
    %v3770 = vpop.f32.mrf.mxu0
    %v3771 = vadd.f32 %v3540, %v3770
    %v3772 = vpop.f32.mrf.mxu0
    %3773 = vmatprep.mubr.bf16.mxu0 0
    %3774 = vmatmul.mubr.bf16.gmra.mxu0 %v3508
    %v3775 = vpop.f32.mrf.mxu0
    %v3776 = vadd.f32 %v3540, %v3775
    %v3777 = vpop.f32.mrf.mxu0
    %v3778 = vpop.f32.mrf.mxu0
    %v3779 = vadd.f32 %v3540, %v3778
    %v3780 = vpop.f32.mrf.mxu0
    %3781 = vmatprep.mubr.bf16.mxu0 0
    %3782 = vmatmul.mubr.bf16.gmra.mxu0 %v3509
    %v3783 = vpop.f32.mrf.mxu0
    %v3784 = vadd.f32 %v3540, %v3783
    %v3785 = vpop.f32.mrf.mxu0
    %v3786 = vpop.f32.mrf.mxu0
    %v3787 = vadd.f32 %v3540, %v3786
    %v3788 = vpop.f32.mrf.mxu0
    %3789 = vmatprep.mubr.bf16.mxu0 0
    %3790 = vmatmul.mubr.bf16.gmra.mxu0 %v3510
    %v3791 = vpop.f32.mrf.mxu0
    %v3792 = vadd.f32 %v3540, %v3791
    %v3793 = vpop.f32.mrf.mxu0
    %v3794 = vpop.f32.mrf.mxu0
    %v3795 = vadd.f32 %v3540, %v3794
    %v3796 = vpop.f32.mrf.mxu0
    %3797 = vmatprep.mubr.bf16.mxu0 0
    %3798 = vmatmul.mubr.bf16.gmra.mxu0 %v3511
    %v3799 = vpop.f32.mrf.mxu0
    %v3800 = vadd.f32 %v3540, %v3799
    %v3801 = vpop.f32.mrf.mxu0
    %v3802 = vpop.f32.mrf.mxu0
    %v3803 = vadd.f32 %v3540, %v3802
    %v3804 = vpop.f32.mrf.mxu0
    %3805 = vmatprep.mubr.bf16.mxu0 0
    %3806 = vmatmul.mubr.bf16.gmra.mxu0 %v3512
    %v3807 = vpop.f32.mrf.mxu0
    %v3808 = vadd.f32 %v3540, %v3807
    %v3809 = vpop.f32.mrf.mxu0
    %v3810 = vpop.f32.mrf.mxu0
    %v3811 = vadd.f32 %v3540, %v3810
    %v3812 = vpop.f32.mrf.mxu0
    %3813 = vmatprep.mubr.bf16.mxu0 0
    %3814 = vmatmul.mubr.bf16.gmra.mxu0 %v3513
    %v3815 = vpop.f32.mrf.mxu0
    %v3816 = vadd.f32 %v3540, %v3815
    %v3817 = vpop.f32.mrf.mxu0
    %v3818 = vpop.f32.mrf.mxu0
    %v3819 = vadd.f32 %v3540, %v3818
    %v3820 = vpop.f32.mrf.mxu0
    %3821 = vmatprep.mubr.bf16.mxu0 0
    %3822 = vmatmul.mubr.bf16.gmra.mxu0 %v3514
    %v3823 = vpop.f32.mrf.mxu0
    %v3824 = vadd.f32 %v3540, %v3823
    %v3825 = vpop.f32.mrf.mxu0
    %v3826 = vpop.f32.mrf.mxu0
    %v3827 = vadd.f32 %v3540, %v3826
    %v3828 = vpop.f32.mrf.mxu0
    %3829 = vmatprep.mubr.bf16.mxu0 0
    %3830 = vmatmul.mubr.bf16.gmra.mxu0 %v3515
    %v3831 = vpop.f32.mrf.mxu0
    %v3832 = vadd.f32 %v3540, %v3831
    %v3833 = vpop.f32.mrf.mxu0
    %v3834 = vpop.f32.mrf.mxu0
    %v3835 = vadd.f32 %v3540, %v3834
    %v3836 = vpop.f32.mrf.mxu0
    %3837 = vmatprep.mubr.bf16.mxu0 0
    %3838 = vmatmul.mubr.bf16.gmra.mxu0 %v3516
    %v3839 = vpop.f32.mrf.mxu0
    %v3840 = vadd.f32 %v3540, %v3839
    %v3841 = vpop.f32.mrf.mxu0
    %v3842 = vpop.f32.mrf.mxu0
    %v3843 = vadd.f32 %v3540, %v3842
    %v3844 = vpop.f32.mrf.mxu0
    %3845 = vmatprep.mubr.bf16.mxu0 0
    %3846 = vmatmul.mubr.bf16.gmra.mxu0 %v3517
    %v3847 = vpop.f32.mrf.mxu0
    %v3848 = vadd.f32 %v3540, %v3847
    %v3849 = vpop.f32.mrf.mxu0
    %v3850 = vpop.f32.mrf.mxu0
    %v3851 = vadd.f32 %v3540, %v3850
    %v3852 = vpop.f32.mrf.mxu0
    %3853 = vmatprep.mubr.bf16.mxu0 0
    %3854 = vmatmul.mubr.bf16.gmra.mxu0 %v3518
    %v3855 = vpop.f32.mrf.mxu0
    %v3856 = vadd.f32 %v3540, %v3855
    %v3857 = vpop.f32.mrf.mxu0
    %v3858 = vpop.f32.mrf.mxu0
    %v3859 = vadd.f32 %v3540, %v3858
    %v3860 = vpop.f32.mrf.mxu0
    %3861 = vmatprep.mubr.bf16.mxu0 0
    %3862 = vmatmul.mubr.bf16.gmra.mxu0 %v3519
    %v3863 = vpop.f32.mrf.mxu0
    %v3864 = vadd.f32 %v3540, %v3863
    %v3865 = vpop.f32.mrf.mxu0
    %v3866 = vpop.f32.mrf.mxu0
    %v3867 = vadd.f32 %v3540, %v3866
    %v3868 = vpop.f32.mrf.mxu0
    %3869 = vmatprep.mubr.bf16.mxu0 0
    %3870 = vmatmul.mubr.bf16.gmra.mxu0 %v3520
    %v3871 = vpop.f32.mrf.mxu0
    %v3872 = vadd.f32 %v3540, %v3871
    %v3873 = vpop.f32.mrf.mxu0
    %v3874 = vpop.f32.mrf.mxu0
    %v3875 = vadd.f32 %v3540, %v3874
    %v3876 = vpop.f32.mrf.mxu0
    %3877 = vdwg.mxu0
    %3878 = vrot.lane.b32.xlu0 %v97, 96
    %v3879 = vpop.permute.xlu0 %3878
    %3880 = vrot.lane.b32.xlu0 %v98, 96
    %v3881 = vpop.permute.xlu0 %3880
    %3882 = vrot.lane.b32.xlu0 %v99, 96
    %v3883 = vpop.permute.xlu0 %3882
    %3884 = vrot.lane.b32.xlu0 %v100, 96
    %v3885 = vpop.permute.xlu0 %3884
    %3886 = vrot.lane.b32.xlu0 %v101, 96
    %v3887 = vpop.permute.xlu0 %3886
    %3888 = vrot.lane.b32.xlu0 %v102, 96
    %v3889 = vpop.permute.xlu0 %3888
    %3890 = vrot.lane.b32.xlu0 %v103, 96
    %v3891 = vpop.permute.xlu0 %3890
    %3892 = vrot.lane.b32.xlu0 %v104, 96
    %v3893 = vpop.permute.xlu0 %3892
    %3894 = vrot.lane.b32.xlu0 %v105, 96
    %v3895 = vpop.permute.xlu0 %3894
    %3896 = vrot.lane.b32.xlu0 %v106, 96
    %v3897 = vpop.permute.xlu0 %3896
    %3898 = vrot.lane.b32.xlu0 %v107, 96
    %v3899 = vpop.permute.xlu0 %3898
    %3900 = vrot.lane.b32.xlu0 %v108, 96
    %v3901 = vpop.permute.xlu0 %3900
    %3902 = vrot.lane.b32.xlu0 %v109, 96
    %v3903 = vpop.permute.xlu0 %3902
    %3904 = vrot.lane.b32.xlu0 %v110, 96
    %v3905 = vpop.permute.xlu0 %3904
    %3906 = vrot.lane.b32.xlu0 %v111, 96
    %v3907 = vpop.permute.xlu0 %3906
    %3908 = vrot.lane.b32.xlu0 %v112, 96
    %v3909 = vpop.permute.xlu0 %3908
    %3910 = vrot.lane.b32.xlu0 %v113, 96
    %v3911 = vpop.permute.xlu0 %3910
    %3912 = vrot.lane.b32.xlu0 %v114, 96
    %v3913 = vpop.permute.xlu0 %3912
    %3914 = vrot.lane.b32.xlu0 %v115, 96
    %v3915 = vpop.permute.xlu0 %3914
    %3916 = vrot.lane.b32.xlu0 %v116, 96
    %v3917 = vpop.permute.xlu0 %3916
    %3918 = vrot.lane.b32.xlu0 %v117, 96
    %v3919 = vpop.permute.xlu0 %3918
    %3920 = vrot.lane.b32.xlu0 %v118, 96
    %v3921 = vpop.permute.xlu0 %3920
    %3922 = vrot.lane.b32.xlu0 %v119, 96
    %v3923 = vpop.permute.xlu0 %3922
    %3924 = vrot.lane.b32.xlu0 %v120, 96
    %v3925 = vpop.permute.xlu0 %3924
    %3926 = vrot.lane.b32.xlu0 %v121, 96
    %v3927 = vpop.permute.xlu0 %3926
    %3928 = vrot.lane.b32.xlu0 %v122, 96
    %v3929 = vpop.permute.xlu0 %3928
    %3930 = vrot.lane.b32.xlu0 %v123, 96
    %v3931 = vpop.permute.xlu0 %3930
    %3932 = vrot.lane.b32.xlu0 %v124, 96
    %v3933 = vpop.permute.xlu0 %3932
    %3934 = vrot.lane.b32.xlu0 %v125, 96
    %v3935 = vpop.permute.xlu0 %3934
    %3936 = vrot.lane.b32.xlu0 %v126, 96
    %v3937 = vpop.permute.xlu0 %3936
    %3938 = vrot.lane.b32.xlu0 %v127, 96
    %v3939 = vpop.permute.xlu0 %3938
    %3940 = vrot.lane.b32.xlu0 %v128, 96
    %v3941 = vpop.permute.xlu0 %3940
    %3942 = vrot.lane.b32.xlu0 %v129, 96
    %v3943 = vpop.permute.xlu0 %3942
    %3944 = vrot.lane.b32.xlu0 %v130, 96
    %v3945 = vpop.permute.xlu0 %3944
    %3946 = vrot.lane.b32.xlu0 %v131, 96
    %v3947 = vpop.permute.xlu0 %3946
    %3948 = vrot.lane.b32.xlu0 %v132, 96
    %v3949 = vpop.permute.xlu0 %3948
    %3950 = vrot.lane.b32.xlu0 %v133, 96
    %v3951 = vpop.permute.xlu0 %3950
    %3952 = vrot.lane.b32.xlu0 %v134, 96
    %v3953 = vpop.permute.xlu0 %3952
    %3954 = vrot.lane.b32.xlu0 %v135, 96
    %v3955 = vpop.permute.xlu0 %3954
    %3956 = vrot.lane.b32.xlu0 %v136, 96
    %v3957 = vpop.permute.xlu0 %3956
    %3958 = vrot.lane.b32.xlu0 %v137, 96
    %v3959 = vpop.permute.xlu0 %3958
    %3960 = vrot.lane.b32.xlu0 %v138, 96
    %v3961 = vpop.permute.xlu0 %3960
    %3962 = vrot.lane.b32.xlu0 %v139, 96
    %v3963 = vpop.permute.xlu0 %3962
    %3964 = vrot.lane.b32.xlu0 %v140, 96
    %v3965 = vpop.permute.xlu0 %3964
    %3966 = vrot.lane.b32.xlu0 %v141, 96
    %v3967 = vpop.permute.xlu0 %3966
    %3968 = vrot.lane.b32.xlu0 %v142, 96
    %v3969 = vpop.permute.xlu0 %3968
    %3970 = vrot.lane.b32.xlu0 %v143, 96
    %v3971 = vpop.permute.xlu0 %3970
    %3972 = vrot.lane.b32.xlu0 %v144, 96
    %v3973 = vpop.permute.xlu0 %3972
    %3974 = vrot.lane.b32.xlu0 %v145, 96
    %v3975 = vpop.permute.xlu0 %3974
    %3976 = vrot.lane.b32.xlu0 %v146, 96
    %v3977 = vpop.permute.xlu0 %3976
    %3978 = vrot.lane.b32.xlu0 %v147, 96
    %v3979 = vpop.permute.xlu0 %3978
    %3980 = vrot.lane.b32.xlu0 %v148, 96
    %v3981 = vpop.permute.xlu0 %3980
    %3982 = vrot.lane.b32.xlu0 %v149, 96
    %v3983 = vpop.permute.xlu0 %3982
    %3984 = vrot.lane.b32.xlu0 %v150, 96
    %v3985 = vpop.permute.xlu0 %3984
    %3986 = vrot.lane.b32.xlu0 %v151, 96
    %v3987 = vpop.permute.xlu0 %3986
    %3988 = vrot.lane.b32.xlu0 %v152, 96
    %v3989 = vpop.permute.xlu0 %3988
    %3990 = vrot.lane.b32.xlu0 %v153, 96
    %v3991 = vpop.permute.xlu0 %3990
    %3992 = vrot.lane.b32.xlu0 %v154, 96
    %v3993 = vpop.permute.xlu0 %3992
    %3994 = vrot.lane.b32.xlu0 %v155, 96
    %v3995 = vpop.permute.xlu0 %3994
    %3996 = vrot.lane.b32.xlu0 %v156, 96
    %v3997 = vpop.permute.xlu0 %3996
    %3998 = vrot.lane.b32.xlu0 %v157, 96
    %v3999 = vpop.permute.xlu0 %3998
    %4000 = vrot.lane.b32.xlu0 %v158, 96
    %v4001 = vpop.permute.xlu0 %4000
    %4002 = vrot.lane.b32.xlu0 %v159, 96
    %v4003 = vpop.permute.xlu0 %4002
    %4004 = vrot.lane.b32.xlu0 %v160, 96
    %v4005 = vpop.permute.xlu0 %4004
    %v4070 = vsub.f32 %v3624, %v3879
    %v4071 = vsub.f32 %v3627, %v3881
    %v4072 = vsub.f32 %v3632, %v3883
    %v4073 = vsub.f32 %v3635, %v3885
    %v4074 = vsub.f32 %v3640, %v3887
    %v4075 = vsub.f32 %v3643, %v3889
    %v4076 = vsub.f32 %v3648, %v3891
    %v4077 = vsub.f32 %v3651, %v3893
    %v4078 = vsub.f32 %v3656, %v3895
    %v4079 = vsub.f32 %v3659, %v3897
    %v4080 = vsub.f32 %v3664, %v3899
    %v4081 = vsub.f32 %v3667, %v3901
    %v4082 = vsub.f32 %v3672, %v3903
    %v4083 = vsub.f32 %v3675, %v3905
    %v4084 = vsub.f32 %v3680, %v3907
    %v4085 = vsub.f32 %v3683, %v3909
    %v4086 = vsub.f32 %v3688, %v3911
    %v4087 = vsub.f32 %v3691, %v3913
    %v4088 = vsub.f32 %v3696, %v3915
    %v4089 = vsub.f32 %v3699, %v3917
    %v4090 = vsub.f32 %v3704, %v3919
    %v4091 = vsub.f32 %v3707, %v3921
    %v4092 = vsub.f32 %v3712, %v3923
    %v4093 = vsub.f32 %v3715, %v3925
    %v4094 = vsub.f32 %v3720, %v3927
    %v4095 = vsub.f32 %v3723, %v3929
    %v4096 = vsub.f32 %v3728, %v3931
    %v4097 = vsub.f32 %v3731, %v3933
    %v4098 = vsub.f32 %v3736, %v3935
    %v4099 = vsub.f32 %v3739, %v3937
    %v4100 = vsub.f32 %v3744, %v3939
    %v4101 = vsub.f32 %v3747, %v3941
    %v4102 = vsub.f32 %v3752, %v3943
    %v4103 = vsub.f32 %v3755, %v3945
    %v4104 = vsub.f32 %v3760, %v3947
    %v4105 = vsub.f32 %v3763, %v3949
    %v4106 = vsub.f32 %v3768, %v3951
    %v4107 = vsub.f32 %v3771, %v3953
    %v4108 = vsub.f32 %v3776, %v3955
    %v4109 = vsub.f32 %v3779, %v3957
    %v4110 = vsub.f32 %v3784, %v3959
    %v4111 = vsub.f32 %v3787, %v3961
    %v4112 = vsub.f32 %v3792, %v3963
    %v4113 = vsub.f32 %v3795, %v3965
    %v4114 = vsub.f32 %v3800, %v3967
    %v4115 = vsub.f32 %v3803, %v3969
    %v4116 = vsub.f32 %v3808, %v3971
    %v4117 = vsub.f32 %v3811, %v3973
    %v4118 = vsub.f32 %v3816, %v3975
    %v4119 = vsub.f32 %v3819, %v3977
    %v4120 = vsub.f32 %v3824, %v3979
    %v4121 = vsub.f32 %v3827, %v3981
    %v4122 = vsub.f32 %v3832, %v3983
    %v4123 = vsub.f32 %v3835, %v3985
    %v4124 = vsub.f32 %v3840, %v3987
    %v4125 = vsub.f32 %v3843, %v3989
    %v4126 = vsub.f32 %v3848, %v3991
    %v4127 = vsub.f32 %v3851, %v3993
    %v4128 = vsub.f32 %v3856, %v3995
    %v4129 = vsub.f32 %v3859, %v3997
    %v4130 = vsub.f32 %v3864, %v3999
    %v4131 = vsub.f32 %v3867, %v4001
    %v4132 = vsub.f32 %v3872, %v4003
    %v4133 = vsub.f32 %v3875, %v4005
    %s4134 = smul.u32 0, 512
    %v4135 = vlaneseq
    %v4136 = vshrl.u32 %v4135, 7
    %v4137 = vadd.s32 %v4136, 8
    %v4138 = vadd.s32 %v4136, 16
    %v4139 = vadd.s32 %v4136, 24
    %v4140 = vadd.s32 %v4136, 32
    %v4141 = vadd.s32 %v4136, 40
    %v4142 = vadd.s32 %v4136, 48
    %v4143 = vadd.s32 %v4136, 56
    %v4144 = vadd.s32 %v4136, 64
    %v4145 = vadd.s32 %v4136, 72
    %v4146 = vadd.s32 %v4136, 80
    %v4147 = vadd.s32 %v4136, 88
    %v4148 = vadd.s32 %v4136, 96
    %v4149 = vadd.s32 %v4136, 104
    %v4150 = vadd.s32 %v4136, 112
    %v4151 = vadd.s32 %v4136, 120
    %v4152 = vadd.s32 %v4136, 128
    %v4153 = vadd.s32 %v4136, 136
    %v4154 = vadd.s32 %v4136, 144
    %v4155 = vadd.s32 %v4136, 152
    %v4156 = vadd.s32 %v4136, 160
    %v4157 = vadd.s32 %v4136, 168
    %v4158 = vadd.s32 %v4136, 176
    %v4159 = vadd.s32 %v4136, 184
    %v4160 = vadd.s32 %v4136, 192
    %v4161 = vadd.s32 %v4136, 200
    %v4162 = vadd.s32 %v4136, 208
    %v4163 = vadd.s32 %v4136, 216
    %v4164 = vadd.s32 %v4136, 224
    %v4165 = vadd.s32 %v4136, 232
    %v4166 = vadd.s32 %v4136, 240
    %v4167 = vadd.s32 %v4136, 248
    %v4168 = vadd.s32 %v4136, 256
    %v4169 = vadd.s32 %v4136, 264
    %v4170 = vadd.s32 %v4136, 272
    %v4171 = vadd.s32 %v4136, 280
    %v4172 = vadd.s32 %v4136, 288
    %v4173 = vadd.s32 %v4136, 296
    %v4174 = vadd.s32 %v4136, 304
    %v4175 = vadd.s32 %v4136, 312
    %v4176 = vadd.s32 %v4136, 320
    %v4177 = vadd.s32 %v4136, 328
    %v4178 = vadd.s32 %v4136, 336
    %v4179 = vadd.s32 %v4136, 344
    %v4180 = vadd.s32 %v4136, 352
    %v4181 = vadd.s32 %v4136, 360
    %v4182 = vadd.s32 %v4136, 368
    %v4183 = vadd.s32 %v4136, 376
    %v4184 = vadd.s32 %v4136, 384
    %v4185 = vadd.s32 %v4136, 392
    %v4186 = vadd.s32 %v4136, 400
    %v4187 = vadd.s32 %v4136, 408
    %v4188 = vadd.s32 %v4136, 416
    %v4189 = vadd.s32 %v4136, 424
    %v4190 = vadd.s32 %v4136, 432
    %v4191 = vadd.s32 %v4136, 440
    %v4192 = vadd.s32 %v4136, 448
    %v4193 = vadd.s32 %v4136, 456
    %v4194 = vadd.s32 %v4136, 464
    %v4195 = vadd.s32 %v4136, 472
    %v4196 = vadd.s32 %v4136, 480
    %v4197 = vadd.s32 %v4136, 488
    %v4198 = vadd.s32 %v4136, 496
    %v4199 = vadd.s32 %v4136, 504
    %v4200 = vstv %s4134
    %v4201 = vadd.s32 %v4200, %v4136
    %v4202 = vadd.s32 %v4200, %v4137
    %v4203 = vadd.s32 %v4200, %v4138
    %v4204 = vadd.s32 %v4200, %v4139
    %v4205 = vadd.s32 %v4200, %v4140
    %v4206 = vadd.s32 %v4200, %v4141
    %v4207 = vadd.s32 %v4200, %v4142
    %v4208 = vadd.s32 %v4200, %v4143
    %v4209 = vadd.s32 %v4200, %v4144
    %v4210 = vadd.s32 %v4200, %v4145
    %v4211 = vadd.s32 %v4200, %v4146
    %v4212 = vadd.s32 %v4200, %v4147
    %v4213 = vadd.s32 %v4200, %v4148
    %v4214 = vadd.s32 %v4200, %v4149
    %v4215 = vadd.s32 %v4200, %v4150
    %v4216 = vadd.s32 %v4200, %v4151
    %v4217 = vadd.s32 %v4200, %v4152
    %v4218 = vadd.s32 %v4200, %v4153
    %v4219 = vadd.s32 %v4200, %v4154
    %v4220 = vadd.s32 %v4200, %v4155
    %v4221 = vadd.s32 %v4200, %v4156
    %v4222 = vadd.s32 %v4200, %v4157
    %v4223 = vadd.s32 %v4200, %v4158
    %v4224 = vadd.s32 %v4200, %v4159
    %v4225 = vadd.s32 %v4200, %v4160
    %v4226 = vadd.s32 %v4200, %v4161
    %v4227 = vadd.s32 %v4200, %v4162
    %v4228 = vadd.s32 %v4200, %v4163
    %v4229 = vadd.s32 %v4200, %v4164
    %v4230 = vadd.s32 %v4200, %v4165
    %v4231 = vadd.s32 %v4200, %v4166
    %v4232 = vadd.s32 %v4200, %v4167
    %v4233 = vadd.s32 %v4200, %v4168
    %v4234 = vadd.s32 %v4200, %v4169
    %v4235 = vadd.s32 %v4200, %v4170
    %v4236 = vadd.s32 %v4200, %v4171
    %v4237 = vadd.s32 %v4200, %v4172
    %v4238 = vadd.s32 %v4200, %v4173
    %v4239 = vadd.s32 %v4200, %v4174
    %v4240 = vadd.s32 %v4200, %v4175
    %v4241 = vadd.s32 %v4200, %v4176
    %v4242 = vadd.s32 %v4200, %v4177
    %v4243 = vadd.s32 %v4200, %v4178
    %v4244 = vadd.s32 %v4200, %v4179
    %v4245 = vadd.s32 %v4200, %v4180
    %v4246 = vadd.s32 %v4200, %v4181
    %v4247 = vadd.s32 %v4200, %v4182
    %v4248 = vadd.s32 %v4200, %v4183
    %v4249 = vadd.s32 %v4200, %v4184
    %v4250 = vadd.s32 %v4200, %v4185
    %v4251 = vadd.s32 %v4200, %v4186
    %v4252 = vadd.s32 %v4200, %v4187
    %v4253 = vadd.s32 %v4200, %v4188
    %v4254 = vadd.s32 %v4200, %v4189
    %v4255 = vadd.s32 %v4200, %v4190
    %v4256 = vadd.s32 %v4200, %v4191
    %v4257 = vadd.s32 %v4200, %v4192
    %v4258 = vadd.s32 %v4200, %v4193
    %v4259 = vadd.s32 %v4200, %v4194
    %v4260 = vadd.s32 %v4200, %v4195
    %v4261 = vadd.s32 %v4200, %v4196
    %v4262 = vadd.s32 %v4200, %v4197
    %v4263 = vadd.s32 %v4200, %v4198
    %v4264 = vadd.s32 %v4200, %v4199
    %vm4265 = vcmp.lt.s32.totalorder %v4201, 500
    %vm4266 = vcmp.lt.s32.totalorder %v4202, 500
    %vm4267 = vcmp.lt.s32.totalorder %v4203, 500
    %vm4268 = vcmp.lt.s32.totalorder %v4204, 500
    %vm4269 = vcmp.lt.s32.totalorder %v4205, 500
    %vm4270 = vcmp.lt.s32.totalorder %v4206, 500
    %vm4271 = vcmp.lt.s32.totalorder %v4207, 500
    %vm4272 = vcmp.lt.s32.totalorder %v4208, 500
    %vm4273 = vcmp.lt.s32.totalorder %v4209, 500
    %vm4274 = vcmp.lt.s32.totalorder %v4210, 500
    %vm4275 = vcmp.lt.s32.totalorder %v4211, 500
    %vm4276 = vcmp.lt.s32.totalorder %v4212, 500
    %vm4277 = vcmp.lt.s32.totalorder %v4213, 500
    %vm4278 = vcmp.lt.s32.totalorder %v4214, 500
    %vm4279 = vcmp.lt.s32.totalorder %v4215, 500
    %vm4280 = vcmp.lt.s32.totalorder %v4216, 500
    %vm4281 = vcmp.lt.s32.totalorder %v4217, 500
    %vm4282 = vcmp.lt.s32.totalorder %v4218, 500
    %vm4283 = vcmp.lt.s32.totalorder %v4219, 500
    %vm4284 = vcmp.lt.s32.totalorder %v4220, 500
    %vm4285 = vcmp.lt.s32.totalorder %v4221, 500
    %vm4286 = vcmp.lt.s32.totalorder %v4222, 500
    %vm4287 = vcmp.lt.s32.totalorder %v4223, 500
    %vm4288 = vcmp.lt.s32.totalorder %v4224, 500
    %vm4289 = vcmp.lt.s32.totalorder %v4225, 500
    %vm4290 = vcmp.lt.s32.totalorder %v4226, 500
    %vm4291 = vcmp.lt.s32.totalorder %v4227, 500
    %vm4292 = vcmp.lt.s32.totalorder %v4228, 500
    %vm4293 = vcmp.lt.s32.totalorder %v4229, 500
    %vm4294 = vcmp.lt.s32.totalorder %v4230, 500
    %vm4295 = vcmp.lt.s32.totalorder %v4231, 500
    %vm4296 = vcmp.lt.s32.totalorder %v4232, 500
    %vm4297 = vcmp.lt.s32.totalorder %v4233, 500
    %vm4298 = vcmp.lt.s32.totalorder %v4234, 500
    %vm4299 = vcmp.lt.s32.totalorder %v4235, 500
    %vm4300 = vcmp.lt.s32.totalorder %v4236, 500
    %vm4301 = vcmp.lt.s32.totalorder %v4237, 500
    %vm4302 = vcmp.lt.s32.totalorder %v4238, 500
    %vm4303 = vcmp.lt.s32.totalorder %v4239, 500
    %vm4304 = vcmp.lt.s32.totalorder %v4240, 500
    %vm4305 = vcmp.lt.s32.totalorder %v4241, 500
    %vm4306 = vcmp.lt.s32.totalorder %v4242, 500
    %vm4307 = vcmp.lt.s32.totalorder %v4243, 500
    %vm4308 = vcmp.lt.s32.totalorder %v4244, 500
    %vm4309 = vcmp.lt.s32.totalorder %v4245, 500
    %vm4310 = vcmp.lt.s32.totalorder %v4246, 500
    %vm4311 = vcmp.lt.s32.totalorder %v4247, 500
    %vm4312 = vcmp.lt.s32.totalorder %v4248, 500
    %vm4313 = vcmp.lt.s32.totalorder %v4249, 500
    %vm4314 = vcmp.lt.s32.totalorder %v4250, 500
    %vm4315 = vcmp.lt.s32.totalorder %v4251, 500
    %vm4316 = vcmp.lt.s32.totalorder %v4252, 500
    %vm4317 = vcmp.lt.s32.totalorder %v4253, 500
    %vm4318 = vcmp.lt.s32.totalorder %v4254, 500
    %vm4319 = vcmp.lt.s32.totalorder %v4255, 500
    %vm4320 = vcmp.lt.s32.totalorder %v4256, 500
    %vm4321 = vcmp.lt.s32.totalorder %v4257, 500
    %vm4322 = vcmp.lt.s32.totalorder %v4258, 500
    %vm4323 = vcmp.lt.s32.totalorder %v4259, 500
    %vm4324 = vcmp.lt.s32.totalorder %v4260, 500
    %vm4325 = vcmp.lt.s32.totalorder %v4261, 500
    %vm4326 = vcmp.lt.s32.totalorder %v4262, 500
    %vm4327 = vcmp.lt.s32.totalorder %v4263, 500
    %vm4328 = vcmp.lt.s32.totalorder %v4264, 500
    %v4329 = vsel %vm4265, 1, 0
    %v4330 = vsel %vm4266, 1, 0
    %v4331 = vsel %vm4267, 1, 0
    %v4332 = vsel %vm4268, 1, 0
    %v4333 = vsel %vm4269, 1, 0
    %v4334 = vsel %vm4270, 1, 0
    %v4335 = vsel %vm4271, 1, 0
    %v4336 = vsel %vm4272, 1, 0
    %v4337 = vsel %vm4273, 1, 0
    %v4338 = vsel %vm4274, 1, 0
    %v4339 = vsel %vm4275, 1, 0
    %v4340 = vsel %vm4276, 1, 0
    %v4341 = vsel %vm4277, 1, 0
    %v4342 = vsel %vm4278, 1, 0
    %v4343 = vsel %vm4279, 1, 0
    %v4344 = vsel %vm4280, 1, 0
    %v4345 = vsel %vm4281, 1, 0
    %v4346 = vsel %vm4282, 1, 0
    %v4347 = vsel %vm4283, 1, 0
    %v4348 = vsel %vm4284, 1, 0
    %v4349 = vsel %vm4285, 1, 0
    %v4350 = vsel %vm4286, 1, 0
    %v4351 = vsel %vm4287, 1, 0
    %v4352 = vsel %vm4288, 1, 0
    %v4353 = vsel %vm4289, 1, 0
    %v4354 = vsel %vm4290, 1, 0
    %v4355 = vsel %vm4291, 1, 0
    %v4356 = vsel %vm4292, 1, 0
    %v4357 = vsel %vm4293, 1, 0
    %v4358 = vsel %vm4294, 1, 0
    %v4359 = vsel %vm4295, 1, 0
    %v4360 = vsel %vm4296, 1, 0
    %v4361 = vsel %vm4297, 1, 0
    %v4362 = vsel %vm4298, 1, 0
    %v4363 = vsel %vm4299, 1, 0
    %v4364 = vsel %vm4300, 1, 0
    %v4365 = vsel %vm4301, 1, 0
    %v4366 = vsel %vm4302, 1, 0
    %v4367 = vsel %vm4303, 1, 0
    %v4368 = vsel %vm4304, 1, 0
    %v4369 = vsel %vm4305, 1, 0
    %v4370 = vsel %vm4306, 1, 0
    %v4371 = vsel %vm4307, 1, 0
    %v4372 = vsel %vm4308, 1, 0
    %v4373 = vsel %vm4309, 1, 0
    %v4374 = vsel %vm4310, 1, 0
    %v4375 = vsel %vm4311, 1, 0
    %v4376 = vsel %vm4312, 1, 0
    %v4377 = vsel %vm4313, 1, 0
    %v4378 = vsel %vm4314, 1, 0
    %v4379 = vsel %vm4315, 1, 0
    %v4380 = vsel %vm4316, 1, 0
    %v4381 = vsel %vm4317, 1, 0
    %v4382 = vsel %vm4318, 1, 0
    %v4383 = vsel %vm4319, 1, 0
    %v4384 = vsel %vm4320, 1, 0
    %v4385 = vsel %vm4321, 1, 0
    %v4386 = vsel %vm4322, 1, 0
    %v4387 = vsel %vm4323, 1, 0
    %v4388 = vsel %vm4324, 1, 0
    %v4389 = vsel %vm4325, 1, 0
    %v4390 = vsel %vm4326, 1, 0
    %v4391 = vsel %vm4327, 1, 0
    %v4392 = vsel %vm4328, 1, 0
    %vm4393 = vcmp.eq.s32.totalorder %v4329, 1
    %vm4394 = vcmp.eq.s32.totalorder %v4330, 1
    %vm4395 = vcmp.eq.s32.totalorder %v4331, 1
    %vm4396 = vcmp.eq.s32.totalorder %v4332, 1
    %vm4397 = vcmp.eq.s32.totalorder %v4333, 1
    %vm4398 = vcmp.eq.s32.totalorder %v4334, 1
    %vm4399 = vcmp.eq.s32.totalorder %v4335, 1
    %vm4400 = vcmp.eq.s32.totalorder %v4336, 1
    %vm4401 = vcmp.eq.s32.totalorder %v4337, 1
    %vm4402 = vcmp.eq.s32.totalorder %v4338, 1
    %vm4403 = vcmp.eq.s32.totalorder %v4339, 1
    %vm4404 = vcmp.eq.s32.totalorder %v4340, 1
    %vm4405 = vcmp.eq.s32.totalorder %v4341, 1
    %vm4406 = vcmp.eq.s32.totalorder %v4342, 1
    %vm4407 = vcmp.eq.s32.totalorder %v4343, 1
    %vm4408 = vcmp.eq.s32.totalorder %v4344, 1
    %vm4409 = vcmp.eq.s32.totalorder %v4345, 1
    %vm4410 = vcmp.eq.s32.totalorder %v4346, 1
    %vm4411 = vcmp.eq.s32.totalorder %v4347, 1
    %vm4412 = vcmp.eq.s32.totalorder %v4348, 1
    %vm4413 = vcmp.eq.s32.totalorder %v4349, 1
    %vm4414 = vcmp.eq.s32.totalorder %v4350, 1
    %vm4415 = vcmp.eq.s32.totalorder %v4351, 1
    %vm4416 = vcmp.eq.s32.totalorder %v4352, 1
    %vm4417 = vcmp.eq.s32.totalorder %v4353, 1
    %vm4418 = vcmp.eq.s32.totalorder %v4354, 1
    %vm4419 = vcmp.eq.s32.totalorder %v4355, 1
    %vm4420 = vcmp.eq.s32.totalorder %v4356, 1
    %vm4421 = vcmp.eq.s32.totalorder %v4357, 1
    %vm4422 = vcmp.eq.s32.totalorder %v4358, 1
    %vm4423 = vcmp.eq.s32.totalorder %v4359, 1
    %vm4424 = vcmp.eq.s32.totalorder %v4360, 1
    %vm4425 = vcmp.eq.s32.totalorder %v4361, 1
    %vm4426 = vcmp.eq.s32.totalorder %v4362, 1
    %vm4427 = vcmp.eq.s32.totalorder %v4363, 1
    %vm4428 = vcmp.eq.s32.totalorder %v4364, 1
    %vm4429 = vcmp.eq.s32.totalorder %v4365, 1
    %vm4430 = vcmp.eq.s32.totalorder %v4366, 1
    %vm4431 = vcmp.eq.s32.totalorder %v4367, 1
    %vm4432 = vcmp.eq.s32.totalorder %v4368, 1
    %vm4433 = vcmp.eq.s32.totalorder %v4369, 1
    %vm4434 = vcmp.eq.s32.totalorder %v4370, 1
    %vm4435 = vcmp.eq.s32.totalorder %v4371, 1
    %vm4436 = vcmp.eq.s32.totalorder %v4372, 1
    %vm4437 = vcmp.eq.s32.totalorder %v4373, 1
    %vm4438 = vcmp.eq.s32.totalorder %v4374, 1
    %vm4439 = vcmp.eq.s32.totalorder %v4375, 1
    %vm4440 = vcmp.eq.s32.totalorder %v4376, 1
    %vm4441 = vcmp.eq.s32.totalorder %v4377, 1
    %vm4442 = vcmp.eq.s32.totalorder %v4378, 1
    %vm4443 = vcmp.eq.s32.totalorder %v4379, 1
    %vm4444 = vcmp.eq.s32.totalorder %v4380, 1
    %vm4445 = vcmp.eq.s32.totalorder %v4381, 1
    %vm4446 = vcmp.eq.s32.totalorder %v4382, 1
    %vm4447 = vcmp.eq.s32.totalorder %v4383, 1
    %vm4448 = vcmp.eq.s32.totalorder %v4384, 1
    %vm4449 = vcmp.eq.s32.totalorder %v4385, 1
    %vm4450 = vcmp.eq.s32.totalorder %v4386, 1
    %vm4451 = vcmp.eq.s32.totalorder %v4387, 1
    %vm4452 = vcmp.eq.s32.totalorder %v4388, 1
    %vm4453 = vcmp.eq.s32.totalorder %v4389, 1
    %vm4454 = vcmp.eq.s32.totalorder %v4390, 1
    %vm4455 = vcmp.eq.s32.totalorder %v4391, 1
    %vm4456 = vcmp.eq.s32.totalorder %v4392, 1
    %v4457 = vsel %vm4393, %v4070, 0.0
    %v4458 = vsel %vm4394, %v4071, 0.0
    %v4459 = vsel %vm4395, %v4072, 0.0
    %v4460 = vsel %vm4396, %v4073, 0.0
    %v4461 = vsel %vm4397, %v4074, 0.0
    %v4462 = vsel %vm4398, %v4075, 0.0
    %v4463 = vsel %vm4399, %v4076, 0.0
    %v4464 = vsel %vm4400, %v4077, 0.0
    %v4465 = vsel %vm4401, %v4078, 0.0
    %v4466 = vsel %vm4402, %v4079, 0.0
    %v4467 = vsel %vm4403, %v4080, 0.0
    %v4468 = vsel %vm4404, %v4081, 0.0
    %v4469 = vsel %vm4405, %v4082, 0.0
    %v4470 = vsel %vm4406, %v4083, 0.0
    %v4471 = vsel %vm4407, %v4084, 0.0
    %v4472 = vsel %vm4408, %v4085, 0.0
    %v4473 = vsel %vm4409, %v4086, 0.0
    %v4474 = vsel %vm4410, %v4087, 0.0
    %v4475 = vsel %vm4411, %v4088, 0.0
    %v4476 = vsel %vm4412, %v4089, 0.0
    %v4477 = vsel %vm4413, %v4090, 0.0
    %v4478 = vsel %vm4414, %v4091, 0.0
    %v4479 = vsel %vm4415, %v4092, 0.0
    %v4480 = vsel %vm4416, %v4093, 0.0
    %v4481 = vsel %vm4417, %v4094, 0.0
    %v4482 = vsel %vm4418, %v4095, 0.0
    %v4483 = vsel %vm4419, %v4096, 0.0
    %v4484 = vsel %vm4420, %v4097, 0.0
    %v4485 = vsel %vm4421, %v4098, 0.0
    %v4486 = vsel %vm4422, %v4099, 0.0
    %v4487 = vsel %vm4423, %v4100, 0.0
    %v4488 = vsel %vm4424, %v4101, 0.0
    %v4489 = vsel %vm4425, %v4102, 0.0
    %v4490 = vsel %vm4426, %v4103, 0.0
    %v4491 = vsel %vm4427, %v4104, 0.0
    %v4492 = vsel %vm4428, %v4105, 0.0
    %v4493 = vsel %vm4429, %v4106, 0.0
    %v4494 = vsel %vm4430, %v4107, 0.0
    %v4495 = vsel %vm4431, %v4108, 0.0
    %v4496 = vsel %vm4432, %v4109, 0.0
    %v4497 = vsel %vm4433, %v4110, 0.0
    %v4498 = vsel %vm4434, %v4111, 0.0
    %v4499 = vsel %vm4435, %v4112, 0.0
    %v4500 = vsel %vm4436, %v4113, 0.0
    %v4501 = vsel %vm4437, %v4114, 0.0
    %v4502 = vsel %vm4438, %v4115, 0.0
    %v4503 = vsel %vm4439, %v4116, 0.0
    %v4504 = vsel %vm4440, %v4117, 0.0
    %v4505 = vsel %vm4441, %v4118, 0.0
    %v4506 = vsel %vm4442, %v4119, 0.0
    %v4507 = vsel %vm4443, %v4120, 0.0
    %v4508 = vsel %vm4444, %v4121, 0.0
    %v4509 = vsel %vm4445, %v4122, 0.0
    %v4510 = vsel %vm4446, %v4123, 0.0
    %v4511 = vsel %vm4447, %v4124, 0.0
    %v4512 = vsel %vm4448, %v4125, 0.0
    %v4513 = vsel %vm4449, %v4126, 0.0
    %v4514 = vsel %vm4450, %v4127, 0.0
    %v4515 = vsel %vm4451, %v4128, 0.0
    %v4516 = vsel %vm4452, %v4129, 0.0
    %v4517 = vsel %vm4453, %v4130, 0.0
    %v4518 = vsel %vm4454, %v4131, 0.0
    %v4519 = vsel %vm4455, %v4132, 0.0
    %v4520 = vsel %vm4456, %v4133, 0.0
    %v4521 = vld [vmem:[#allocation2] sm:$0x1]
    %v4522 = vmul.f32 %v4457, %v4457
    %v4523 = vmul.f32 %v4458, %v4458
    %v4524 = vmul.f32 %v4459, %v4459
    %v4525 = vmul.f32 %v4460, %v4460
    %v4526 = vmul.f32 %v4461, %v4461
    %v4527 = vmul.f32 %v4462, %v4462
    %v4528 = vmul.f32 %v4463, %v4463
    %v4529 = vmul.f32 %v4464, %v4464
    %v4530 = vmul.f32 %v4465, %v4465
    %v4531 = vmul.f32 %v4466, %v4466
    %v4532 = vmul.f32 %v4467, %v4467
    %v4533 = vmul.f32 %v4468, %v4468
    %v4534 = vmul.f32 %v4469, %v4469
    %v4535 = vmul.f32 %v4470, %v4470
    %v4536 = vmul.f32 %v4471, %v4471
    %v4537 = vmul.f32 %v4472, %v4472
    %v4538 = vmul.f32 %v4473, %v4473
    %v4539 = vmul.f32 %v4474, %v4474
    %v4540 = vmul.f32 %v4475, %v4475
    %v4541 = vmul.f32 %v4476, %v4476
    %v4542 = vmul.f32 %v4477, %v4477
    %v4543 = vmul.f32 %v4478, %v4478
    %v4544 = vmul.f32 %v4479, %v4479
    %v4545 = vmul.f32 %v4480, %v4480
    %v4546 = vmul.f32 %v4481, %v4481
    %v4547 = vmul.f32 %v4482, %v4482
    %v4548 = vmul.f32 %v4483, %v4483
    %v4549 = vmul.f32 %v4484, %v4484
    %v4550 = vmul.f32 %v4485, %v4485
    %v4551 = vmul.f32 %v4486, %v4486
    %v4552 = vmul.f32 %v4487, %v4487
    %v4553 = vmul.f32 %v4488, %v4488
    %v4554 = vmul.f32 %v4489, %v4489
    %v4555 = vmul.f32 %v4490, %v4490
    %v4556 = vmul.f32 %v4491, %v4491
    %v4557 = vmul.f32 %v4492, %v4492
    %v4558 = vmul.f32 %v4493, %v4493
    %v4559 = vmul.f32 %v4494, %v4494
    %v4560 = vmul.f32 %v4495, %v4495
    %v4561 = vmul.f32 %v4496, %v4496
    %v4562 = vmul.f32 %v4497, %v4497
    %v4563 = vmul.f32 %v4498, %v4498
    %v4564 = vmul.f32 %v4499, %v4499
    %v4565 = vmul.f32 %v4500, %v4500
    %v4566 = vmul.f32 %v4501, %v4501
    %v4567 = vmul.f32 %v4502, %v4502
    %v4568 = vmul.f32 %v4503, %v4503
    %v4569 = vmul.f32 %v4504, %v4504
    %v4570 = vmul.f32 %v4505, %v4505
    %v4571 = vmul.f32 %v4506, %v4506
    %v4572 = vmul.f32 %v4507, %v4507
    %v4573 = vmul.f32 %v4508, %v4508
    %v4574 = vmul.f32 %v4509, %v4509
    %v4575 = vmul.f32 %v4510, %v4510
    %v4576 = vmul.f32 %v4511, %v4511
    %v4577 = vmul.f32 %v4512, %v4512
    %v4578 = vmul.f32 %v4513, %v4513
    %v4579 = vmul.f32 %v4514, %v4514
    %v4580 = vmul.f32 %v4515, %v4515
    %v4581 = vmul.f32 %v4516, %v4516
    %v4582 = vmul.f32 %v4517, %v4517
    %v4583 = vmul.f32 %v4518, %v4518
    %v4584 = vmul.f32 %v4519, %v4519
    %v4585 = vmul.f32 %v4520, %v4520
    %v4586 = vsel %vm1878, %v4522, 0.0
    %v4587 = vsel %vm1878, %v4523, 0.0
    %v4588 = vadd.f32 %v4586, %v4587
    %v4589 = vsel %vm1878, %v4524, 0.0
    %v4590 = vadd.f32 %v4588, %v4589
    %v4591 = vsel %vm1878, %v4525, 0.0
    %v4592 = vadd.f32 %v4590, %v4591
    %v4593 = vsel %vm1878, %v4526, 0.0
    %v4594 = vadd.f32 %v4592, %v4593
    %v4595 = vsel %vm1878, %v4527, 0.0
    %v4596 = vadd.f32 %v4594, %v4595
    %v4597 = vsel %vm1878, %v4528, 0.0
    %v4598 = vadd.f32 %v4596, %v4597
    %v4599 = vsel %vm1878, %v4529, 0.0
    %v4600 = vadd.f32 %v4598, %v4599
    %v4601 = vsel %vm1878, %v4530, 0.0
    %v4602 = vadd.f32 %v4600, %v4601
    %v4603 = vsel %vm1878, %v4531, 0.0
    %v4604 = vadd.f32 %v4602, %v4603
    %v4605 = vsel %vm1878, %v4532, 0.0
    %v4606 = vadd.f32 %v4604, %v4605
    %v4607 = vsel %vm1878, %v4533, 0.0
    %v4608 = vadd.f32 %v4606, %v4607
    %v4609 = vsel %vm1878, %v4534, 0.0
    %v4610 = vadd.f32 %v4608, %v4609
    %v4611 = vsel %vm1878, %v4535, 0.0
    %v4612 = vadd.f32 %v4610, %v4611
    %v4613 = vsel %vm1878, %v4536, 0.0
    %v4614 = vadd.f32 %v4612, %v4613
    %v4615 = vsel %vm1878, %v4537, 0.0
    %v4616 = vadd.f32 %v4614, %v4615
    %v4617 = vsel %vm1878, %v4538, 0.0
    %v4618 = vadd.f32 %v4616, %v4617
    %v4619 = vsel %vm1878, %v4539, 0.0
    %v4620 = vadd.f32 %v4618, %v4619
    %v4621 = vsel %vm1878, %v4540, 0.0
    %v4622 = vadd.f32 %v4620, %v4621
    %v4623 = vsel %vm1878, %v4541, 0.0
    %v4624 = vadd.f32 %v4622, %v4623
    %v4625 = vsel %vm1878, %v4542, 0.0
    %v4626 = vadd.f32 %v4624, %v4625
    %v4627 = vsel %vm1878, %v4543, 0.0
    %v4628 = vadd.f32 %v4626, %v4627
    %v4629 = vsel %vm1878, %v4544, 0.0
    %v4630 = vadd.f32 %v4628, %v4629
    %v4631 = vsel %vm1878, %v4545, 0.0
    %v4632 = vadd.f32 %v4630, %v4631
    %v4633 = vsel %vm1878, %v4546, 0.0
    %v4634 = vadd.f32 %v4632, %v4633
    %v4635 = vsel %vm1878, %v4547, 0.0
    %v4636 = vadd.f32 %v4634, %v4635
    %v4637 = vsel %vm1878, %v4548, 0.0
    %v4638 = vadd.f32 %v4636, %v4637
    %v4639 = vsel %vm1878, %v4549, 0.0
    %v4640 = vadd.f32 %v4638, %v4639
    %v4641 = vsel %vm1878, %v4550, 0.0
    %v4642 = vadd.f32 %v4640, %v4641
    %v4643 = vsel %vm1878, %v4551, 0.0
    %v4644 = vadd.f32 %v4642, %v4643
    %v4645 = vsel %vm1878, %v4552, 0.0
    %v4646 = vadd.f32 %v4644, %v4645
    %v4647 = vsel %vm1878, %v4553, 0.0
    %v4648 = vadd.f32 %v4646, %v4647
    %v4649 = vsel %vm1878, %v4554, 0.0
    %v4650 = vadd.f32 %v4648, %v4649
    %v4651 = vsel %vm1878, %v4555, 0.0
    %v4652 = vadd.f32 %v4650, %v4651
    %v4653 = vsel %vm1878, %v4556, 0.0
    %v4654 = vadd.f32 %v4652, %v4653
    %v4655 = vsel %vm1878, %v4557, 0.0
    %v4656 = vadd.f32 %v4654, %v4655
    %v4657 = vsel %vm1878, %v4558, 0.0
    %v4658 = vadd.f32 %v4656, %v4657
    %v4659 = vsel %vm1878, %v4559, 0.0
    %v4660 = vadd.f32 %v4658, %v4659
    %v4661 = vsel %vm1878, %v4560, 0.0
    %v4662 = vadd.f32 %v4660, %v4661
    %v4663 = vsel %vm1878, %v4561, 0.0
    %v4664 = vadd.f32 %v4662, %v4663
    %v4665 = vsel %vm1878, %v4562, 0.0
    %v4666 = vadd.f32 %v4664, %v4665
    %v4667 = vsel %vm1878, %v4563, 0.0
    %v4668 = vadd.f32 %v4666, %v4667
    %v4669 = vsel %vm1878, %v4564, 0.0
    %v4670 = vadd.f32 %v4668, %v4669
    %v4671 = vsel %vm1878, %v4565, 0.0
    %v4672 = vadd.f32 %v4670, %v4671
    %v4673 = vsel %vm1878, %v4566, 0.0
    %v4674 = vadd.f32 %v4672, %v4673
    %v4675 = vsel %vm1878, %v4567, 0.0
    %v4676 = vadd.f32 %v4674, %v4675
    %v4677 = vsel %vm1878, %v4568, 0.0
    %v4678 = vadd.f32 %v4676, %v4677
    %v4679 = vsel %vm1878, %v4569, 0.0
    %v4680 = vadd.f32 %v4678, %v4679
    %v4681 = vsel %vm1878, %v4570, 0.0
    %v4682 = vadd.f32 %v4680, %v4681
    %v4683 = vsel %vm1878, %v4571, 0.0
    %v4684 = vadd.f32 %v4682, %v4683
    %v4685 = vsel %vm1878, %v4572, 0.0
    %v4686 = vadd.f32 %v4684, %v4685
    %v4687 = vsel %vm1878, %v4573, 0.0
    %v4688 = vadd.f32 %v4686, %v4687
    %v4689 = vsel %vm1878, %v4574, 0.0
    %v4690 = vadd.f32 %v4688, %v4689
    %v4691 = vsel %vm1878, %v4575, 0.0
    %v4692 = vadd.f32 %v4690, %v4691
    %v4693 = vsel %vm1878, %v4576, 0.0
    %v4694 = vadd.f32 %v4692, %v4693
    %v4695 = vsel %vm1878, %v4577, 0.0
    %v4696 = vadd.f32 %v4694, %v4695
    %v4697 = vsel %vm1878, %v4578, 0.0
    %v4698 = vadd.f32 %v4696, %v4697
    %v4699 = vsel %vm1878, %v4579, 0.0
    %v4700 = vadd.f32 %v4698, %v4699
    %v4701 = vsel %vm1878, %v4580, 0.0
    %v4702 = vadd.f32 %v4700, %v4701
    %v4703 = vsel %vm1878, %v4581, 0.0
    %v4704 = vadd.f32 %v4702, %v4703
    %v4705 = vsel %vm1878, %v4582, 0.0
    %v4706 = vadd.f32 %v4704, %v4705
    %v4707 = vsel %vm1878, %v4583, 0.0
    %v4708 = vadd.f32 %v4706, %v4707
    %v4709 = vsel %vm1878, %v4584, 0.0
    %v4710 = vadd.f32 %v4708, %v4709
    %v4711 = vsel %vm1878, %v4585, 0.0
    %v4712 = vadd.f32 %v4710, %v4711
    %v4713 = vrot.slane %v4712, 4
    %v4714 = vadd.f32 %v4712, %v4713
    %v4715 = vrot.slane %v4714, 2
    %v4716 = vadd.f32 %v4714, %v4715
    %v4717 = vrot.slane %v4716, 1
    %v4718 = vadd.f32 %v4716, %v4717
    %v4719 = vadd.f32 %v4521, %v4718
    %vm4720 = vcmask 253952
    %4721 = vst.msk [vmem:[#allocation2] sm:$0x1] %vm4720, %v4719
    // Predicated region
    $region34: #{tpu_custom_call.1} parent=1 // pred_check
      _
    $region35: #{tpu_custom_call.1} parent=1 // pred_check_branch
      %4723 = sbr.rel (0) target = $region37
    $region36: #{tpu_custom_call.1} parent=1 // pred_region
      %s4725 = ssub.s32 128, 128
      %4726 = vsyncadd [#allocation3], %s4725
      %s4728 = sshll.u32 [#allocation2], 4
      %s4729 = int_to_ptr.vmem [resolvable:$true] %s4728
      %4731 = dma.vmem_to_hbm [thread:$0]  %s4729, 128, %s7, [#allocation3]
    $region37: #{tpu_custom_call.1} parent=1 // pred_fallthru
      _
    // Predicated region
    $region38: #{tpu_custom_call.1} parent=1 // pred_check
      _
    $region39: #{tpu_custom_call.1} parent=1 // pred_check_branch
      %4733 = sbr.rel (0) target = $region41
    $region40: #{tpu_custom_call.1} parent=1 // pred_region
      %4734 = dma.done [#allocation3], 128
    $region41: #{tpu_custom_call.1} parent=1 // pred_fallthru
      _
    %4735 = vsyncpa [#allocation3], 1

</llo_original>
